<compile_context>
chip_gen: v7x
topology: tpu7x:2x2x1
jax: 0.10.0
libtpu: 0.0.40
codegen_flags: <defaults>
</compile_context>

<pallas_src>
import math

import jax
import jax.numpy as jnp
import numpy as np
from jax.experimental import pallas as pl
from jax.experimental.pallas import tpu as pltpu


# ---------------------------------------------------------------------------
# Fused forward kernel (one image per grid step)
# ---------------------------------------------------------------------------
def _basicnet_kernel(x_ref, w1_ref, b1_ref, w2_ref, b2_ref,
                     wf1_ref, bf1_ref, wf2_ref, bf2_ref, wf3_ref, bf3_ref,
                     o_ref):
    # x_ref: (1, 4, 8, 96) bf16 — image rows split by (h mod 4); lanes = W*Cin.
    x = x_ref[0]                                              # (4, 8, 96)

    # ---- conv1 (3->6, 5x5) + bias + ReLU + 2x2 max-pool --------------------
    # pooled1[c][t, pw*6+co] = pooled activation at row ph = 2t+c, col pw, ch co.
    pooled1 = []
    for c in range(2):                                        # parity of pooled row
        best = None
        for a in range(2):                                    # pool-window row offset
            for b in range(2):                                # pool-window col offset
                acc = None
                for ki in range(5):                           # conv kernel row
                    u = 2 * c + a + ki                        # input row = 4*t + u
                    lhs = x[u % 4, u // 4: u // 4 + 7, :]     # (7, 96) bf16
                    t_ = jnp.dot(lhs, w1_ref[b * 5 + ki],
                                 preferred_element_type=jnp.float32)
                    acc = t_ if acc is None else acc + t_
                best = acc if best is None else jnp.maximum(best, acc)
        p = jnp.maximum(best + b1_ref[...], 0.0)              # (7, 128) f32
        pooled1.append(p.astype(jnp.bfloat16))

    # ---- conv2 (6->16, 5x5) + bias + ReLU + 2x2 max-pool -------------------
    best = None
    for a in range(2):
        for b in range(2):
            acc = None
            for ki in range(5):
                par, m = (a + ki) % 2, (a + ki) // 2
                lhs = pooled1[par][m: m + 5, :]               # (5, 128) bf16
                t_ = jnp.dot(lhs, w2_ref[b * 5 + ki],
                             preferred_element_type=jnp.float32)
                acc = t_ if acc is None else acc + t_
            best = acc if best is None else jnp.maximum(best, acc)
    pooled2 = jnp.maximum(best + b2_ref[...], 0.0).astype(jnp.bfloat16)  # (5, 128)

    # ---- fc1 (400->120) + ReLU: contract the 5 spatial rows one by one -----
    acc = None
    for h in range(5):
        t_ = jnp.dot(pooled2[h: h + 1, :], wf1_ref[h],
                     preferred_element_type=jnp.float32)
        acc = t_ if acc is None else acc + t_
    h1 = jnp.maximum(acc + bf1_ref[...], 0.0).astype(jnp.bfloat16)       # (1, 128)

    # ---- fc2 (120->84) + ReLU, fc3 (84->10) --------------------------------
    h2 = jnp.maximum(
        jnp.dot(h1, wf2_ref[...], preferred_element_type=jnp.float32)
        + bf2_ref[...], 0.0).astype(jnp.bfloat16)                        # (1, 128)
    logits = jnp.dot(h2, wf3_ref[...], preferred_element_type=jnp.float32) \
        + bf3_ref[...]                                                   # (1, 128)

    # Lane-dense (128-wide) store; wrapper slices the 10 valid logits.
    o_ref[...] = jnp.broadcast_to(logits, (1, 8, 128)).astype(o_ref.dtype)


# ---------------------------------------------------------------------------
# Forward wrapper
# ---------------------------------------------------------------------------
@jax.jit
def basicnet_forward(packed, x_nchw):
    n = x_nchw.shape[0]
    # NCHW -> NHWC, split rows by (h mod 4), flatten (W, Cin) onto lanes.
    x = jnp.transpose(x_nchw, (0, 2, 3, 1)).astype(jnp.float32)   # (N, 32, 32, 3)
    x = x.reshape(n, 8, 4, 32 * 3)                                # h = 4*s + j
    x = jnp.transpose(x, (0, 2, 1, 3)).astype(jnp.bfloat16)       # (N, 4, 8, 96)

    out = pl.pallas_call(
        _basicnet_kernel,
        out_shape=jax.ShapeDtypeStruct((n, 8, 128), jnp.float32),
        grid=(n,),
        in_specs=[
            pl.BlockSpec((1, 4, 8, 96), lambda i: (i, 0, 0, 0)),     # input image
            pl.BlockSpec((10, 96, 128), lambda i: (0, 0, 0)),        # conv1 Toeplitz
            pl.BlockSpec((1, 128), lambda i: (0, 0)),                # conv1 bias tile
            pl.BlockSpec((10, 128, 128), lambda i: (0, 0, 0)),       # conv2 Toeplitz
            pl.BlockSpec((1, 128), lambda i: (0, 0)),                # conv2 bias tile
            pl.BlockSpec((5, 128, 128), lambda i: (0, 0, 0)),        # fc1 (per-row)
            pl.BlockSpec((1, 128), lambda i: (0, 0)),                # fc1 bias
            pl.BlockSpec((128, 128), lambda i: (0, 0)),              # fc2
            pl.BlockSpec((1, 128), lambda i: (0, 0)),                # fc2 bias
            pl.BlockSpec((128, 128), lambda i: (0, 0)),              # fc3
            pl.BlockSpec((1, 128), lambda i: (0, 0)),                # fc3 bias
        ],
        out_specs=pl.BlockSpec((1, 8, 128), lambda i: (i, 0, 0)),
        compiler_params=pltpu.CompilerParams(
            dimension_semantics=("parallel",),
            vmem_limit_bytes=32 * 1024 * 1024,
        ),
    )(x, packed["w1t"], packed["b1t"], packed["w2t"], packed["b2t"],
      packed["wf1"], packed["bf1"], packed["wf2"], packed["bf2"],
      packed["wf3"], packed["bf3"])
    return out[:, 0, :10]                                          # (N, 10)


# ---------------------------------------------------------------------------
# Parameter init (PyTorch-default-style uniform) and one-time packing
# ---------------------------------------------------------------------------
def _uniform(key, shape, fan_in):
    bound = 1.0 / math.sqrt(fan_in)
    return jax.random.uniform(key, shape, jnp.float32, -bound, bound)


def init_raw_params(key):
    ks = jax.random.split(key, 10)
    return {
        "conv1_w": _uniform(ks[0], (6, 3, 5, 5), 3 * 5 * 5),
        "conv1_b": _uniform(ks[1], (6,), 3 * 5 * 5),
        "conv2_w": _uniform(ks[2], (16, 6, 5, 5), 6 * 5 * 5),
        "conv2_b": _uniform(ks[3], (16,), 6 * 5 * 5),
        "fc1_w": _uniform(ks[4], (120, 400), 400),
        "fc1_b": _uniform(ks[5], (120,), 400),
        "fc2_w": _uniform(ks[6], (84, 120), 120),
        "fc2_b": _uniform(ks[7], (84,), 120),
        "fc3_w": _uniform(ks[8], (10, 84), 84),
        "fc3_b": _uniform(ks[9], (10,), 84),
    }


def pack_params(raw):
    """One-time repack: block-Toeplitz conv weights, pre-transposed FC weights,
    everything zero-padded to 128 lanes and cast to bf16 (biases stay f32)."""
    w1 = np.asarray(raw["conv1_w"], np.float32)
    b1 = np.asarray(raw["conv1_b"], np.float32)
    w2 = np.asarray(raw["conv2_w"], np.float32)
    b2 = np.asarray(raw["conv2_b"], np.float32)
    f1w = np.asarray(raw["fc1_w"], np.float32)
    f1b = np.asarray(raw["fc1_b"], np.float32)
    f2w = np.asarray(raw["fc2_w"], np.float32)
    f2b = np.asarray(raw["fc2_b"], np.float32)
    f3w = np.asarray(raw["fc3_w"], np.float32)
    f3b = np.asarray(raw["fc3_b"], np.float32)

    # conv1: rows = w'*3 + ci (w' in [0,32)), cols = pw*6 + co (pw in [0,14)).
    w1t = np.zeros((10, 96, 128), np.float32)
    for b in range(2):
        for ki in range(5):
            for kj in range(5):
                sub = w1[:, :, ki, kj].T              # (ci=3, co=6)
                for pw in range(14):
                    wp = 2 * pw + b + kj
                    w1t[b * 5 + ki, wp * 3: wp * 3 + 3, pw * 6: pw * 6 + 6] = sub
    b1t = np.zeros((1, 128), np.float32)
    b1t[0, :84] = np.tile(b1, 14)

    # conv2: rows = pw*6 + ci (<84), cols = p2w*16 + co (<80).
    w2t = np.zeros((10, 128, 128), np.float32)
    for b in range(2):
        for ki in range(5):
            for kj in range(5):
                sub = w2[:, :, ki, kj].T              # (ci=6, co=16)
                for p2w in range(5):
                    pw = 2 * p2w + b + kj
                    w2t[b * 5 + ki, pw * 6: pw * 6 + 6,
                        p2w * 16: p2w * 16 + 16] = sub
    b2t = np.zeros((1, 128), np.float32)
    b2t[0, :80] = np.tile(b2, 5)

    # fc1: per spatial row h, rows = w*16 + co, cols = output feature j.
    # Matches torch.flatten NCHW order: f = co*25 + h*5 + w.
    wf1 = np.zeros((5, 128, 128), np.float32)
    f = f1w.reshape(120, 16, 5, 5)                    # [j, co, h, w]
    for h in range(5):
        wf1[h, :80, :120] = np.transpose(f[:, :, h, :], (2, 1, 0)).reshape(80, 120)
    bf1 = np.zeros((1, 128), np.float32)
    bf1[0, :120] = f1b

    wf2 = np.zeros((128, 128), np.float32)
    wf2[:120, :84] = f2w.T
    bf2 = np.zeros((1, 128), np.float32)
    bf2[0, :84] = f2b

    wf3 = np.zeros((128, 128), np.float32)
    wf3[:84, :10] = f3w.T
    bf3 = np.zeros((1, 128), np.float32)
    bf3[0, :10] = f3b

    tob = lambda a: jnp.asarray(a, jnp.bfloat16)
    tof = lambda a: jnp.asarray(a, jnp.float32)
    return {
        "w1t": tob(w1t), "b1t": tof(b1t),
        "w2t": tob(w2t), "b2t": tof(b2t),
        "wf1": tob(wf1), "bf1": tof(bf1),
        "wf2": tob(wf2), "bf2": tof(bf2),
        "wf3": tob(wf3), "bf3": tof(bf3),
    }


# ---------------------------------------------------------------------------
# Pure-JAX reference (matches BasicNet.forward; bf16-rounded params/input so the
# only divergence from the kernel is bf16 matmul accumulation order)
# ---------------------------------------------------------------------------
def reference_forward(raw, x_nchw):
    bf = lambda a: a.astype(jnp.bfloat16).astype(jnp.float32)
    x = bf(x_nchw.astype(jnp.float32))
    w1, b1 = bf(raw["conv1_w"]), raw["conv1_b"]
    w2, b2 = bf(raw["conv2_w"]), raw["conv2_b"]
    f1w, f1b = bf(raw["fc1_w"]), raw["fc1_b"]
    f2w, f2b = bf(raw["fc2_w"]), raw["fc2_b"]
    f3w, f3b = bf(raw["fc3_w"]), raw["fc3_b"]

    def conv(v, w):
        return jax.lax.conv_general_dilated(
            v, w, window_strides=(1, 1), padding="VALID",
            dimension_numbers=("NCHW", "OIHW", "NCHW"))

    def pool(v):
        return jax.lax.reduce_window(
            v, -jnp.inf, jax.lax.max, (1, 1, 2, 2), (1, 1, 2, 2), "VALID")

    y = pool(jax.nn.relu(conv(x, w1) + b1[None, :, None, None]))
    y = pool(jax.nn.relu(conv(y, w2) + b2[None, :, None, None]))
    y = y.reshape(y.shape[0], -1)                     # NCHW flatten, like torch
    y = jax.nn.relu(y @ f1w.T + f1b)
    y = jax.nn.relu(y @ f2w.T + f2b)
    return y @ f3w.T + f3b


# TODO(synk): SGD/momentum optimizer, CrossEntropyLoss and the train() loop are
# host-side training utilities, not part of the forward-pass kernel.

if __name__ == "__main__":
    key = jax.random.PRNGKey(0)
    k_in, k_params = jax.random.split(key)
    # fc1 = Linear(16*5*5, ...) implies a 3x32x32 input.
    x = jax.random.normal(k_in, (2, 3, 32, 32), dtype=jnp.float32)
    raw = init_raw_params(k_params)
    packed = pack_params(raw)

    logits = basicnet_forward(packed, x)
    jax.block_until_ready(logits)
    assert logits.shape == (2, 10) and logits.dtype == jnp.float32

    ref = reference_forward(raw, x)
    np.testing.assert_allclose(np.asarray(logits), np.asarray(ref),
                               rtol=5e-2, atol=5e-2)
    print("KERNEL_OK")
</pallas_src>

<mosaic_0001>
module attributes {stable_mosaic.version = 11 : i64} {
  func.func @_basicnet_kernel(%arg0: i32, %arg1: memref<1x4x8x96xbf16, #tpu.memory_space<vmem>>, %arg2: memref<10x96x128xbf16, #tpu.memory_space<vmem>>, %arg3: memref<1x128xf32, #tpu.memory_space<vmem>>, %arg4: memref<10x128x128xbf16, #tpu.memory_space<vmem>>, %arg5: memref<1x128xf32, #tpu.memory_space<vmem>>, %arg6: memref<5x128x128xbf16, #tpu.memory_space<vmem>>, %arg7: memref<1x128xf32, #tpu.memory_space<vmem>>, %arg8: memref<128x128xbf16, #tpu.memory_space<vmem>>, %arg9: memref<1x128xf32, #tpu.memory_space<vmem>>, %arg10: memref<128x128xbf16, #tpu.memory_space<vmem>>, %arg11: memref<1x128xf32, #tpu.memory_space<vmem>>, %arg12: memref<1x8x128xf32, #tpu.memory_space<vmem>>) attributes {dimension_semantics = [#tpu.dimension_semantics<parallel>], iteration_bounds = array<i64: 2>, scalar_prefetch = 0 : i64, scratch_operands = 0 : i64, tpu.core_type = #tpu.core_type<tc>, window_params = [{transform_indices = @transform_0, window_bounds = array<i64: 1, 4, 8, 96>}, {pipeline_mode = #tpu.pipeline_mode<synchronous>, transform_indices = @transform_1, window_bounds = array<i64: 10, 96, 128>}, {pipeline_mode = #tpu.pipeline_mode<synchronous>, transform_indices = @transform_2, window_bounds = array<i64: 1, 128>}, {pipeline_mode = #tpu.pipeline_mode<synchronous>, transform_indices = @transform_3, window_bounds = array<i64: 10, 128, 128>}, {pipeline_mode = #tpu.pipeline_mode<synchronous>, transform_indices = @transform_4, window_bounds = array<i64: 1, 128>}, {pipeline_mode = #tpu.pipeline_mode<synchronous>, transform_indices = @transform_5, window_bounds = array<i64: 5, 128, 128>}, {pipeline_mode = #tpu.pipeline_mode<synchronous>, transform_indices = @transform_6, window_bounds = array<i64: 1, 128>}, {pipeline_mode = #tpu.pipeline_mode<synchronous>, transform_indices = @transform_7, window_bounds = array<i64: 128, 128>}, {pipeline_mode = #tpu.pipeline_mode<synchronous>, transform_indices = @transform_8, window_bounds = array<i64: 1, 128>}, {pipeline_mode = #tpu.pipeline_mode<synchronous>, transform_indices = @transform_9, window_bounds = array<i64: 128, 128>}, {pipeline_mode = #tpu.pipeline_mode<synchronous>, transform_indices = @transform_10, window_bounds = array<i64: 1, 128>}, {transform_indices = @transform_11, window_bounds = array<i64: 1, 8, 128>}]} {
    %c0 = arith.constant 0 : index
    %c0_0 = arith.constant 0 : index
    %c0_1 = arith.constant 0 : index
    %c0_2 = arith.constant 0 : index
    %0 = vector.load %arg1[%c0, %c0_0, %c0_1, %c0_2] : memref<1x4x8x96xbf16, #tpu.memory_space<vmem>>, vector<1x4x8x96xbf16>
    %1 = vector.shape_cast %0 : vector<1x4x8x96xbf16> to vector<4x8x96xbf16>
    %2 = vector.extract_strided_slice %1 {offsets = [0, 0, 0], sizes = [1, 7, 96], strides = [1, 1, 1]} : vector<4x8x96xbf16> to vector<1x7x96xbf16>
    %3 = vector.shape_cast %2 : vector<1x7x96xbf16> to vector<7x96xbf16>
    %c0_3 = arith.constant 0 : index
    %c0_4 = arith.constant 0 : index
    %c0_5 = arith.constant 0 : index
    %4 = vector.load %arg2[%c0_3, %c0_4, %c0_5] : memref<10x96x128xbf16, #tpu.memory_space<vmem>>, vector<1x96x128xbf16>
    %5 = vector.shape_cast %4 : vector<1x96x128xbf16> to vector<96x128xbf16>
    %cst = arith.constant dense<0.000000e+00> : vector<7x128xf32>
    %6 = tpu.matmul %3, %5, %cst {dimension_numbers = #tpu.dot_dimension_numbers<[1], [0], [0], [1], [0, 0, 1, 1], [], []>} : vector<7x96xbf16>, vector<96x128xbf16>, vector<7x128xf32> -> vector<7x128xf32>
    %7 = vector.extract_strided_slice %1 {offsets = [1, 0, 0], sizes = [1, 7, 96], strides = [1, 1, 1]} : vector<4x8x96xbf16> to vector<1x7x96xbf16>
    %8 = vector.shape_cast %7 : vector<1x7x96xbf16> to vector<7x96xbf16>
    %c1 = arith.constant 1 : index
    %c0_6 = arith.constant 0 : index
    %c0_7 = arith.constant 0 : index
    %9 = vector.load %arg2[%c1, %c0_6, %c0_7] : memref<10x96x128xbf16, #tpu.memory_space<vmem>>, vector<1x96x128xbf16>
    %10 = vector.shape_cast %9 : vector<1x96x128xbf16> to vector<96x128xbf16>
    %cst_8 = arith.constant dense<0.000000e+00> : vector<7x128xf32>
    %11 = tpu.matmul %8, %10, %cst_8 {dimension_numbers = #tpu.dot_dimension_numbers<[1], [0], [0], [1], [0, 0, 1, 1], [], []>} : vector<7x96xbf16>, vector<96x128xbf16>, vector<7x128xf32> -> vector<7x128xf32>
    %12 = arith.addf %6, %11 : vector<7x128xf32>
    %13 = vector.extract_strided_slice %1 {offsets = [2, 0, 0], sizes = [1, 7, 96], strides = [1, 1, 1]} : vector<4x8x96xbf16> to vector<1x7x96xbf16>
    %14 = vector.shape_cast %13 : vector<1x7x96xbf16> to vector<7x96xbf16>
    %c2 = arith.constant 2 : index
    %c0_9 = arith.constant 0 : index
    %c0_10 = arith.constant 0 : index
    %15 = vector.load %arg2[%c2, %c0_9, %c0_10] : memref<10x96x128xbf16, #tpu.memory_space<vmem>>, vector<1x96x128xbf16>
    %16 = vector.shape_cast %15 : vector<1x96x128xbf16> to vector<96x128xbf16>
    %cst_11 = arith.constant dense<0.000000e+00> : vector<7x128xf32>
    %17 = tpu.matmul %14, %16, %cst_11 {dimension_numbers = #tpu.dot_dimension_numbers<[1], [0], [0], [1], [0, 0, 1, 1], [], []>} : vector<7x96xbf16>, vector<96x128xbf16>, vector<7x128xf32> -> vector<7x128xf32>
    %18 = arith.addf %12, %17 : vector<7x128xf32>
    %19 = vector.extract_strided_slice %1 {offsets = [3, 0, 0], sizes = [1, 7, 96], strides = [1, 1, 1]} : vector<4x8x96xbf16> to vector<1x7x96xbf16>
    %20 = vector.shape_cast %19 : vector<1x7x96xbf16> to vector<7x96xbf16>
    %c3 = arith.constant 3 : index
    %c0_12 = arith.constant 0 : index
    %c0_13 = arith.constant 0 : index
    %21 = vector.load %arg2[%c3, %c0_12, %c0_13] : memref<10x96x128xbf16, #tpu.memory_space<vmem>>, vector<1x96x128xbf16>
    %22 = vector.shape_cast %21 : vector<1x96x128xbf16> to vector<96x128xbf16>
    %cst_14 = arith.constant dense<0.000000e+00> : vector<7x128xf32>
    %23 = tpu.matmul %20, %22, %cst_14 {dimension_numbers = #tpu.dot_dimension_numbers<[1], [0], [0], [1], [0, 0, 1, 1], [], []>} : vector<7x96xbf16>, vector<96x128xbf16>, vector<7x128xf32> -> vector<7x128xf32>
    %24 = arith.addf %18, %23 : vector<7x128xf32>
    %25 = vector.extract_strided_slice %1 {offsets = [0, 1, 0], sizes = [1, 7, 96], strides = [1, 1, 1]} : vector<4x8x96xbf16> to vector<1x7x96xbf16>
    %26 = vector.shape_cast %25 : vector<1x7x96xbf16> to vector<7x96xbf16>
    %c4 = arith.constant 4 : index
    %c0_15 = arith.constant 0 : index
    %c0_16 = arith.constant 0 : index
    %27 = vector.load %arg2[%c4, %c0_15, %c0_16] : memref<10x96x128xbf16, #tpu.memory_space<vmem>>, vector<1x96x128xbf16>
    %28 = vector.shape_cast %27 : vector<1x96x128xbf16> to vector<96x128xbf16>
    %cst_17 = arith.constant dense<0.000000e+00> : vector<7x128xf32>
    %29 = tpu.matmul %26, %28, %cst_17 {dimension_numbers = #tpu.dot_dimension_numbers<[1], [0], [0], [1], [0, 0, 1, 1], [], []>} : vector<7x96xbf16>, vector<96x128xbf16>, vector<7x128xf32> -> vector<7x128xf32>
    %30 = arith.addf %24, %29 : vector<7x128xf32>
    %31 = vector.extract_strided_slice %1 {offsets = [0, 0, 0], sizes = [1, 7, 96], strides = [1, 1, 1]} : vector<4x8x96xbf16> to vector<1x7x96xbf16>
    %32 = vector.shape_cast %31 : vector<1x7x96xbf16> to vector<7x96xbf16>
    %c5 = arith.constant 5 : index
    %c0_18 = arith.constant 0 : index
    %c0_19 = arith.constant 0 : index
    %33 = vector.load %arg2[%c5, %c0_18, %c0_19] : memref<10x96x128xbf16, #tpu.memory_space<vmem>>, vector<1x96x128xbf16>
    %34 = vector.shape_cast %33 : vector<1x96x128xbf16> to vector<96x128xbf16>
    %cst_20 = arith.constant dense<0.000000e+00> : vector<7x128xf32>
    %35 = tpu.matmul %32, %34, %cst_20 {dimension_numbers = #tpu.dot_dimension_numbers<[1], [0], [0], [1], [0, 0, 1, 1], [], []>} : vector<7x96xbf16>, vector<96x128xbf16>, vector<7x128xf32> -> vector<7x128xf32>
    %36 = vector.extract_strided_slice %1 {offsets = [1, 0, 0], sizes = [1, 7, 96], strides = [1, 1, 1]} : vector<4x8x96xbf16> to vector<1x7x96xbf16>
    %37 = vector.shape_cast %36 : vector<1x7x96xbf16> to vector<7x96xbf16>
    %c6 = arith.constant 6 : index
    %c0_21 = arith.constant 0 : index
    %c0_22 = arith.constant 0 : index
    %38 = vector.load %arg2[%c6, %c0_21, %c0_22] : memref<10x96x128xbf16, #tpu.memory_space<vmem>>, vector<1x96x128xbf16>
    %39 = vector.shape_cast %38 : vector<1x96x128xbf16> to vector<96x128xbf16>
    %cst_23 = arith.constant dense<0.000000e+00> : vector<7x128xf32>
    %40 = tpu.matmul %37, %39, %cst_23 {dimension_numbers = #tpu.dot_dimension_numbers<[1], [0], [0], [1], [0, 0, 1, 1], [], []>} : vector<7x96xbf16>, vector<96x128xbf16>, vector<7x128xf32> -> vector<7x128xf32>
    %41 = arith.addf %35, %40 : vector<7x128xf32>
    %42 = vector.extract_strided_slice %1 {offsets = [2, 0, 0], sizes = [1, 7, 96], strides = [1, 1, 1]} : vector<4x8x96xbf16> to vector<1x7x96xbf16>
    %43 = vector.shape_cast %42 : vector<1x7x96xbf16> to vector<7x96xbf16>
    %c7 = arith.constant 7 : index
    %c0_24 = arith.constant 0 : index
    %c0_25 = arith.constant 0 : index
    %44 = vector.load %arg2[%c7, %c0_24, %c0_25] : memref<10x96x128xbf16, #tpu.memory_space<vmem>>, vector<1x96x128xbf16>
    %45 = vector.shape_cast %44 : vector<1x96x128xbf16> to vector<96x128xbf16>
    %cst_26 = arith.constant dense<0.000000e+00> : vector<7x128xf32>
    %46 = tpu.matmul %43, %45, %cst_26 {dimension_numbers = #tpu.dot_dimension_numbers<[1], [0], [0], [1], [0, 0, 1, 1], [], []>} : vector<7x96xbf16>, vector<96x128xbf16>, vector<7x128xf32> -> vector<7x128xf32>
    %47 = arith.addf %41, %46 : vector<7x128xf32>
    %48 = vector.extract_strided_slice %1 {offsets = [3, 0, 0], sizes = [1, 7, 96], strides = [1, 1, 1]} : vector<4x8x96xbf16> to vector<1x7x96xbf16>
    %49 = vector.shape_cast %48 : vector<1x7x96xbf16> to vector<7x96xbf16>
    %c8 = arith.constant 8 : index
    %c0_27 = arith.constant 0 : index
    %c0_28 = arith.constant 0 : index
    %50 = vector.load %arg2[%c8, %c0_27, %c0_28] : memref<10x96x128xbf16, #tpu.memory_space<vmem>>, vector<1x96x128xbf16>
    %51 = vector.shape_cast %50 : vector<1x96x128xbf16> to vector<96x128xbf16>
    %cst_29 = arith.constant dense<0.000000e+00> : vector<7x128xf32>
    %52 = tpu.matmul %49, %51, %cst_29 {dimension_numbers = #tpu.dot_dimension_numbers<[1], [0], [0], [1], [0, 0, 1, 1], [], []>} : vector<7x96xbf16>, vector<96x128xbf16>, vector<7x128xf32> -> vector<7x128xf32>
    %53 = arith.addf %47, %52 : vector<7x128xf32>
    %54 = vector.extract_strided_slice %1 {offsets = [0, 1, 0], sizes = [1, 7, 96], strides = [1, 1, 1]} : vector<4x8x96xbf16> to vector<1x7x96xbf16>
    %55 = vector.shape_cast %54 : vector<1x7x96xbf16> to vector<7x96xbf16>
    %c9 = arith.constant 9 : index
    %c0_30 = arith.constant 0 : index
    %c0_31 = arith.constant 0 : index
    %56 = vector.load %arg2[%c9, %c0_30, %c0_31] : memref<10x96x128xbf16, #tpu.memory_space<vmem>>, vector<1x96x128xbf16>
    %57 = vector.shape_cast %56 : vector<1x96x128xbf16> to vector<96x128xbf16>
    %cst_32 = arith.constant dense<0.000000e+00> : vector<7x128xf32>
    %58 = tpu.matmul %55, %57, %cst_32 {dimension_numbers = #tpu.dot_dimension_numbers<[1], [0], [0], [1], [0, 0, 1, 1], [], []>} : vector<7x96xbf16>, vector<96x128xbf16>, vector<7x128xf32> -> vector<7x128xf32>
    %59 = arith.addf %53, %58 : vector<7x128xf32>
    %60 = arith.maximumf %30, %59 : vector<7x128xf32>
    %61 = vector.extract_strided_slice %1 {offsets = [1, 0, 0], sizes = [1, 7, 96], strides = [1, 1, 1]} : vector<4x8x96xbf16> to vector<1x7x96xbf16>
    %62 = vector.shape_cast %61 : vector<1x7x96xbf16> to vector<7x96xbf16>
    %c0_33 = arith.constant 0 : index
    %c0_34 = arith.constant 0 : index
    %c0_35 = arith.constant 0 : index
    %63 = vector.load %arg2[%c0_33, %c0_34, %c0_35] : memref<10x96x128xbf16, #tpu.memory_space<vmem>>, vector<1x96x128xbf16>
    %64 = vector.shape_cast %63 : vector<1x96x128xbf16> to vector<96x128xbf16>
    %cst_36 = arith.constant dense<0.000000e+00> : vector<7x128xf32>
    %65 = tpu.matmul %62, %64, %cst_36 {dimension_numbers = #tpu.dot_dimension_numbers<[1], [0], [0], [1], [0, 0, 1, 1], [], []>} : vector<7x96xbf16>, vector<96x128xbf16>, vector<7x128xf32> -> vector<7x128xf32>
    %66 = vector.extract_strided_slice %1 {offsets = [2, 0, 0], sizes = [1, 7, 96], strides = [1, 1, 1]} : vector<4x8x96xbf16> to vector<1x7x96xbf16>
    %67 = vector.shape_cast %66 : vector<1x7x96xbf16> to vector<7x96xbf16>
    %c1_37 = arith.constant 1 : index
    %c0_38 = arith.constant 0 : index
    %c0_39 = arith.constant 0 : index
    %68 = vector.load %arg2[%c1_37, %c0_38, %c0_39] : memref<10x96x128xbf16, #tpu.memory_space<vmem>>, vector<1x96x128xbf16>
    %69 = vector.shape_cast %68 : vector<1x96x128xbf16> to vector<96x128xbf16>
    %cst_40 = arith.constant dense<0.000000e+00> : vector<7x128xf32>
    %70 = tpu.matmul %67, %69, %cst_40 {dimension_numbers = #tpu.dot_dimension_numbers<[1], [0], [0], [1], [0, 0, 1, 1], [], []>} : vector<7x96xbf16>, vector<96x128xbf16>, vector<7x128xf32> -> vector<7x128xf32>
    %71 = arith.addf %65, %70 : vector<7x128xf32>
    %72 = vector.extract_strided_slice %1 {offsets = [3, 0, 0], sizes = [1, 7, 96], strides = [1, 1, 1]} : vector<4x8x96xbf16> to vector<1x7x96xbf16>
    %73 = vector.shape_cast %72 : vector<1x7x96xbf16> to vector<7x96xbf16>
    %c2_41 = arith.constant 2 : index
    %c0_42 = arith.constant 0 : index
    %c0_43 = arith.constant 0 : index
    %74 = vector.load %arg2[%c2_41, %c0_42, %c0_43] : memref<10x96x128xbf16, #tpu.memory_space<vmem>>, vector<1x96x128xbf16>
    %75 = vector.shape_cast %74 : vector<1x96x128xbf16> to vector<96x128xbf16>
    %cst_44 = arith.constant dense<0.000000e+00> : vector<7x128xf32>
    %76 = tpu.matmul %73, %75, %cst_44 {dimension_numbers = #tpu.dot_dimension_numbers<[1], [0], [0], [1], [0, 0, 1, 1], [], []>} : vector<7x96xbf16>, vector<96x128xbf16>, vector<7x128xf32> -> vector<7x128xf32>
    %77 = arith.addf %71, %76 : vector<7x128xf32>
    %78 = vector.extract_strided_slice %1 {offsets = [0, 1, 0], sizes = [1, 7, 96], strides = [1, 1, 1]} : vector<4x8x96xbf16> to vector<1x7x96xbf16>
    %79 = vector.shape_cast %78 : vector<1x7x96xbf16> to vector<7x96xbf16>
    %c3_45 = arith.constant 3 : index
    %c0_46 = arith.constant 0 : index
    %c0_47 = arith.constant 0 : index
    %80 = vector.load %arg2[%c3_45, %c0_46, %c0_47] : memref<10x96x128xbf16, #tpu.memory_space<vmem>>, vector<1x96x128xbf16>
    %81 = vector.shape_cast %80 : vector<1x96x128xbf16> to vector<96x128xbf16>
    %cst_48 = arith.constant dense<0.000000e+00> : vector<7x128xf32>
    %82 = tpu.matmul %79, %81, %cst_48 {dimension_numbers = #tpu.dot_dimension_numbers<[1], [0], [0], [1], [0, 0, 1, 1], [], []>} : vector<7x96xbf16>, vector<96x128xbf16>, vector<7x128xf32> -> vector<7x128xf32>
    %83 = arith.addf %77, %82 : vector<7x128xf32>
    %84 = vector.extract_strided_slice %1 {offsets = [1, 1, 0], sizes = [1, 7, 96], strides = [1, 1, 1]} : vector<4x8x96xbf16> to vector<1x7x96xbf16>
    %85 = vector.shape_cast %84 : vector<1x7x96xbf16> to vector<7x96xbf16>
    %c4_49 = arith.constant 4 : index
    %c0_50 = arith.constant 0 : index
    %c0_51 = arith.constant 0 : index
    %86 = vector.load %arg2[%c4_49, %c0_50, %c0_51] : memref<10x96x128xbf16, #tpu.memory_space<vmem>>, vector<1x96x128xbf16>
    %87 = vector.shape_cast %86 : vector<1x96x128xbf16> to vector<96x128xbf16>
    %cst_52 = arith.constant dense<0.000000e+00> : vector<7x128xf32>
    %88 = tpu.matmul %85, %87, %cst_52 {dimension_numbers = #tpu.dot_dimension_numbers<[1], [0], [0], [1], [0, 0, 1, 1], [], []>} : vector<7x96xbf16>, vector<96x128xbf16>, vector<7x128xf32> -> vector<7x128xf32>
    %89 = arith.addf %83, %88 : vector<7x128xf32>
    %90 = arith.maximumf %60, %89 : vector<7x128xf32>
    %91 = vector.extract_strided_slice %1 {offsets = [1, 0, 0], sizes = [1, 7, 96], strides = [1, 1, 1]} : vector<4x8x96xbf16> to vector<1x7x96xbf16>
    %92 = vector.shape_cast %91 : vector<1x7x96xbf16> to vector<7x96xbf16>
    %c5_53 = arith.constant 5 : index
    %c0_54 = arith.constant 0 : index
    %c0_55 = arith.constant 0 : index
    %93 = vector.load %arg2[%c5_53, %c0_54, %c0_55] : memref<10x96x128xbf16, #tpu.memory_space<vmem>>, vector<1x96x128xbf16>
    %94 = vector.shape_cast %93 : vector<1x96x128xbf16> to vector<96x128xbf16>
    %cst_56 = arith.constant dense<0.000000e+00> : vector<7x128xf32>
    %95 = tpu.matmul %92, %94, %cst_56 {dimension_numbers = #tpu.dot_dimension_numbers<[1], [0], [0], [1], [0, 0, 1, 1], [], []>} : vector<7x96xbf16>, vector<96x128xbf16>, vector<7x128xf32> -> vector<7x128xf32>
    %96 = vector.extract_strided_slice %1 {offsets = [2, 0, 0], sizes = [1, 7, 96], strides = [1, 1, 1]} : vector<4x8x96xbf16> to vector<1x7x96xbf16>
    %97 = vector.shape_cast %96 : vector<1x7x96xbf16> to vector<7x96xbf16>
    %c6_57 = arith.constant 6 : index
    %c0_58 = arith.constant 0 : index
    %c0_59 = arith.constant 0 : index
    %98 = vector.load %arg2[%c6_57, %c0_58, %c0_59] : memref<10x96x128xbf16, #tpu.memory_space<vmem>>, vector<1x96x128xbf16>
    %99 = vector.shape_cast %98 : vector<1x96x128xbf16> to vector<96x128xbf16>
    %cst_60 = arith.constant dense<0.000000e+00> : vector<7x128xf32>
    %100 = tpu.matmul %97, %99, %cst_60 {dimension_numbers = #tpu.dot_dimension_numbers<[1], [0], [0], [1], [0, 0, 1, 1], [], []>} : vector<7x96xbf16>, vector<96x128xbf16>, vector<7x128xf32> -> vector<7x128xf32>
    %101 = arith.addf %95, %100 : vector<7x128xf32>
    %102 = vector.extract_strided_slice %1 {offsets = [3, 0, 0], sizes = [1, 7, 96], strides = [1, 1, 1]} : vector<4x8x96xbf16> to vector<1x7x96xbf16>
    %103 = vector.shape_cast %102 : vector<1x7x96xbf16> to vector<7x96xbf16>
    %c7_61 = arith.constant 7 : index
    %c0_62 = arith.constant 0 : index
    %c0_63 = arith.constant 0 : index
    %104 = vector.load %arg2[%c7_61, %c0_62, %c0_63] : memref<10x96x128xbf16, #tpu.memory_space<vmem>>, vector<1x96x128xbf16>
    %105 = vector.shape_cast %104 : vector<1x96x128xbf16> to vector<96x128xbf16>
    %cst_64 = arith.constant dense<0.000000e+00> : vector<7x128xf32>
    %106 = tpu.matmul %103, %105, %cst_64 {dimension_numbers = #tpu.dot_dimension_numbers<[1], [0], [0], [1], [0, 0, 1, 1], [], []>} : vector<7x96xbf16>, vector<96x128xbf16>, vector<7x128xf32> -> vector<7x128xf32>
    %107 = arith.addf %101, %106 : vector<7x128xf32>
    %108 = vector.extract_strided_slice %1 {offsets = [0, 1, 0], sizes = [1, 7, 96], strides = [1, 1, 1]} : vector<4x8x96xbf16> to vector<1x7x96xbf16>
    %109 = vector.shape_cast %108 : vector<1x7x96xbf16> to vector<7x96xbf16>
    %c8_65 = arith.constant 8 : index
    %c0_66 = arith.constant 0 : index
    %c0_67 = arith.constant 0 : index
    %110 = vector.load %arg2[%c8_65, %c0_66, %c0_67] : memref<10x96x128xbf16, #tpu.memory_space<vmem>>, vector<1x96x128xbf16>
    %111 = vector.shape_cast %110 : vector<1x96x128xbf16> to vector<96x128xbf16>
    %cst_68 = arith.constant dense<0.000000e+00> : vector<7x128xf32>
    %112 = tpu.matmul %109, %111, %cst_68 {dimension_numbers = #tpu.dot_dimension_numbers<[1], [0], [0], [1], [0, 0, 1, 1], [], []>} : vector<7x96xbf16>, vector<96x128xbf16>, vector<7x128xf32> -> vector<7x128xf32>
    %113 = arith.addf %107, %112 : vector<7x128xf32>
    %114 = vector.extract_strided_slice %1 {offsets = [1, 1, 0], sizes = [1, 7, 96], strides = [1, 1, 1]} : vector<4x8x96xbf16> to vector<1x7x96xbf16>
    %115 = vector.shape_cast %114 : vector<1x7x96xbf16> to vector<7x96xbf16>
    %c9_69 = arith.constant 9 : index
    %c0_70 = arith.constant 0 : index
    %c0_71 = arith.constant 0 : index
    %116 = vector.load %arg2[%c9_69, %c0_70, %c0_71] : memref<10x96x128xbf16, #tpu.memory_space<vmem>>, vector<1x96x128xbf16>
    %117 = vector.shape_cast %116 : vector<1x96x128xbf16> to vector<96x128xbf16>
    %cst_72 = arith.constant dense<0.000000e+00> : vector<7x128xf32>
    %118 = tpu.matmul %115, %117, %cst_72 {dimension_numbers = #tpu.dot_dimension_numbers<[1], [0], [0], [1], [0, 0, 1, 1], [], []>} : vector<7x96xbf16>, vector<96x128xbf16>, vector<7x128xf32> -> vector<7x128xf32>
    %119 = arith.addf %113, %118 : vector<7x128xf32>
    %120 = arith.maximumf %90, %119 : vector<7x128xf32>
    %c0_73 = arith.constant 0 : index
    %c0_74 = arith.constant 0 : index
    %121 = vector.load %arg3[%c0_73, %c0_74] : memref<1x128xf32, #tpu.memory_space<vmem>>, vector<1x128xf32>
    %122 = vector.broadcast %121 : vector<1x128xf32> to vector<7x128xf32>
    %123 = arith.addf %120, %122 : vector<7x128xf32>
    %cst_75 = arith.constant 0.000000e+00 : f32
    %124 = vector.broadcast %cst_75 : f32 to vector<7x128xf32>
    %125 = arith.maximumf %123, %124 : vector<7x128xf32>
    %126 = arith.truncf %125 : vector<7x128xf32> to vector<7x128xbf16>
    %127 = vector.extract_strided_slice %1 {offsets = [2, 0, 0], sizes = [1, 7, 96], strides = [1, 1, 1]} : vector<4x8x96xbf16> to vector<1x7x96xbf16>
    %128 = vector.shape_cast %127 : vector<1x7x96xbf16> to vector<7x96xbf16>
    %c0_76 = arith.constant 0 : index
    %c0_77 = arith.constant 0 : index
    %c0_78 = arith.constant 0 : index
    %129 = vector.load %arg2[%c0_76, %c0_77, %c0_78] : memref<10x96x128xbf16, #tpu.memory_space<vmem>>, vector<1x96x128xbf16>
    %130 = vector.shape_cast %129 : vector<1x96x128xbf16> to vector<96x128xbf16>
    %cst_79 = arith.constant dense<0.000000e+00> : vector<7x128xf32>
    %131 = tpu.matmul %128, %130, %cst_79 {dimension_numbers = #tpu.dot_dimension_numbers<[1], [0], [0], [1], [0, 0, 1, 1], [], []>} : vector<7x96xbf16>, vector<96x128xbf16>, vector<7x128xf32> -> vector<7x128xf32>
    %132 = vector.extract_strided_slice %1 {offsets = [3, 0, 0], sizes = [1, 7, 96], strides = [1, 1, 1]} : vector<4x8x96xbf16> to vector<1x7x96xbf16>
    %133 = vector.shape_cast %132 : vector<1x7x96xbf16> to vector<7x96xbf16>
    %c1_80 = arith.constant 1 : index
    %c0_81 = arith.constant 0 : index
    %c0_82 = arith.constant 0 : index
    %134 = vector.load %arg2[%c1_80, %c0_81, %c0_82] : memref<10x96x128xbf16, #tpu.memory_space<vmem>>, vector<1x96x128xbf16>
    %135 = vector.shape_cast %134 : vector<1x96x128xbf16> to vector<96x128xbf16>
    %cst_83 = arith.constant dense<0.000000e+00> : vector<7x128xf32>
    %136 = tpu.matmul %133, %135, %cst_83 {dimension_numbers = #tpu.dot_dimension_numbers<[1], [0], [0], [1], [0, 0, 1, 1], [], []>} : vector<7x96xbf16>, vector<96x128xbf16>, vector<7x128xf32> -> vector<7x128xf32>
    %137 = arith.addf %131, %136 : vector<7x128xf32>
    %138 = vector.extract_strided_slice %1 {offsets = [0, 1, 0], sizes = [1, 7, 96], strides = [1, 1, 1]} : vector<4x8x96xbf16> to vector<1x7x96xbf16>
    %139 = vector.shape_cast %138 : vector<1x7x96xbf16> to vector<7x96xbf16>
    %c2_84 = arith.constant 2 : index
    %c0_85 = arith.constant 0 : index
    %c0_86 = arith.constant 0 : index
    %140 = vector.load %arg2[%c2_84, %c0_85, %c0_86] : memref<10x96x128xbf16, #tpu.memory_space<vmem>>, vector<1x96x128xbf16>
    %141 = vector.shape_cast %140 : vector<1x96x128xbf16> to vector<96x128xbf16>
    %cst_87 = arith.constant dense<0.000000e+00> : vector<7x128xf32>
    %142 = tpu.matmul %139, %141, %cst_87 {dimension_numbers = #tpu.dot_dimension_numbers<[1], [0], [0], [1], [0, 0, 1, 1], [], []>} : vector<7x96xbf16>, vector<96x128xbf16>, vector<7x128xf32> -> vector<7x128xf32>
    %143 = arith.addf %137, %142 : vector<7x128xf32>
    %144 = vector.extract_strided_slice %1 {offsets = [1, 1, 0], sizes = [1, 7, 96], strides = [1, 1, 1]} : vector<4x8x96xbf16> to vector<1x7x96xbf16>
    %145 = vector.shape_cast %144 : vector<1x7x96xbf16> to vector<7x96xbf16>
    %c3_88 = arith.constant 3 : index
    %c0_89 = arith.constant 0 : index
    %c0_90 = arith.constant 0 : index
    %146 = vector.load %arg2[%c3_88, %c0_89, %c0_90] : memref<10x96x128xbf16, #tpu.memory_space<vmem>>, vector<1x96x128xbf16>
    %147 = vector.shape_cast %146 : vector<1x96x128xbf16> to vector<96x128xbf16>
    %cst_91 = arith.constant dense<0.000000e+00> : vector<7x128xf32>
    %148 = tpu.matmul %145, %147, %cst_91 {dimension_numbers = #tpu.dot_dimension_numbers<[1], [0], [0], [1], [0, 0, 1, 1], [], []>} : vector<7x96xbf16>, vector<96x128xbf16>, vector<7x128xf32> -> vector<7x128xf32>
    %149 = arith.addf %143, %148 : vector<7x128xf32>
    %150 = vector.extract_strided_slice %1 {offsets = [2, 1, 0], sizes = [1, 7, 96], strides = [1, 1, 1]} : vector<4x8x96xbf16> to vector<1x7x96xbf16>
    %151 = vector.shape_cast %150 : vector<1x7x96xbf16> to vector<7x96xbf16>
    %c4_92 = arith.constant 4 : index
    %c0_93 = arith.constant 0 : index
    %c0_94 = arith.constant 0 : index
    %152 = vector.load %arg2[%c4_92, %c0_93, %c0_94] : memref<10x96x128xbf16, #tpu.memory_space<vmem>>, vector<1x96x128xbf16>
    %153 = vector.shape_cast %152 : vector<1x96x128xbf16> to vector<96x128xbf16>
    %cst_95 = arith.constant dense<0.000000e+00> : vector<7x128xf32>
    %154 = tpu.matmul %151, %153, %cst_95 {dimension_numbers = #tpu.dot_dimension_numbers<[1], [0], [0], [1], [0, 0, 1, 1], [], []>} : vector<7x96xbf16>, vector<96x128xbf16>, vector<7x128xf32> -> vector<7x128xf32>
    %155 = arith.addf %149, %154 : vector<7x128xf32>
    %156 = vector.extract_strided_slice %1 {offsets = [2, 0, 0], sizes = [1, 7, 96], strides = [1, 1, 1]} : vector<4x8x96xbf16> to vector<1x7x96xbf16>
    %157 = vector.shape_cast %156 : vector<1x7x96xbf16> to vector<7x96xbf16>
    %c5_96 = arith.constant 5 : index
    %c0_97 = arith.constant 0 : index
    %c0_98 = arith.constant 0 : index
    %158 = vector.load %arg2[%c5_96, %c0_97, %c0_98] : memref<10x96x128xbf16, #tpu.memory_space<vmem>>, vector<1x96x128xbf16>
    %159 = vector.shape_cast %158 : vector<1x96x128xbf16> to vector<96x128xbf16>
    %cst_99 = arith.constant dense<0.000000e+00> : vector<7x128xf32>
    %160 = tpu.matmul %157, %159, %cst_99 {dimension_numbers = #tpu.dot_dimension_numbers<[1], [0], [0], [1], [0, 0, 1, 1], [], []>} : vector<7x96xbf16>, vector<96x128xbf16>, vector<7x128xf32> -> vector<7x128xf32>
    %161 = vector.extract_strided_slice %1 {offsets = [3, 0, 0], sizes = [1, 7, 96], strides = [1, 1, 1]} : vector<4x8x96xbf16> to vector<1x7x96xbf16>
    %162 = vector.shape_cast %161 : vector<1x7x96xbf16> to vector<7x96xbf16>
    %c6_100 = arith.constant 6 : index
    %c0_101 = arith.constant 0 : index
    %c0_102 = arith.constant 0 : index
    %163 = vector.load %arg2[%c6_100, %c0_101, %c0_102] : memref<10x96x128xbf16, #tpu.memory_space<vmem>>, vector<1x96x128xbf16>
    %164 = vector.shape_cast %163 : vector<1x96x128xbf16> to vector<96x128xbf16>
    %cst_103 = arith.constant dense<0.000000e+00> : vector<7x128xf32>
    %165 = tpu.matmul %162, %164, %cst_103 {dimension_numbers = #tpu.dot_dimension_numbers<[1], [0], [0], [1], [0, 0, 1, 1], [], []>} : vector<7x96xbf16>, vector<96x128xbf16>, vector<7x128xf32> -> vector<7x128xf32>
    %166 = arith.addf %160, %165 : vector<7x128xf32>
    %167 = vector.extract_strided_slice %1 {offsets = [0, 1, 0], sizes = [1, 7, 96], strides = [1, 1, 1]} : vector<4x8x96xbf16> to vector<1x7x96xbf16>
    %168 = vector.shape_cast %167 : vector<1x7x96xbf16> to vector<7x96xbf16>
    %c7_104 = arith.constant 7 : index
    %c0_105 = arith.constant 0 : index
    %c0_106 = arith.constant 0 : index
    %169 = vector.load %arg2[%c7_104, %c0_105, %c0_106] : memref<10x96x128xbf16, #tpu.memory_space<vmem>>, vector<1x96x128xbf16>
    %170 = vector.shape_cast %169 : vector<1x96x128xbf16> to vector<96x128xbf16>
    %cst_107 = arith.constant dense<0.000000e+00> : vector<7x128xf32>
    %171 = tpu.matmul %168, %170, %cst_107 {dimension_numbers = #tpu.dot_dimension_numbers<[1], [0], [0], [1], [0, 0, 1, 1], [], []>} : vector<7x96xbf16>, vector<96x128xbf16>, vector<7x128xf32> -> vector<7x128xf32>
    %172 = arith.addf %166, %171 : vector<7x128xf32>
    %173 = vector.extract_strided_slice %1 {offsets = [1, 1, 0], sizes = [1, 7, 96], strides = [1, 1, 1]} : vector<4x8x96xbf16> to vector<1x7x96xbf16>
    %174 = vector.shape_cast %173 : vector<1x7x96xbf16> to vector<7x96xbf16>
    %c8_108 = arith.constant 8 : index
    %c0_109 = arith.constant 0 : index
    %c0_110 = arith.constant 0 : index
    %175 = vector.load %arg2[%c8_108, %c0_109, %c0_110] : memref<10x96x128xbf16, #tpu.memory_space<vmem>>, vector<1x96x128xbf16>
    %176 = vector.shape_cast %175 : vector<1x96x128xbf16> to vector<96x128xbf16>
    %cst_111 = arith.constant dense<0.000000e+00> : vector<7x128xf32>
    %177 = tpu.matmul %174, %176, %cst_111 {dimension_numbers = #tpu.dot_dimension_numbers<[1], [0], [0], [1], [0, 0, 1, 1], [], []>} : vector<7x96xbf16>, vector<96x128xbf16>, vector<7x128xf32> -> vector<7x128xf32>
    %178 = arith.addf %172, %177 : vector<7x128xf32>
    %179 = vector.extract_strided_slice %1 {offsets = [2, 1, 0], sizes = [1, 7, 96], strides = [1, 1, 1]} : vector<4x8x96xbf16> to vector<1x7x96xbf16>
    %180 = vector.shape_cast %179 : vector<1x7x96xbf16> to vector<7x96xbf16>
    %c9_112 = arith.constant 9 : index
    %c0_113 = arith.constant 0 : index
    %c0_114 = arith.constant 0 : index
    %181 = vector.load %arg2[%c9_112, %c0_113, %c0_114] : memref<10x96x128xbf16, #tpu.memory_space<vmem>>, vector<1x96x128xbf16>
    %182 = vector.shape_cast %181 : vector<1x96x128xbf16> to vector<96x128xbf16>
    %cst_115 = arith.constant dense<0.000000e+00> : vector<7x128xf32>
    %183 = tpu.matmul %180, %182, %cst_115 {dimension_numbers = #tpu.dot_dimension_numbers<[1], [0], [0], [1], [0, 0, 1, 1], [], []>} : vector<7x96xbf16>, vector<96x128xbf16>, vector<7x128xf32> -> vector<7x128xf32>
    %184 = arith.addf %178, %183 : vector<7x128xf32>
    %185 = arith.maximumf %155, %184 : vector<7x128xf32>
    %186 = vector.extract_strided_slice %1 {offsets = [3, 0, 0], sizes = [1, 7, 96], strides = [1, 1, 1]} : vector<4x8x96xbf16> to vector<1x7x96xbf16>
    %187 = vector.shape_cast %186 : vector<1x7x96xbf16> to vector<7x96xbf16>
    %c0_116 = arith.constant 0 : index
    %c0_117 = arith.constant 0 : index
    %c0_118 = arith.constant 0 : index
    %188 = vector.load %arg2[%c0_116, %c0_117, %c0_118] : memref<10x96x128xbf16, #tpu.memory_space<vmem>>, vector<1x96x128xbf16>
    %189 = vector.shape_cast %188 : vector<1x96x128xbf16> to vector<96x128xbf16>
    %cst_119 = arith.constant dense<0.000000e+00> : vector<7x128xf32>
    %190 = tpu.matmul %187, %189, %cst_119 {dimension_numbers = #tpu.dot_dimension_numbers<[1], [0], [0], [1], [0, 0, 1, 1], [], []>} : vector<7x96xbf16>, vector<96x128xbf16>, vector<7x128xf32> -> vector<7x128xf32>
    %191 = vector.extract_strided_slice %1 {offsets = [0, 1, 0], sizes = [1, 7, 96], strides = [1, 1, 1]} : vector<4x8x96xbf16> to vector<1x7x96xbf16>
    %192 = vector.shape_cast %191 : vector<1x7x96xbf16> to vector<7x96xbf16>
    %c1_120 = arith.constant 1 : index
    %c0_121 = arith.constant 0 : index
    %c0_122 = arith.constant 0 : index
    %193 = vector.load %arg2[%c1_120, %c0_121, %c0_122] : memref<10x96x128xbf16, #tpu.memory_space<vmem>>, vector<1x96x128xbf16>
    %194 = vector.shape_cast %193 : vector<1x96x128xbf16> to vector<96x128xbf16>
    %cst_123 = arith.constant dense<0.000000e+00> : vector<7x128xf32>
    %195 = tpu.matmul %192, %194, %cst_123 {dimension_numbers = #tpu.dot_dimension_numbers<[1], [0], [0], [1], [0, 0, 1, 1], [], []>} : vector<7x96xbf16>, vector<96x128xbf16>, vector<7x128xf32> -> vector<7x128xf32>
    %196 = arith.addf %190, %195 : vector<7x128xf32>
    %197 = vector.extract_strided_slice %1 {offsets = [1, 1, 0], sizes = [1, 7, 96], strides = [1, 1, 1]} : vector<4x8x96xbf16> to vector<1x7x96xbf16>
    %198 = vector.shape_cast %197 : vector<1x7x96xbf16> to vector<7x96xbf16>
    %c2_124 = arith.constant 2 : index
    %c0_125 = arith.constant 0 : index
    %c0_126 = arith.constant 0 : index
    %199 = vector.load %arg2[%c2_124, %c0_125, %c0_126] : memref<10x96x128xbf16, #tpu.memory_space<vmem>>, vector<1x96x128xbf16>
    %200 = vector.shape_cast %199 : vector<1x96x128xbf16> to vector<96x128xbf16>
    %cst_127 = arith.constant dense<0.000000e+00> : vector<7x128xf32>
    %201 = tpu.matmul %198, %200, %cst_127 {dimension_numbers = #tpu.dot_dimension_numbers<[1], [0], [0], [1], [0, 0, 1, 1], [], []>} : vector<7x96xbf16>, vector<96x128xbf16>, vector<7x128xf32> -> vector<7x128xf32>
    %202 = arith.addf %196, %201 : vector<7x128xf32>
    %203 = vector.extract_strided_slice %1 {offsets = [2, 1, 0], sizes = [1, 7, 96], strides = [1, 1, 1]} : vector<4x8x96xbf16> to vector<1x7x96xbf16>
    %204 = vector.shape_cast %203 : vector<1x7x96xbf16> to vector<7x96xbf16>
    %c3_128 = arith.constant 3 : index
    %c0_129 = arith.constant 0 : index
    %c0_130 = arith.constant 0 : index
    %205 = vector.load %arg2[%c3_128, %c0_129, %c0_130] : memref<10x96x128xbf16, #tpu.memory_space<vmem>>, vector<1x96x128xbf16>
    %206 = vector.shape_cast %205 : vector<1x96x128xbf16> to vector<96x128xbf16>
    %cst_131 = arith.constant dense<0.000000e+00> : vector<7x128xf32>
    %207 = tpu.matmul %204, %206, %cst_131 {dimension_numbers = #tpu.dot_dimension_numbers<[1], [0], [0], [1], [0, 0, 1, 1], [], []>} : vector<7x96xbf16>, vector<96x128xbf16>, vector<7x128xf32> -> vector<7x128xf32>
    %208 = arith.addf %202, %207 : vector<7x128xf32>
    %209 = vector.extract_strided_slice %1 {offsets = [3, 1, 0], sizes = [1, 7, 96], strides = [1, 1, 1]} : vector<4x8x96xbf16> to vector<1x7x96xbf16>
    %210 = vector.shape_cast %209 : vector<1x7x96xbf16> to vector<7x96xbf16>
    %c4_132 = arith.constant 4 : index
    %c0_133 = arith.constant 0 : index
    %c0_134 = arith.constant 0 : index
    %211 = vector.load %arg2[%c4_132, %c0_133, %c0_134] : memref<10x96x128xbf16, #tpu.memory_space<vmem>>, vector<1x96x128xbf16>
    %212 = vector.shape_cast %211 : vector<1x96x128xbf16> to vector<96x128xbf16>
    %cst_135 = arith.constant dense<0.000000e+00> : vector<7x128xf32>
    %213 = tpu.matmul %210, %212, %cst_135 {dimension_numbers = #tpu.dot_dimension_numbers<[1], [0], [0], [1], [0, 0, 1, 1], [], []>} : vector<7x96xbf16>, vector<96x128xbf16>, vector<7x128xf32> -> vector<7x128xf32>
    %214 = arith.addf %208, %213 : vector<7x128xf32>
    %215 = arith.maximumf %185, %214 : vector<7x128xf32>
    %216 = vector.extract_strided_slice %1 {offsets = [3, 0, 0], sizes = [1, 7, 96], strides = [1, 1, 1]} : vector<4x8x96xbf16> to vector<1x7x96xbf16>
    %217 = vector.shape_cast %216 : vector<1x7x96xbf16> to vector<7x96xbf16>
    %c5_136 = arith.constant 5 : index
    %c0_137 = arith.constant 0 : index
    %c0_138 = arith.constant 0 : index
    %218 = vector.load %arg2[%c5_136, %c0_137, %c0_138] : memref<10x96x128xbf16, #tpu.memory_space<vmem>>, vector<1x96x128xbf16>
    %219 = vector.shape_cast %218 : vector<1x96x128xbf16> to vector<96x128xbf16>
    %cst_139 = arith.constant dense<0.000000e+00> : vector<7x128xf32>
    %220 = tpu.matmul %217, %219, %cst_139 {dimension_numbers = #tpu.dot_dimension_numbers<[1], [0], [0], [1], [0, 0, 1, 1], [], []>} : vector<7x96xbf16>, vector<96x128xbf16>, vector<7x128xf32> -> vector<7x128xf32>
    %221 = vector.extract_strided_slice %1 {offsets = [0, 1, 0], sizes = [1, 7, 96], strides = [1, 1, 1]} : vector<4x8x96xbf16> to vector<1x7x96xbf16>
    %222 = vector.shape_cast %221 : vector<1x7x96xbf16> to vector<7x96xbf16>
    %c6_140 = arith.constant 6 : index
    %c0_141 = arith.constant 0 : index
    %c0_142 = arith.constant 0 : index
    %223 = vector.load %arg2[%c6_140, %c0_141, %c0_142] : memref<10x96x128xbf16, #tpu.memory_space<vmem>>, vector<1x96x128xbf16>
    %224 = vector.shape_cast %223 : vector<1x96x128xbf16> to vector<96x128xbf16>
    %cst_143 = arith.constant dense<0.000000e+00> : vector<7x128xf32>
    %225 = tpu.matmul %222, %224, %cst_143 {dimension_numbers = #tpu.dot_dimension_numbers<[1], [0], [0], [1], [0, 0, 1, 1], [], []>} : vector<7x96xbf16>, vector<96x128xbf16>, vector<7x128xf32> -> vector<7x128xf32>
    %226 = arith.addf %220, %225 : vector<7x128xf32>
    %227 = vector.extract_strided_slice %1 {offsets = [1, 1, 0], sizes = [1, 7, 96], strides = [1, 1, 1]} : vector<4x8x96xbf16> to vector<1x7x96xbf16>
    %228 = vector.shape_cast %227 : vector<1x7x96xbf16> to vector<7x96xbf16>
    %c7_144 = arith.constant 7 : index
    %c0_145 = arith.constant 0 : index
    %c0_146 = arith.constant 0 : index
    %229 = vector.load %arg2[%c7_144, %c0_145, %c0_146] : memref<10x96x128xbf16, #tpu.memory_space<vmem>>, vector<1x96x128xbf16>
    %230 = vector.shape_cast %229 : vector<1x96x128xbf16> to vector<96x128xbf16>
    %cst_147 = arith.constant dense<0.000000e+00> : vector<7x128xf32>
    %231 = tpu.matmul %228, %230, %cst_147 {dimension_numbers = #tpu.dot_dimension_numbers<[1], [0], [0], [1], [0, 0, 1, 1], [], []>} : vector<7x96xbf16>, vector<96x128xbf16>, vector<7x128xf32> -> vector<7x128xf32>
    %232 = arith.addf %226, %231 : vector<7x128xf32>
    %233 = vector.extract_strided_slice %1 {offsets = [2, 1, 0], sizes = [1, 7, 96], strides = [1, 1, 1]} : vector<4x8x96xbf16> to vector<1x7x96xbf16>
    %234 = vector.shape_cast %233 : vector<1x7x96xbf16> to vector<7x96xbf16>
    %c8_148 = arith.constant 8 : index
    %c0_149 = arith.constant 0 : index
    %c0_150 = arith.constant 0 : index
    %235 = vector.load %arg2[%c8_148, %c0_149, %c0_150] : memref<10x96x128xbf16, #tpu.memory_space<vmem>>, vector<1x96x128xbf16>
    %236 = vector.shape_cast %235 : vector<1x96x128xbf16> to vector<96x128xbf16>
    %cst_151 = arith.constant dense<0.000000e+00> : vector<7x128xf32>
    %237 = tpu.matmul %234, %236, %cst_151 {dimension_numbers = #tpu.dot_dimension_numbers<[1], [0], [0], [1], [0, 0, 1, 1], [], []>} : vector<7x96xbf16>, vector<96x128xbf16>, vector<7x128xf32> -> vector<7x128xf32>
    %238 = arith.addf %232, %237 : vector<7x128xf32>
    %239 = vector.extract_strided_slice %1 {offsets = [3, 1, 0], sizes = [1, 7, 96], strides = [1, 1, 1]} : vector<4x8x96xbf16> to vector<1x7x96xbf16>
    %240 = vector.shape_cast %239 : vector<1x7x96xbf16> to vector<7x96xbf16>
    %c9_152 = arith.constant 9 : index
    %c0_153 = arith.constant 0 : index
    %c0_154 = arith.constant 0 : index
    %241 = vector.load %arg2[%c9_152, %c0_153, %c0_154] : memref<10x96x128xbf16, #tpu.memory_space<vmem>>, vector<1x96x128xbf16>
    %242 = vector.shape_cast %241 : vector<1x96x128xbf16> to vector<96x128xbf16>
    %cst_155 = arith.constant dense<0.000000e+00> : vector<7x128xf32>
    %243 = tpu.matmul %240, %242, %cst_155 {dimension_numbers = #tpu.dot_dimension_numbers<[1], [0], [0], [1], [0, 0, 1, 1], [], []>} : vector<7x96xbf16>, vector<96x128xbf16>, vector<7x128xf32> -> vector<7x128xf32>
    %244 = arith.addf %238, %243 : vector<7x128xf32>
    %245 = arith.maximumf %215, %244 : vector<7x128xf32>
    %c0_156 = arith.constant 0 : index
    %c0_157 = arith.constant 0 : index
    %246 = vector.load %arg3[%c0_156, %c0_157] : memref<1x128xf32, #tpu.memory_space<vmem>>, vector<1x128xf32>
    %247 = vector.broadcast %246 : vector<1x128xf32> to vector<7x128xf32>
    %248 = arith.addf %245, %247 : vector<7x128xf32>
    %cst_158 = arith.constant 0.000000e+00 : f32
    %249 = vector.broadcast %cst_158 : f32 to vector<7x128xf32>
    %250 = arith.maximumf %248, %249 : vector<7x128xf32>
    %251 = arith.truncf %250 : vector<7x128xf32> to vector<7x128xbf16>
    %252 = vector.extract_strided_slice %126 {offsets = [0, 0], sizes = [5, 128], strides = [1, 1]} : vector<7x128xbf16> to vector<5x128xbf16>
    %c0_159 = arith.constant 0 : index
    %c0_160 = arith.constant 0 : index
    %c0_161 = arith.constant 0 : index
    %253 = vector.load %arg4[%c0_159, %c0_160, %c0_161] : memref<10x128x128xbf16, #tpu.memory_space<vmem>>, vector<1x128x128xbf16>
    %254 = vector.shape_cast %253 : vector<1x128x128xbf16> to vector<128x128xbf16>
    %cst_162 = arith.constant dense<0.000000e+00> : vector<5x128xf32>
    %255 = tpu.matmul %252, %254, %cst_162 {dimension_numbers = #tpu.dot_dimension_numbers<[1], [0], [0], [1], [0, 0, 1, 1], [], []>} : vector<5x128xbf16>, vector<128x128xbf16>, vector<5x128xf32> -> vector<5x128xf32>
    %256 = vector.extract_strided_slice %251 {offsets = [0, 0], sizes = [5, 128], strides = [1, 1]} : vector<7x128xbf16> to vector<5x128xbf16>
    %c1_163 = arith.constant 1 : index
    %c0_164 = arith.constant 0 : index
    %c0_165 = arith.constant 0 : index
    %257 = vector.load %arg4[%c1_163, %c0_164, %c0_165] : memref<10x128x128xbf16, #tpu.memory_space<vmem>>, vector<1x128x128xbf16>
    %258 = vector.shape_cast %257 : vector<1x128x128xbf16> to vector<128x128xbf16>
    %cst_166 = arith.constant dense<0.000000e+00> : vector<5x128xf32>
    %259 = tpu.matmul %256, %258, %cst_166 {dimension_numbers = #tpu.dot_dimension_numbers<[1], [0], [0], [1], [0, 0, 1, 1], [], []>} : vector<5x128xbf16>, vector<128x128xbf16>, vector<5x128xf32> -> vector<5x128xf32>
    %260 = arith.addf %255, %259 : vector<5x128xf32>
    %261 = vector.extract_strided_slice %126 {offsets = [1, 0], sizes = [5, 128], strides = [1, 1]} : vector<7x128xbf16> to vector<5x128xbf16>
    %c2_167 = arith.constant 2 : index
    %c0_168 = arith.constant 0 : index
    %c0_169 = arith.constant 0 : index
    %262 = vector.load %arg4[%c2_167, %c0_168, %c0_169] : memref<10x128x128xbf16, #tpu.memory_space<vmem>>, vector<1x128x128xbf16>
    %263 = vector.shape_cast %262 : vector<1x128x128xbf16> to vector<128x128xbf16>
    %cst_170 = arith.constant dense<0.000000e+00> : vector<5x128xf32>
    %264 = tpu.matmul %261, %263, %cst_170 {dimension_numbers = #tpu.dot_dimension_numbers<[1], [0], [0], [1], [0, 0, 1, 1], [], []>} : vector<5x128xbf16>, vector<128x128xbf16>, vector<5x128xf32> -> vector<5x128xf32>
    %265 = arith.addf %260, %264 : vector<5x128xf32>
    %266 = vector.extract_strided_slice %251 {offsets = [1, 0], sizes = [5, 128], strides = [1, 1]} : vector<7x128xbf16> to vector<5x128xbf16>
    %c3_171 = arith.constant 3 : index
    %c0_172 = arith.constant 0 : index
    %c0_173 = arith.constant 0 : index
    %267 = vector.load %arg4[%c3_171, %c0_172, %c0_173] : memref<10x128x128xbf16, #tpu.memory_space<vmem>>, vector<1x128x128xbf16>
    %268 = vector.shape_cast %267 : vector<1x128x128xbf16> to vector<128x128xbf16>
    %cst_174 = arith.constant dense<0.000000e+00> : vector<5x128xf32>
    %269 = tpu.matmul %266, %268, %cst_174 {dimension_numbers = #tpu.dot_dimension_numbers<[1], [0], [0], [1], [0, 0, 1, 1], [], []>} : vector<5x128xbf16>, vector<128x128xbf16>, vector<5x128xf32> -> vector<5x128xf32>
    %270 = arith.addf %265, %269 : vector<5x128xf32>
    %271 = vector.extract_strided_slice %126 {offsets = [2, 0], sizes = [5, 128], strides = [1, 1]} : vector<7x128xbf16> to vector<5x128xbf16>
    %c4_175 = arith.constant 4 : index
    %c0_176 = arith.constant 0 : index
    %c0_177 = arith.constant 0 : index
    %272 = vector.load %arg4[%c4_175, %c0_176, %c0_177] : memref<10x128x128xbf16, #tpu.memory_space<vmem>>, vector<1x128x128xbf16>
    %273 = vector.shape_cast %272 : vector<1x128x128xbf16> to vector<128x128xbf16>
    %cst_178 = arith.constant dense<0.000000e+00> : vector<5x128xf32>
    %274 = tpu.matmul %271, %273, %cst_178 {dimension_numbers = #tpu.dot_dimension_numbers<[1], [0], [0], [1], [0, 0, 1, 1], [], []>} : vector<5x128xbf16>, vector<128x128xbf16>, vector<5x128xf32> -> vector<5x128xf32>
    %275 = arith.addf %270, %274 : vector<5x128xf32>
    %276 = vector.extract_strided_slice %126 {offsets = [0, 0], sizes = [5, 128], strides = [1, 1]} : vector<7x128xbf16> to vector<5x128xbf16>
    %c5_179 = arith.constant 5 : index
    %c0_180 = arith.constant 0 : index
    %c0_181 = arith.constant 0 : index
    %277 = vector.load %arg4[%c5_179, %c0_180, %c0_181] : memref<10x128x128xbf16, #tpu.memory_space<vmem>>, vector<1x128x128xbf16>
    %278 = vector.shape_cast %277 : vector<1x128x128xbf16> to vector<128x128xbf16>
    %cst_182 = arith.constant dense<0.000000e+00> : vector<5x128xf32>
    %279 = tpu.matmul %276, %278, %cst_182 {dimension_numbers = #tpu.dot_dimension_numbers<[1], [0], [0], [1], [0, 0, 1, 1], [], []>} : vector<5x128xbf16>, vector<128x128xbf16>, vector<5x128xf32> -> vector<5x128xf32>
    %280 = vector.extract_strided_slice %251 {offsets = [0, 0], sizes = [5, 128], strides = [1, 1]} : vector<7x128xbf16> to vector<5x128xbf16>
    %c6_183 = arith.constant 6 : index
    %c0_184 = arith.constant 0 : index
    %c0_185 = arith.constant 0 : index
    %281 = vector.load %arg4[%c6_183, %c0_184, %c0_185] : memref<10x128x128xbf16, #tpu.memory_space<vmem>>, vector<1x128x128xbf16>
    %282 = vector.shape_cast %281 : vector<1x128x128xbf16> to vector<128x128xbf16>
    %cst_186 = arith.constant dense<0.000000e+00> : vector<5x128xf32>
    %283 = tpu.matmul %280, %282, %cst_186 {dimension_numbers = #tpu.dot_dimension_numbers<[1], [0], [0], [1], [0, 0, 1, 1], [], []>} : vector<5x128xbf16>, vector<128x128xbf16>, vector<5x128xf32> -> vector<5x128xf32>
    %284 = arith.addf %279, %283 : vector<5x128xf32>
    %285 = vector.extract_strided_slice %126 {offsets = [1, 0], sizes = [5, 128], strides = [1, 1]} : vector<7x128xbf16> to vector<5x128xbf16>
    %c7_187 = arith.constant 7 : index
    %c0_188 = arith.constant 0 : index
    %c0_189 = arith.constant 0 : index
    %286 = vector.load %arg4[%c7_187, %c0_188, %c0_189] : memref<10x128x128xbf16, #tpu.memory_space<vmem>>, vector<1x128x128xbf16>
    %287 = vector.shape_cast %286 : vector<1x128x128xbf16> to vector<128x128xbf16>
    %cst_190 = arith.constant dense<0.000000e+00> : vector<5x128xf32>
    %288 = tpu.matmul %285, %287, %cst_190 {dimension_numbers = #tpu.dot_dimension_numbers<[1], [0], [0], [1], [0, 0, 1, 1], [], []>} : vector<5x128xbf16>, vector<128x128xbf16>, vector<5x128xf32> -> vector<5x128xf32>
    %289 = arith.addf %284, %288 : vector<5x128xf32>
    %290 = vector.extract_strided_slice %251 {offsets = [1, 0], sizes = [5, 128], strides = [1, 1]} : vector<7x128xbf16> to vector<5x128xbf16>
    %c8_191 = arith.constant 8 : index
    %c0_192 = arith.constant 0 : index
    %c0_193 = arith.constant 0 : index
    %291 = vector.load %arg4[%c8_191, %c0_192, %c0_193] : memref<10x128x128xbf16, #tpu.memory_space<vmem>>, vector<1x128x128xbf16>
    %292 = vector.shape_cast %291 : vector<1x128x128xbf16> to vector<128x128xbf16>
    %cst_194 = arith.constant dense<0.000000e+00> : vector<5x128xf32>
    %293 = tpu.matmul %290, %292, %cst_194 {dimension_numbers = #tpu.dot_dimension_numbers<[1], [0], [0], [1], [0, 0, 1, 1], [], []>} : vector<5x128xbf16>, vector<128x128xbf16>, vector<5x128xf32> -> vector<5x128xf32>
    %294 = arith.addf %289, %293 : vector<5x128xf32>
    %295 = vector.extract_strided_slice %126 {offsets = [2, 0], sizes = [5, 128], strides = [1, 1]} : vector<7x128xbf16> to vector<5x128xbf16>
    %c9_195 = arith.constant 9 : index
    %c0_196 = arith.constant 0 : index
    %c0_197 = arith.constant 0 : index
    %296 = vector.load %arg4[%c9_195, %c0_196, %c0_197] : memref<10x128x128xbf16, #tpu.memory_space<vmem>>, vector<1x128x128xbf16>
    %297 = vector.shape_cast %296 : vector<1x128x128xbf16> to vector<128x128xbf16>
    %cst_198 = arith.constant dense<0.000000e+00> : vector<5x128xf32>
    %298 = tpu.matmul %295, %297, %cst_198 {dimension_numbers = #tpu.dot_dimension_numbers<[1], [0], [0], [1], [0, 0, 1, 1], [], []>} : vector<5x128xbf16>, vector<128x128xbf16>, vector<5x128xf32> -> vector<5x128xf32>
    %299 = arith.addf %294, %298 : vector<5x128xf32>
    %300 = arith.maximumf %275, %299 : vector<5x128xf32>
    %301 = vector.extract_strided_slice %251 {offsets = [0, 0], sizes = [5, 128], strides = [1, 1]} : vector<7x128xbf16> to vector<5x128xbf16>
    %c0_199 = arith.constant 0 : index
    %c0_200 = arith.constant 0 : index
    %c0_201 = arith.constant 0 : index
    %302 = vector.load %arg4[%c0_199, %c0_200, %c0_201] : memref<10x128x128xbf16, #tpu.memory_space<vmem>>, vector<1x128x128xbf16>
    %303 = vector.shape_cast %302 : vector<1x128x128xbf16> to vector<128x128xbf16>
    %cst_202 = arith.constant dense<0.000000e+00> : vector<5x128xf32>
    %304 = tpu.matmul %301, %303, %cst_202 {dimension_numbers = #tpu.dot_dimension_numbers<[1], [0], [0], [1], [0, 0, 1, 1], [], []>} : vector<5x128xbf16>, vector<128x128xbf16>, vector<5x128xf32> -> vector<5x128xf32>
    %305 = vector.extract_strided_slice %126 {offsets = [1, 0], sizes = [5, 128], strides = [1, 1]} : vector<7x128xbf16> to vector<5x128xbf16>
    %c1_203 = arith.constant 1 : index
    %c0_204 = arith.constant 0 : index
    %c0_205 = arith.constant 0 : index
    %306 = vector.load %arg4[%c1_203, %c0_204, %c0_205] : memref<10x128x128xbf16, #tpu.memory_space<vmem>>, vector<1x128x128xbf16>
    %307 = vector.shape_cast %306 : vector<1x128x128xbf16> to vector<128x128xbf16>
    %cst_206 = arith.constant dense<0.000000e+00> : vector<5x128xf32>
    %308 = tpu.matmul %305, %307, %cst_206 {dimension_numbers = #tpu.dot_dimension_numbers<[1], [0], [0], [1], [0, 0, 1, 1], [], []>} : vector<5x128xbf16>, vector<128x128xbf16>, vector<5x128xf32> -> vector<5x128xf32>
    %309 = arith.addf %304, %308 : vector<5x128xf32>
    %310 = vector.extract_strided_slice %251 {offsets = [1, 0], sizes = [5, 128], strides = [1, 1]} : vector<7x128xbf16> to vector<5x128xbf16>
    %c2_207 = arith.constant 2 : index
    %c0_208 = arith.constant 0 : index
    %c0_209 = arith.constant 0 : index
    %311 = vector.load %arg4[%c2_207, %c0_208, %c0_209] : memref<10x128x128xbf16, #tpu.memory_space<vmem>>, vector<1x128x128xbf16>
    %312 = vector.shape_cast %311 : vector<1x128x128xbf16> to vector<128x128xbf16>
    %cst_210 = arith.constant dense<0.000000e+00> : vector<5x128xf32>
    %313 = tpu.matmul %310, %312, %cst_210 {dimension_numbers = #tpu.dot_dimension_numbers<[1], [0], [0], [1], [0, 0, 1, 1], [], []>} : vector<5x128xbf16>, vector<128x128xbf16>, vector<5x128xf32> -> vector<5x128xf32>
    %314 = arith.addf %309, %313 : vector<5x128xf32>
    %315 = vector.extract_strided_slice %126 {offsets = [2, 0], sizes = [5, 128], strides = [1, 1]} : vector<7x128xbf16> to vector<5x128xbf16>
    %c3_211 = arith.constant 3 : index
    %c0_212 = arith.constant 0 : index
    %c0_213 = arith.constant 0 : index
    %316 = vector.load %arg4[%c3_211, %c0_212, %c0_213] : memref<10x128x128xbf16, #tpu.memory_space<vmem>>, vector<1x128x128xbf16>
    %317 = vector.shape_cast %316 : vector<1x128x128xbf16> to vector<128x128xbf16>
    %cst_214 = arith.constant dense<0.000000e+00> : vector<5x128xf32>
    %318 = tpu.matmul %315, %317, %cst_214 {dimension_numbers = #tpu.dot_dimension_numbers<[1], [0], [0], [1], [0, 0, 1, 1], [], []>} : vector<5x128xbf16>, vector<128x128xbf16>, vector<5x128xf32> -> vector<5x128xf32>
    %319 = arith.addf %314, %318 : vector<5x128xf32>
    %320 = vector.extract_strided_slice %251 {offsets = [2, 0], sizes = [5, 128], strides = [1, 1]} : vector<7x128xbf16> to vector<5x128xbf16>
    %c4_215 = arith.constant 4 : index
    %c0_216 = arith.constant 0 : index
    %c0_217 = arith.constant 0 : index
    %321 = vector.load %arg4[%c4_215, %c0_216, %c0_217] : memref<10x128x128xbf16, #tpu.memory_space<vmem>>, vector<1x128x128xbf16>
    %322 = vector.shape_cast %321 : vector<1x128x128xbf16> to vector<128x128xbf16>
    %cst_218 = arith.constant dense<0.000000e+00> : vector<5x128xf32>
    %323 = tpu.matmul %320, %322, %cst_218 {dimension_numbers = #tpu.dot_dimension_numbers<[1], [0], [0], [1], [0, 0, 1, 1], [], []>} : vector<5x128xbf16>, vector<128x128xbf16>, vector<5x128xf32> -> vector<5x128xf32>
    %324 = arith.addf %319, %323 : vector<5x128xf32>
    %325 = arith.maximumf %300, %324 : vector<5x128xf32>
    %326 = vector.extract_strided_slice %251 {offsets = [0, 0], sizes = [5, 128], strides = [1, 1]} : vector<7x128xbf16> to vector<5x128xbf16>
    %c5_219 = arith.constant 5 : index
    %c0_220 = arith.constant 0 : index
    %c0_221 = arith.constant 0 : index
    %327 = vector.load %arg4[%c5_219, %c0_220, %c0_221] : memref<10x128x128xbf16, #tpu.memory_space<vmem>>, vector<1x128x128xbf16>
    %328 = vector.shape_cast %327 : vector<1x128x128xbf16> to vector<128x128xbf16>
    %cst_222 = arith.constant dense<0.000000e+00> : vector<5x128xf32>
    %329 = tpu.matmul %326, %328, %cst_222 {dimension_numbers = #tpu.dot_dimension_numbers<[1], [0], [0], [1], [0, 0, 1, 1], [], []>} : vector<5x128xbf16>, vector<128x128xbf16>, vector<5x128xf32> -> vector<5x128xf32>
    %330 = vector.extract_strided_slice %126 {offsets = [1, 0], sizes = [5, 128], strides = [1, 1]} : vector<7x128xbf16> to vector<5x128xbf16>
    %c6_223 = arith.constant 6 : index
    %c0_224 = arith.constant 0 : index
    %c0_225 = arith.constant 0 : index
    %331 = vector.load %arg4[%c6_223, %c0_224, %c0_225] : memref<10x128x128xbf16, #tpu.memory_space<vmem>>, vector<1x128x128xbf16>
    %332 = vector.shape_cast %331 : vector<1x128x128xbf16> to vector<128x128xbf16>
    %cst_226 = arith.constant dense<0.000000e+00> : vector<5x128xf32>
    %333 = tpu.matmul %330, %332, %cst_226 {dimension_numbers = #tpu.dot_dimension_numbers<[1], [0], [0], [1], [0, 0, 1, 1], [], []>} : vector<5x128xbf16>, vector<128x128xbf16>, vector<5x128xf32> -> vector<5x128xf32>
    %334 = arith.addf %329, %333 : vector<5x128xf32>
    %335 = vector.extract_strided_slice %251 {offsets = [1, 0], sizes = [5, 128], strides = [1, 1]} : vector<7x128xbf16> to vector<5x128xbf16>
    %c7_227 = arith.constant 7 : index
    %c0_228 = arith.constant 0 : index
    %c0_229 = arith.constant 0 : index
    %336 = vector.load %arg4[%c7_227, %c0_228, %c0_229] : memref<10x128x128xbf16, #tpu.memory_space<vmem>>, vector<1x128x128xbf16>
    %337 = vector.shape_cast %336 : vector<1x128x128xbf16> to vector<128x128xbf16>
    %cst_230 = arith.constant dense<0.000000e+00> : vector<5x128xf32>
    %338 = tpu.matmul %335, %337, %cst_230 {dimension_numbers = #tpu.dot_dimension_numbers<[1], [0], [0], [1], [0, 0, 1, 1], [], []>} : vector<5x128xbf16>, vector<128x128xbf16>, vector<5x128xf32> -> vector<5x128xf32>
    %339 = arith.addf %334, %338 : vector<5x128xf32>
    %340 = vector.extract_strided_slice %126 {offsets = [2, 0], sizes = [5, 128], strides = [1, 1]} : vector<7x128xbf16> to vector<5x128xbf16>
    %c8_231 = arith.constant 8 : index
    %c0_232 = arith.constant 0 : index
    %c0_233 = arith.constant 0 : index
    %341 = vector.load %arg4[%c8_231, %c0_232, %c0_233] : memref<10x128x128xbf16, #tpu.memory_space<vmem>>, vector<1x128x128xbf16>
    %342 = vector.shape_cast %341 : vector<1x128x128xbf16> to vector<128x128xbf16>
    %cst_234 = arith.constant dense<0.000000e+00> : vector<5x128xf32>
    %343 = tpu.matmul %340, %342, %cst_234 {dimension_numbers = #tpu.dot_dimension_numbers<[1], [0], [0], [1], [0, 0, 1, 1], [], []>} : vector<5x128xbf16>, vector<128x128xbf16>, vector<5x128xf32> -> vector<5x128xf32>
    %344 = arith.addf %339, %343 : vector<5x128xf32>
    %345 = vector.extract_strided_slice %251 {offsets = [2, 0], sizes = [5, 128], strides = [1, 1]} : vector<7x128xbf16> to vector<5x128xbf16>
    %c9_235 = arith.constant 9 : index
    %c0_236 = arith.constant 0 : index
    %c0_237 = arith.constant 0 : index
    %346 = vector.load %arg4[%c9_235, %c0_236, %c0_237] : memref<10x128x128xbf16, #tpu.memory_space<vmem>>, vector<1x128x128xbf16>
    %347 = vector.shape_cast %346 : vector<1x128x128xbf16> to vector<128x128xbf16>
    %cst_238 = arith.constant dense<0.000000e+00> : vector<5x128xf32>
    %348 = tpu.matmul %345, %347, %cst_238 {dimension_numbers = #tpu.dot_dimension_numbers<[1], [0], [0], [1], [0, 0, 1, 1], [], []>} : vector<5x128xbf16>, vector<128x128xbf16>, vector<5x128xf32> -> vector<5x128xf32>
    %349 = arith.addf %344, %348 : vector<5x128xf32>
    %350 = arith.maximumf %325, %349 : vector<5x128xf32>
    %c0_239 = arith.constant 0 : index
    %c0_240 = arith.constant 0 : index
    %351 = vector.load %arg5[%c0_239, %c0_240] : memref<1x128xf32, #tpu.memory_space<vmem>>, vector<1x128xf32>
    %352 = vector.broadcast %351 : vector<1x128xf32> to vector<5x128xf32>
    %353 = arith.addf %350, %352 : vector<5x128xf32>
    %cst_241 = arith.constant 0.000000e+00 : f32
    %354 = vector.broadcast %cst_241 : f32 to vector<5x128xf32>
    %355 = arith.maximumf %353, %354 : vector<5x128xf32>
    %356 = arith.truncf %355 : vector<5x128xf32> to vector<5x128xbf16>
    %357 = vector.extract_strided_slice %356 {offsets = [0, 0], sizes = [1, 128], strides = [1, 1]} : vector<5x128xbf16> to vector<1x128xbf16>
    %c0_242 = arith.constant 0 : index
    %c0_243 = arith.constant 0 : index
    %c0_244 = arith.constant 0 : index
    %358 = vector.load %arg6[%c0_242, %c0_243, %c0_244] : memref<5x128x128xbf16, #tpu.memory_space<vmem>>, vector<1x128x128xbf16>
    %359 = vector.shape_cast %358 : vector<1x128x128xbf16> to vector<128x128xbf16>
    %cst_245 = arith.constant dense<0.000000e+00> : vector<1x128xf32>
    %360 = tpu.matmul %357, %359, %cst_245 {dimension_numbers = #tpu.dot_dimension_numbers<[1], [0], [0], [1], [0, 0, 1, 1], [], []>} : vector<1x128xbf16>, vector<128x128xbf16>, vector<1x128xf32> -> vector<1x128xf32>
    %361 = vector.extract_strided_slice %356 {offsets = [1, 0], sizes = [1, 128], strides = [1, 1]} : vector<5x128xbf16> to vector<1x128xbf16>
    %c1_246 = arith.constant 1 : index
    %c0_247 = arith.constant 0 : index
    %c0_248 = arith.constant 0 : index
    %362 = vector.load %arg6[%c1_246, %c0_247, %c0_248] : memref<5x128x128xbf16, #tpu.memory_space<vmem>>, vector<1x128x128xbf16>
    %363 = vector.shape_cast %362 : vector<1x128x128xbf16> to vector<128x128xbf16>
    %cst_249 = arith.constant dense<0.000000e+00> : vector<1x128xf32>
    %364 = tpu.matmul %361, %363, %cst_249 {dimension_numbers = #tpu.dot_dimension_numbers<[1], [0], [0], [1], [0, 0, 1, 1], [], []>} : vector<1x128xbf16>, vector<128x128xbf16>, vector<1x128xf32> -> vector<1x128xf32>
    %365 = arith.addf %360, %364 : vector<1x128xf32>
    %366 = vector.extract_strided_slice %356 {offsets = [2, 0], sizes = [1, 128], strides = [1, 1]} : vector<5x128xbf16> to vector<1x128xbf16>
    %c2_250 = arith.constant 2 : index
    %c0_251 = arith.constant 0 : index
    %c0_252 = arith.constant 0 : index
    %367 = vector.load %arg6[%c2_250, %c0_251, %c0_252] : memref<5x128x128xbf16, #tpu.memory_space<vmem>>, vector<1x128x128xbf16>
    %368 = vector.shape_cast %367 : vector<1x128x128xbf16> to vector<128x128xbf16>
    %cst_253 = arith.constant dense<0.000000e+00> : vector<1x128xf32>
    %369 = tpu.matmul %366, %368, %cst_253 {dimension_numbers = #tpu.dot_dimension_numbers<[1], [0], [0], [1], [0, 0, 1, 1], [], []>} : vector<1x128xbf16>, vector<128x128xbf16>, vector<1x128xf32> -> vector<1x128xf32>
    %370 = arith.addf %365, %369 : vector<1x128xf32>
    %371 = vector.extract_strided_slice %356 {offsets = [3, 0], sizes = [1, 128], strides = [1, 1]} : vector<5x128xbf16> to vector<1x128xbf16>
    %c3_254 = arith.constant 3 : index
    %c0_255 = arith.constant 0 : index
    %c0_256 = arith.constant 0 : index
    %372 = vector.load %arg6[%c3_254, %c0_255, %c0_256] : memref<5x128x128xbf16, #tpu.memory_space<vmem>>, vector<1x128x128xbf16>
    %373 = vector.shape_cast %372 : vector<1x128x128xbf16> to vector<128x128xbf16>
    %cst_257 = arith.constant dense<0.000000e+00> : vector<1x128xf32>
    %374 = tpu.matmul %371, %373, %cst_257 {dimension_numbers = #tpu.dot_dimension_numbers<[1], [0], [0], [1], [0, 0, 1, 1], [], []>} : vector<1x128xbf16>, vector<128x128xbf16>, vector<1x128xf32> -> vector<1x128xf32>
    %375 = arith.addf %370, %374 : vector<1x128xf32>
    %376 = vector.extract_strided_slice %356 {offsets = [4, 0], sizes = [1, 128], strides = [1, 1]} : vector<5x128xbf16> to vector<1x128xbf16>
    %c4_258 = arith.constant 4 : index
    %c0_259 = arith.constant 0 : index
    %c0_260 = arith.constant 0 : index
    %377 = vector.load %arg6[%c4_258, %c0_259, %c0_260] : memref<5x128x128xbf16, #tpu.memory_space<vmem>>, vector<1x128x128xbf16>
    %378 = vector.shape_cast %377 : vector<1x128x128xbf16> to vector<128x128xbf16>
    %cst_261 = arith.constant dense<0.000000e+00> : vector<1x128xf32>
    %379 = tpu.matmul %376, %378, %cst_261 {dimension_numbers = #tpu.dot_dimension_numbers<[1], [0], [0], [1], [0, 0, 1, 1], [], []>} : vector<1x128xbf16>, vector<128x128xbf16>, vector<1x128xf32> -> vector<1x128xf32>
    %380 = arith.addf %375, %379 : vector<1x128xf32>
    %c0_262 = arith.constant 0 : index
    %c0_263 = arith.constant 0 : index
    %381 = vector.load %arg7[%c0_262, %c0_263] : memref<1x128xf32, #tpu.memory_space<vmem>>, vector<1x128xf32>
    %382 = arith.addf %380, %381 : vector<1x128xf32>
    %cst_264 = arith.constant 0.000000e+00 : f32
    %383 = vector.broadcast %cst_264 : f32 to vector<1x128xf32>
    %384 = arith.maximumf %382, %383 : vector<1x128xf32>
    %385 = arith.truncf %384 : vector<1x128xf32> to vector<1x128xbf16>
    %c0_265 = arith.constant 0 : index
    %c0_266 = arith.constant 0 : index
    %386 = vector.load %arg8[%c0_265, %c0_266] : memref<128x128xbf16, #tpu.memory_space<vmem>>, vector<128x128xbf16>
    %cst_267 = arith.constant dense<0.000000e+00> : vector<1x128xf32>
    %387 = tpu.matmul %385, %386, %cst_267 {dimension_numbers = #tpu.dot_dimension_numbers<[1], [0], [0], [1], [0, 0, 1, 1], [], []>} : vector<1x128xbf16>, vector<128x128xbf16>, vector<1x128xf32> -> vector<1x128xf32>
    %c0_268 = arith.constant 0 : index
    %c0_269 = arith.constant 0 : index
    %388 = vector.load %arg9[%c0_268, %c0_269] : memref<1x128xf32, #tpu.memory_space<vmem>>, vector<1x128xf32>
    %389 = arith.addf %387, %388 : vector<1x128xf32>
    %cst_270 = arith.constant 0.000000e+00 : f32
    %390 = vector.broadcast %cst_270 : f32 to vector<1x128xf32>
    %391 = arith.maximumf %389, %390 : vector<1x128xf32>
    %392 = arith.truncf %391 : vector<1x128xf32> to vector<1x128xbf16>
    %c0_271 = arith.constant 0 : index
    %c0_272 = arith.constant 0 : index
    %393 = vector.load %arg10[%c0_271, %c0_272] : memref<128x128xbf16, #tpu.memory_space<vmem>>, vector<128x128xbf16>
    %cst_273 = arith.constant dense<0.000000e+00> : vector<1x128xf32>
    %394 = tpu.matmul %392, %393, %cst_273 {dimension_numbers = #tpu.dot_dimension_numbers<[1], [0], [0], [1], [0, 0, 1, 1], [], []>} : vector<1x128xbf16>, vector<128x128xbf16>, vector<1x128xf32> -> vector<1x128xf32>
    %c0_274 = arith.constant 0 : index
    %c0_275 = arith.constant 0 : index
    %395 = vector.load %arg11[%c0_274, %c0_275] : memref<1x128xf32, #tpu.memory_space<vmem>>, vector<1x128xf32>
    %396 = arith.addf %394, %395 : vector<1x128xf32>
    %397 = vector.shape_cast %396 : vector<1x128xf32> to vector<1x1x128xf32>
    %398 = vector.broadcast %397 : vector<1x1x128xf32> to vector<1x8x128xf32>
    %c0_276 = arith.constant 0 : index
    %c0_277 = arith.constant 0 : index
    %c0_278 = arith.constant 0 : index
    %399 = vector.load %arg12[%c0_276, %c0_277, %c0_278] : memref<1x8x128xf32, #tpu.memory_space<vmem>>, vector<1x8x128xf32>
    tpu.vector_store %arg12[%c0_276, %c0_277, %c0_278], %398 {strides = array<i32>} : memref<1x8x128xf32, #tpu.memory_space<vmem>>, vector<1x8x128xf32>,
    return
  }
  func.func @transform_0(%arg0: i32) -> (i32, i32, i32, i32) {
    %c0_i32 = arith.constant 0 : i32
    %c0_i32_0 = arith.constant 0 : i32
    %c0_i32_1 = arith.constant 0 : i32
    %c0_i32_2 = arith.constant 0 : i32
    return %arg0, %c0_i32, %c0_i32_0, %c0_i32_1 : i32, i32, i32, i32
  }
  func.func @transform_1(%arg0: i32) -> (i32, i32, i32) {
    %c0_i32 = arith.constant 0 : i32
    %c0_i32_0 = arith.constant 0 : i32
    %c0_i32_1 = arith.constant 0 : i32
    %c0_i32_2 = arith.constant 0 : i32
    return %c0_i32, %c0_i32_0, %c0_i32_1 : i32, i32, i32
  }
  func.func @transform_2(%arg0: i32) -> (i32, i32) {
    %c0_i32 = arith.constant 0 : i32
    %c0_i32_0 = arith.constant 0 : i32
    %c0_i32_1 = arith.constant 0 : i32
    return %c0_i32, %c0_i32_0 : i32, i32
  }
  func.func @transform_3(%arg0: i32) -> (i32, i32, i32) {
    %c0_i32 = arith.constant 0 : i32
    %c0_i32_0 = arith.constant 0 : i32
    %c0_i32_1 = arith.constant 0 : i32
    %c0_i32_2 = arith.constant 0 : i32
    return %c0_i32, %c0_i32_0, %c0_i32_1 : i32, i32, i32
  }
  func.func @transform_4(%arg0: i32) -> (i32, i32) {
    %c0_i32 = arith.constant 0 : i32
    %c0_i32_0 = arith.constant 0 : i32
    %c0_i32_1 = arith.constant 0 : i32
    return %c0_i32, %c0_i32_0 : i32, i32
  }
  func.func @transform_5(%arg0: i32) -> (i32, i32, i32) {
    %c0_i32 = arith.constant 0 : i32
    %c0_i32_0 = arith.constant 0 : i32
    %c0_i32_1 = arith.constant 0 : i32
    %c0_i32_2 = arith.constant 0 : i32
    return %c0_i32, %c0_i32_0, %c0_i32_1 : i32, i32, i32
  }
  func.func @transform_6(%arg0: i32) -> (i32, i32) {
    %c0_i32 = arith.constant 0 : i32
    %c0_i32_0 = arith.constant 0 : i32
    %c0_i32_1 = arith.constant 0 : i32
    return %c0_i32, %c0_i32_0 : i32, i32
  }
  func.func @transform_7(%arg0: i32) -> (i32, i32) {
    %c0_i32 = arith.constant 0 : i32
    %c0_i32_0 = arith.constant 0 : i32
    %c0_i32_1 = arith.constant 0 : i32
    return %c0_i32, %c0_i32_0 : i32, i32
  }
  func.func @transform_8(%arg0: i32) -> (i32, i32) {
    %c0_i32 = arith.constant 0 : i32
    %c0_i32_0 = arith.constant 0 : i32
    %c0_i32_1 = arith.constant 0 : i32
    return %c0_i32, %c0_i32_0 : i32, i32
  }
  func.func @transform_9(%arg0: i32) -> (i32, i32) {
    %c0_i32 = arith.constant 0 : i32
    %c0_i32_0 = arith.constant 0 : i32
    %c0_i32_1 = arith.constant 0 : i32
    return %c0_i32, %c0_i32_0 : i32, i32
  }
  func.func @transform_10(%arg0: i32) -> (i32, i32) {
    %c0_i32 = arith.constant 0 : i32
    %c0_i32_0 = arith.constant 0 : i32
    %c0_i32_1 = arith.constant 0 : i32
    return %c0_i32, %c0_i32_0 : i32, i32
  }
  func.func @transform_11(%arg0: i32) -> (i32, i32, i32) {
    %c0_i32 = arith.constant 0 : i32
    %c0_i32_0 = arith.constant 0 : i32
    %c0_i32_1 = arith.constant 0 : i32
    return %arg0, %c0_i32, %c0_i32_0 : i32, i32, i32
  }
}

</mosaic_0001>

<llo_original>
// kernel: basicnet_forward.1
$region0: #{basicnet_forward.1}
  #allocation0 [shape = 'u32[]', space=smem, size = 0x4, offset = 0x4, fixed_abs, tag = 'smem constant byte address 0x4 - core index']
  #allocation1 [shape = 'u32[144,128]{1,0:T(1,128)}', space=vmem, size = 0x12000, scoped, tag = 'internal scratch']
  %s0 = inlined_call_operand.vmem [shape: bf16[2,4,8,96], index: 0, kind: input, shape index: {}]
  %s1 = inlined_call_operand.vmem [shape: bf16[10,96,128], index: 1, kind: input, shape index: {}]
  %s2 = inlined_call_operand.vmem [shape: f32[1,128], index: 2, kind: input, shape index: {}]
  %s3 = inlined_call_operand.vmem [shape: bf16[10,128,128], index: 3, kind: input, shape index: {}]
  %s4 = inlined_call_operand.vmem [shape: f32[1,128], index: 4, kind: input, shape index: {}]
  %s5 = inlined_call_operand.vmem [shape: bf16[5,128,128], index: 5, kind: input, shape index: {}]
  %s6 = inlined_call_operand.vmem [shape: f32[1,128], index: 6, kind: input, shape index: {}]
  %s7 = inlined_call_operand.vmem [shape: bf16[128,128], index: 7, kind: input, shape index: {}]
  %s8 = inlined_call_operand.vmem [shape: f32[1,128], index: 8, kind: input, shape index: {}]
  %s9 = inlined_call_operand.vmem [shape: bf16[128,128], index: 9, kind: input, shape index: {}]
  %s10 = inlined_call_operand.vmem [shape: f32[1,128], index: 10, kind: input, shape index: {}]
  %s11 = inlined_call_operand.vmem [shape: f32[2,8,128], index: 11, kind: output, shape index: {}]
  %s12 = sld [smem:[#allocation0]]
  $region77: #{basicnet_forward.1} parent=0
    _
  %s14 = ssub.s32 1, %s12
  %s15 = scalar_select 0, %s14, %s12
  loop: start=0, step=1, limit=4
  $region2: #{basicnet_forward.1} parent=0 // loop_pre_header
    _
  $region3: #{basicnet_forward.1} parent=0 // loop_header
    %s17 = sphi 0, %s21
    %p18 = scmp.ge.s32.totalorder %s17, 4
    %s27 = sphi 0, %s29
    %s30 = sphi 0, %s27
    %s31 = sphi 0, %s30
    %s47 = sphi 0, %s31
    %s51 = sphi 0, %s51
    %s53 = sphi 0, %s51
    %s54 = sphi 0, %s53
    %s68 = sphi 0, %s54
    %s72 = sphi 0, %s72
    %s74 = sphi 0, %s72
    %s75 = sphi 0, %s74
    %s89 = sphi 0, %s75
    %s93 = sphi 0, %s93
    %s95 = sphi 0, %s93
    %s96 = sphi 0, %s95
    %s110 = sphi 0, %s96
    %s114 = sphi 0, %s114
    %s116 = sphi 0, %s114
    %s117 = sphi 0, %s116
    %s131 = sphi 0, %s117
    %s135 = sphi 0, %s135
    %s137 = sphi 0, %s135
    %s138 = sphi 0, %s137
    %s152 = sphi 0, %s138
    %s156 = sphi 0, %s156
    %s158 = sphi 0, %s156
    %s159 = sphi 0, %s158
    %s173 = sphi 0, %s159
    %s177 = sphi 0, %s177
    %s179 = sphi 0, %s177
    %s180 = sphi 0, %s179
    %s194 = sphi 0, %s180
    %s198 = sphi 0, %s198
    %s200 = sphi 0, %s198
    %s201 = sphi 0, %s200
    %s215 = sphi 0, %s201
    %s219 = sphi 0, %s219
    %s221 = sphi 0, %s219
    %s222 = sphi 0, %s221
    %s236 = sphi 0, %s222
    %s240 = sphi 0, %s240
    %s242 = sphi 0, %s240
    %s243 = sphi 0, %s242
    %s257 = sphi 0, %s243
    %s263 = sphi 0, %s265
    %s266 = sphi 0, %s263
    %s267 = sphi 0, %s266
    %s283 = sphi 0, %s267
  $region4: #{basicnet_forward.1} parent=0 // loop_header_branch
    %20 = sbr.rel (%p18) target = $region8
  $region5: #{basicnet_forward.1} parent=0 // loop_body
    %s22 = ssub.s32 %s17, 1
    %s23 = ssub.s32 %s17, 2
    %s24 = sadd.s32 %s17, 1
    %s25 = ssub.s32 %s17, %s24
    %p26 = scmp.eq.s32.totalorder %s25, 0
    %s28 = sadd.s32 %s27, 1
    %s29 = scalar_select %p26, %s27, %s28
    %p32 = pneg %p26
    %p33 = scmp.eq.s32.totalorder %s17, 1
    %p34 = por %p32, %p33
    %p35 = scmp.ne.s32.totalorder %s27, %s30
    %p36 = scmp.eq.s32.totalorder %s17, 0
    %p37 = por %p35, %p36
    %p38 = scmp.ne.s32.totalorder %s27, %s30
    %p39 = scmp.eq.s32.totalorder %s22, 1
    %p40 = por %p38, %p39
    %p41 = scmp.ne.s32.totalorder %s30, %s31
    %p42 = scmp.eq.s32.totalorder %s22, 0
    %p43 = por %p41, %p42
    %p44 = scmp.ne.s32.totalorder %s30, %s31
    %p45 = scmp.eq.s32.totalorder %s23, 1
    %p46 = por %p44, %p45
    %p48 = scmp.ne.s32.totalorder %s31, %s47
    %p49 = scmp.eq.s32.totalorder %s23, 0
    %p50 = por %p48, %p49
    %s52 = sadd.s32 %s51, 1
    %p55 = scmp.eq.s32.totalorder %s17, 1
    %p56 = scmp.ne.s32.totalorder %s51, %s53
    %p57 = scmp.eq.s32.totalorder %s17, 0
    %p58 = por %p56, %p57
    %p59 = scmp.ne.s32.totalorder %s51, %s53
    %p60 = scmp.eq.s32.totalorder %s22, 1
    %p61 = por %p59, %p60
    %p62 = scmp.ne.s32.totalorder %s53, %s54
    %p63 = scmp.eq.s32.totalorder %s22, 0
    %p64 = por %p62, %p63
    %p65 = scmp.ne.s32.totalorder %s53, %s54
    %p66 = scmp.eq.s32.totalorder %s23, 1
    %p67 = por %p65, %p66
    %p69 = scmp.ne.s32.totalorder %s54, %s68
    %p70 = scmp.eq.s32.totalorder %s23, 0
    %p71 = por %p69, %p70
    %s73 = sadd.s32 %s72, 1
    %p76 = scmp.eq.s32.totalorder %s17, 1
    %p77 = scmp.ne.s32.totalorder %s72, %s74
    %p78 = scmp.eq.s32.totalorder %s17, 0
    %p79 = por %p77, %p78
    %p80 = scmp.ne.s32.totalorder %s72, %s74
    %p81 = scmp.eq.s32.totalorder %s22, 1
    %p82 = por %p80, %p81
    %p83 = scmp.ne.s32.totalorder %s74, %s75
    %p84 = scmp.eq.s32.totalorder %s22, 0
    %p85 = por %p83, %p84
    %p86 = scmp.ne.s32.totalorder %s74, %s75
    %p87 = scmp.eq.s32.totalorder %s23, 1
    %p88 = por %p86, %p87
    %p90 = scmp.ne.s32.totalorder %s75, %s89
    %p91 = scmp.eq.s32.totalorder %s23, 0
    %p92 = por %p90, %p91
    %s94 = sadd.s32 %s93, 1
    %p97 = scmp.eq.s32.totalorder %s17, 1
    %p98 = scmp.ne.s32.totalorder %s93, %s95
    %p99 = scmp.eq.s32.totalorder %s17, 0
    %p100 = por %p98, %p99
    %p101 = scmp.ne.s32.totalorder %s93, %s95
    %p102 = scmp.eq.s32.totalorder %s22, 1
    %p103 = por %p101, %p102
    %p104 = scmp.ne.s32.totalorder %s95, %s96
    %p105 = scmp.eq.s32.totalorder %s22, 0
    %p106 = por %p104, %p105
    %p107 = scmp.ne.s32.totalorder %s95, %s96
    %p108 = scmp.eq.s32.totalorder %s23, 1
    %p109 = por %p107, %p108
    %p111 = scmp.ne.s32.totalorder %s96, %s110
    %p112 = scmp.eq.s32.totalorder %s23, 0
    %p113 = por %p111, %p112
    %s115 = sadd.s32 %s114, 1
    %p118 = scmp.eq.s32.totalorder %s17, 1
    %p119 = scmp.ne.s32.totalorder %s114, %s116
    %p120 = scmp.eq.s32.totalorder %s17, 0
    %p121 = por %p119, %p120
    %p122 = scmp.ne.s32.totalorder %s114, %s116
    %p123 = scmp.eq.s32.totalorder %s22, 1
    %p124 = por %p122, %p123
    %p125 = scmp.ne.s32.totalorder %s116, %s117
    %p126 = scmp.eq.s32.totalorder %s22, 0
    %p127 = por %p125, %p126
    %p128 = scmp.ne.s32.totalorder %s116, %s117
    %p129 = scmp.eq.s32.totalorder %s23, 1
    %p130 = por %p128, %p129
    %p132 = scmp.ne.s32.totalorder %s117, %s131
    %p133 = scmp.eq.s32.totalorder %s23, 0
    %p134 = por %p132, %p133
    %s136 = sadd.s32 %s135, 1
    %p139 = scmp.eq.s32.totalorder %s17, 1
    %p140 = scmp.ne.s32.totalorder %s135, %s137
    %p141 = scmp.eq.s32.totalorder %s17, 0
    %p142 = por %p140, %p141
    %p143 = scmp.ne.s32.totalorder %s135, %s137
    %p144 = scmp.eq.s32.totalorder %s22, 1
    %p145 = por %p143, %p144
    %p146 = scmp.ne.s32.totalorder %s137, %s138
    %p147 = scmp.eq.s32.totalorder %s22, 0
    %p148 = por %p146, %p147
    %p149 = scmp.ne.s32.totalorder %s137, %s138
    %p150 = scmp.eq.s32.totalorder %s23, 1
    %p151 = por %p149, %p150
    %p153 = scmp.ne.s32.totalorder %s138, %s152
    %p154 = scmp.eq.s32.totalorder %s23, 0
    %p155 = por %p153, %p154
    %s157 = sadd.s32 %s156, 1
    %p160 = scmp.eq.s32.totalorder %s17, 1
    %p161 = scmp.ne.s32.totalorder %s156, %s158
    %p162 = scmp.eq.s32.totalorder %s17, 0
    %p163 = por %p161, %p162
    %p164 = scmp.ne.s32.totalorder %s156, %s158
    %p165 = scmp.eq.s32.totalorder %s22, 1
    %p166 = por %p164, %p165
    %p167 = scmp.ne.s32.totalorder %s158, %s159
    %p168 = scmp.eq.s32.totalorder %s22, 0
    %p169 = por %p167, %p168
    %p170 = scmp.ne.s32.totalorder %s158, %s159
    %p171 = scmp.eq.s32.totalorder %s23, 1
    %p172 = por %p170, %p171
    %p174 = scmp.ne.s32.totalorder %s159, %s173
    %p175 = scmp.eq.s32.totalorder %s23, 0
    %p176 = por %p174, %p175
    %s178 = sadd.s32 %s177, 1
    %p181 = scmp.eq.s32.totalorder %s17, 1
    %p182 = scmp.ne.s32.totalorder %s177, %s179
    %p183 = scmp.eq.s32.totalorder %s17, 0
    %p184 = por %p182, %p183
    %p185 = scmp.ne.s32.totalorder %s177, %s179
    %p186 = scmp.eq.s32.totalorder %s22, 1
    %p187 = por %p185, %p186
    %p188 = scmp.ne.s32.totalorder %s179, %s180
    %p189 = scmp.eq.s32.totalorder %s22, 0
    %p190 = por %p188, %p189
    %p191 = scmp.ne.s32.totalorder %s179, %s180
    %p192 = scmp.eq.s32.totalorder %s23, 1
    %p193 = por %p191, %p192
    %p195 = scmp.ne.s32.totalorder %s180, %s194
    %p196 = scmp.eq.s32.totalorder %s23, 0
    %p197 = por %p195, %p196
    %s199 = sadd.s32 %s198, 1
    %p202 = scmp.eq.s32.totalorder %s17, 1
    %p203 = scmp.ne.s32.totalorder %s198, %s200
    %p204 = scmp.eq.s32.totalorder %s17, 0
    %p205 = por %p203, %p204
    %p206 = scmp.ne.s32.totalorder %s198, %s200
    %p207 = scmp.eq.s32.totalorder %s22, 1
    %p208 = por %p206, %p207
    %p209 = scmp.ne.s32.totalorder %s200, %s201
    %p210 = scmp.eq.s32.totalorder %s22, 0
    %p211 = por %p209, %p210
    %p212 = scmp.ne.s32.totalorder %s200, %s201
    %p213 = scmp.eq.s32.totalorder %s23, 1
    %p214 = por %p212, %p213
    %p216 = scmp.ne.s32.totalorder %s201, %s215
    %p217 = scmp.eq.s32.totalorder %s23, 0
    %p218 = por %p216, %p217
    %s220 = sadd.s32 %s219, 1
    %p223 = scmp.eq.s32.totalorder %s17, 1
    %p224 = scmp.ne.s32.totalorder %s219, %s221
    %p225 = scmp.eq.s32.totalorder %s17, 0
    %p226 = por %p224, %p225
    %p227 = scmp.ne.s32.totalorder %s219, %s221
    %p228 = scmp.eq.s32.totalorder %s22, 1
    %p229 = por %p227, %p228
    %p230 = scmp.ne.s32.totalorder %s221, %s222
    %p231 = scmp.eq.s32.totalorder %s22, 0
    %p232 = por %p230, %p231
    %p233 = scmp.ne.s32.totalorder %s221, %s222
    %p234 = scmp.eq.s32.totalorder %s23, 1
    %p235 = por %p233, %p234
    %p237 = scmp.ne.s32.totalorder %s222, %s236
    %p238 = scmp.eq.s32.totalorder %s23, 0
    %p239 = por %p237, %p238
    %s241 = sadd.s32 %s240, 1
    %p244 = scmp.eq.s32.totalorder %s17, 1
    %p245 = scmp.ne.s32.totalorder %s240, %s242
    %p246 = scmp.eq.s32.totalorder %s17, 0
    %p247 = por %p245, %p246
    %p248 = scmp.ne.s32.totalorder %s240, %s242
    %p249 = scmp.eq.s32.totalorder %s22, 1
    %p250 = por %p248, %p249
    %p251 = scmp.ne.s32.totalorder %s242, %s243
    %p252 = scmp.eq.s32.totalorder %s22, 0
    %p253 = por %p251, %p252
    %p254 = scmp.ne.s32.totalorder %s242, %s243
    %p255 = scmp.eq.s32.totalorder %s23, 1
    %p256 = por %p254, %p255
    %p258 = scmp.ne.s32.totalorder %s243, %s257
    %p259 = scmp.eq.s32.totalorder %s23, 0
    %p260 = por %p258, %p259
    %s261 = ssub.s32 %s17, %s24
    %p262 = scmp.eq.s32.totalorder %s261, 0
    %s264 = sadd.s32 %s263, 1
    %s265 = scalar_select %p262, %s263, %s264
    %p268 = pneg %p262
    %p269 = scmp.eq.s32.totalorder %s17, 1
    %p270 = por %p268, %p269
    %p271 = scmp.ne.s32.totalorder %s263, %s266
    %p272 = scmp.eq.s32.totalorder %s17, 0
    %p273 = por %p271, %p272
    %p274 = scmp.ne.s32.totalorder %s263, %s266
    %p275 = scmp.eq.s32.totalorder %s22, 1
    %p276 = por %p274, %p275
    %p277 = scmp.ne.s32.totalorder %s266, %s267
    %p278 = scmp.eq.s32.totalorder %s22, 0
    %p279 = por %p277, %p278
    %p280 = scmp.ne.s32.totalorder %s266, %s267
    %p281 = scmp.eq.s32.totalorder %s23, 1
    %p282 = por %p280, %p281
    %p284 = scmp.ne.s32.totalorder %s267, %s283
    %p285 = scmp.eq.s32.totalorder %s23, 0
    %p286 = por %p284, %p285
    %p287 = scmp.le.s32.totalorder 1, %s17
    %p288 = scmp.lt.s32.totalorder %s17, 3
    %p289 = pnand %p287, %p288
    %p290 = pneg %p289
    // Predicated region
    $region9: #{basicnet_forward.1} parent=5 // pred_check
      _
    $region10: #{basicnet_forward.1} parent=5 // pred_check_branch
      %292 = sbr.rel (%p289) target = $region12
    $region11: #{basicnet_forward.1} parent=5 // pred_region
      %s293 = ssub.s32 %s17, 1
      // Predicated region
      $region13: #{basicnet_forward.1} parent=11 // pred_check
        %p294 = pneg %p64
      $region14: #{basicnet_forward.1} parent=11 // pred_check_branch
        %296 = sbr.rel (%p294) target = $region16
      $region15: #{basicnet_forward.1} parent=11 // pred_region
        _
      $region16: #{basicnet_forward.1} parent=11 // pred_fallthru
        _
      // Predicated region
      $region17: #{basicnet_forward.1} parent=11 // pred_check
        %p297 = pneg %p85
      $region18: #{basicnet_forward.1} parent=11 // pred_check_branch
        %299 = sbr.rel (%p297) target = $region20
      $region19: #{basicnet_forward.1} parent=11 // pred_region
        _
      $region20: #{basicnet_forward.1} parent=11 // pred_fallthru
        _
      // Predicated region
      $region21: #{basicnet_forward.1} parent=11 // pred_check
        %p300 = pneg %p106
      $region22: #{basicnet_forward.1} parent=11 // pred_check_branch
        %302 = sbr.rel (%p300) target = $region24
      $region23: #{basicnet_forward.1} parent=11 // pred_region
        _
      $region24: #{basicnet_forward.1} parent=11 // pred_fallthru
        _
      // Predicated region
      $region25: #{basicnet_forward.1} parent=11 // pred_check
        %p303 = pneg %p127
      $region26: #{basicnet_forward.1} parent=11 // pred_check_branch
        %305 = sbr.rel (%p303) target = $region28
      $region27: #{basicnet_forward.1} parent=11 // pred_region
        _
      $region28: #{basicnet_forward.1} parent=11 // pred_fallthru
        _
      // Predicated region
      $region29: #{basicnet_forward.1} parent=11 // pred_check
        %p306 = pneg %p148
      $region30: #{basicnet_forward.1} parent=11 // pred_check_branch
        %308 = sbr.rel (%p306) target = $region32
      $region31: #{basicnet_forward.1} parent=11 // pred_region
        _
      $region32: #{basicnet_forward.1} parent=11 // pred_fallthru
        _
      // Predicated region
      $region33: #{basicnet_forward.1} parent=11 // pred_check
        %p309 = pneg %p169
      $region34: #{basicnet_forward.1} parent=11 // pred_check_branch
        %311 = sbr.rel (%p309) target = $region36
      $region35: #{basicnet_forward.1} parent=11 // pred_region
        _
      $region36: #{basicnet_forward.1} parent=11 // pred_fallthru
        _
      // Predicated region
      $region37: #{basicnet_forward.1} parent=11 // pred_check
        %p312 = pneg %p190
      $region38: #{basicnet_forward.1} parent=11 // pred_check_branch
        %314 = sbr.rel (%p312) target = $region40
      $region39: #{basicnet_forward.1} parent=11 // pred_region
        _
      $region40: #{basicnet_forward.1} parent=11 // pred_fallthru
        _
      // Predicated region
      $region41: #{basicnet_forward.1} parent=11 // pred_check
        %p315 = pneg %p211
      $region42: #{basicnet_forward.1} parent=11 // pred_check_branch
        %317 = sbr.rel (%p315) target = $region44
      $region43: #{basicnet_forward.1} parent=11 // pred_region
        _
      $region44: #{basicnet_forward.1} parent=11 // pred_fallthru
        _
      // Predicated region
      $region45: #{basicnet_forward.1} parent=11 // pred_check
        %p318 = pneg %p232
      $region46: #{basicnet_forward.1} parent=11 // pred_check_branch
        %320 = sbr.rel (%p318) target = $region48
      $region47: #{basicnet_forward.1} parent=11 // pred_region
        _
      $region48: #{basicnet_forward.1} parent=11 // pred_fallthru
        _
      // Predicated region
      $region49: #{basicnet_forward.1} parent=11 // pred_check
        %p321 = pneg %p253
      $region50: #{basicnet_forward.1} parent=11 // pred_check_branch
        %323 = sbr.rel (%p321) target = $region52
      $region51: #{basicnet_forward.1} parent=11 // pred_region
        _
      $region52: #{basicnet_forward.1} parent=11 // pred_fallthru
        _
    $region12: #{basicnet_forward.1} parent=5 // pred_fallthru
      _
    %p324 = scmp.lt.s32.totalorder %s17, 2
    // Predicated region
    $region53: #{basicnet_forward.1} parent=5 // pred_check
      %p325 = pneg %p324
    $region54: #{basicnet_forward.1} parent=5 // pred_check_branch
      %327 = sbr.rel (%p325) target = $region56
    $region55: #{basicnet_forward.1} parent=5 // pred_region
      // Predicated region
      $region57: #{basicnet_forward.1} parent=55 // pred_check
        %p328 = pneg %p37
      $region58: #{basicnet_forward.1} parent=55 // pred_check_branch
        %330 = sbr.rel (%p328) target = $region60
      $region59: #{basicnet_forward.1} parent=55 // pred_region
        %p331 = scmp.lt.s32.totalorder %s17, 1
        %s332 = scalar_select %p331, %s17, 1
        %s333 = smul.addr %s332, 4
        %s334 = smul.addr %s333, 4
        %s335 = scalar_lea.vmem %s0, %s334
      $region60: #{basicnet_forward.1} parent=55 // pred_fallthru
        _
    $region56: #{basicnet_forward.1} parent=5 // pred_fallthru
      _
    %p336 = scmp.le.s32.totalorder 1, %s17
    %p337 = scmp.lt.s32.totalorder %s17, 3
    %p338 = pnand %p336, %p337
    %p339 = pneg %p338
    // Predicated region
    $region61: #{basicnet_forward.1} parent=5 // pred_check
      _
    $region62: #{basicnet_forward.1} parent=5 // pred_check_branch
      %341 = sbr.rel (%p338) target = $region64
    $region63: #{basicnet_forward.1} parent=5 // pred_region
      %s342 = ssub.s32 %s17, 1
      %p343 = scmp.lt.s32.totalorder %s22, 1
      %s344 = scalar_select %p343, %s22, 1
      %s345 = smul.addr %s344, 4
      %s346 = smul.addr %s345, 4
      %s347 = scalar_lea.vmem %s0, %s346
      %p348 = pneg %p43
      %p349 = pneg %p40
      %p350 = pneg %p64
      %p351 = pneg %p61
      %p352 = pneg %p85
      %p353 = pneg %p82
      %p354 = pneg %p106
      %p355 = pneg %p103
      %p356 = pneg %p127
      %p357 = pneg %p124
      %p358 = pneg %p148
      %p359 = pneg %p145
      %p360 = pneg %p169
      %p361 = pneg %p166
      %p362 = pneg %p190
      %p363 = pneg %p187
      %p364 = pneg %p211
      %p365 = pneg %p208
      %p366 = pneg %p232
      %p367 = pneg %p229
      %p368 = pneg %p253
      %p369 = pneg %p250
      %p370 = pneg %p279
      %p371 = pneg %p276
      %p372 = scmp.lt.s32.totalorder %s22, 1
      %s373 = scalar_select %p372, %s22, 1
      %s374 = smul.addr %s373, 8
      %s375 = scalar_lea.vmem %s11, %s374
      %p376 = scmp.lt.s32.totalorder %s22, 1
      %s377 = scalar_select %p376, %s22, 1
      %s378 = smul.addr %s377, 4
      %s379 = smul.addr %s378, 4
      %s380 = scalar_lea.vmem %s0, %s379
      %p381 = scmp.lt.s32.totalorder %s22, 1
      %s382 = scalar_select %p381, %s22, 1
      %s383 = smul.addr %s382, 8
      %s384 = scalar_lea.vmem %s11, %s383
      %v386 = vld [vmem:[%s380] sm:$0xf]
      %v387 = vld [vmem:[%s380 + $0x4] sm:$0xf]
      %v388 = vld [vmem:[%s380 + $0x8] sm:$0xf]
      %v389 = vld [vmem:[%s380 + $0xc] sm:$0xf]
      %v390 = vld [vmem:[%s1] sm:$0xf]
      %v391 = vld [vmem:[%s1 + $0x4] sm:$0xf]
      %v392 = vld [vmem:[%s1 + $0x8] sm:$0xf]
      %v393 = vld [vmem:[%s1 + $0xc] sm:$0xf]
      %v394 = vld [vmem:[%s1 + $0x10] sm:$0xf]
      %v395 = vld [vmem:[%s1 + $0x14] sm:$0xf]
      %v396 = vld [vmem:[%s1 + $0x18] sm:$0xf]
      %v397 = vld [vmem:[%s1 + $0x1c] sm:$0xf]
      %v398 = vld [vmem:[%s1 + $0x20] sm:$0xf]
      %v399 = vld [vmem:[%s1 + $0x24] sm:$0xf]
      %v400 = vld [vmem:[%s1 + $0x28] sm:$0xf]
      %v401 = vld [vmem:[%s1 + $0x2c] sm:$0xf]
      %s402 = scalar_lea.vmem %s1, 48
      %v403 = vld [vmem:[%s402] sm:$0xf]
      %v404 = vld [vmem:[%s402 + $0x4] sm:$0xf]
      %v405 = vld [vmem:[%s402 + $0x8] sm:$0xf]
      %v406 = vld [vmem:[%s402 + $0xc] sm:$0xf]
      %v407 = vld [vmem:[%s402 + $0x10] sm:$0xf]
      %v408 = vld [vmem:[%s402 + $0x14] sm:$0xf]
      %v409 = vld [vmem:[%s402 + $0x18] sm:$0xf]
      %v410 = vld [vmem:[%s402 + $0x1c] sm:$0xf]
      %v411 = vld [vmem:[%s402 + $0x20] sm:$0xf]
      %v412 = vld [vmem:[%s402 + $0x24] sm:$0xf]
      %v413 = vld [vmem:[%s402 + $0x28] sm:$0xf]
      %v414 = vld [vmem:[%s402 + $0x2c] sm:$0xf]
      %v427 = vunpack.c.l.b16 %v403
      %v428 = vunpack.c.l.b16 %v404
      %v429 = vunpack.c.l.b16 %v405
      %v430 = vunpack.c.l.b16 %v406
      %v431 = vunpack.c.l.b16 %v407
      %v432 = vunpack.c.l.b16 %v408
      %v433 = vunpack.c.l.b16 %v409
      %v434 = vunpack.c.l.b16 %v410
      %v435 = vunpack.c.l.b16 %v411
      %v436 = vunpack.c.l.b16 %v412
      %v437 = vunpack.c.l.b16 %v413
      %v438 = vunpack.c.l.b16 %v414
      %v439 = vpack.c.b16 %v428, %v427
      %v440 = vpack.c.b16 %v430, %v429
      %v441 = vpack.c.b16 %v432, %v431
      %v442 = vpack.c.b16 %v434, %v433
      %v443 = vpack.c.b16 %v436, %v435
      %v444 = vpack.c.b16 %v438, %v437
      %vm451 = vcmask 785408
      %v453 = vsel %vm451, %v387, 0
      %455 = vmatprep.subr.bf16.mxu0 0
      %456 = vmatpush1.bf16.msra.mxu0 %v439
      %457 = vmatprep.subr.bf16.mxu0 0
      %458 = vmatpush1.bf16.msra.mxu0 %v440
      %459 = vmatprep.subr.bf16.mxu0 0
      %460 = vmatpush1.bf16.msra.mxu0 %v441
      %461 = vmatprep.subr.bf16.mxu0 0
      %462 = vmatpush1.bf16.msra.mxu0 %v442
      %463 = vmatprep.subr.bf16.mxu0 0
      %464 = vmatpush1.bf16.msra.mxu0 %v443
      %465 = vmatprep.subr.bf16.mxu0 0
      %466 = vmatpush1.bf16.msra.mxu0 %v444
      %467 = vmatprep.subr.bf16.mxu0 0
      %468 = vmatpush1.bf16.msra.mxu0 0
      %469 = vmatprep.subr.bf16.mxu0 0
      %470 = vmatpush1.bf16.msra.mxu0 0
      %471 = vmatprep.subr.bf16.mxu0 0
      %472 = vmatpush1.bf16.msra.mxu0 0
      %473 = vmatprep.subr.bf16.mxu0 0
      %474 = vmatpush1.bf16.msra.mxu0 0
      %475 = vmatprep.subr.bf16.mxu0 0
      %476 = vmatpush1.bf16.msra.mxu0 0
      %477 = vmatprep.subr.bf16.mxu0 0
      %478 = vmatpush1.bf16.msra.mxu0 0
      %479 = vmatprep.subr.bf16.mxu0 0
      %480 = vmatpush1.bf16.msra.mxu0 0
      %481 = vmatprep.subr.bf16.mxu0 0
      %482 = vmatpush1.bf16.msra.mxu0 0
      %483 = vmatprep.subr.bf16.mxu0 0
      %484 = vmatpush1.bf16.msra.mxu0 0
      %485 = vmatprep.subr.bf16.mxu0 0
      %486 = vmatpush1.bf16.msra.mxu0 0
      %487 = vmatprep.mubr.bf16.mxu0 0
      %488 = vmatmul.mubr.bf16.gmra.mrb[0].mxu0 %v453
      %v489 = vpop.f32.mrb[0].mxu0
      %v490 = vadd.f32 0.0, %v489
      %v491 = vpop.f32.mrb[0].mxu0
      %v492 = vpop.f32.mrb[0].mxu0
      %v493 = vpop.f32.mrb[0].mxu0
      %494 = vdwg.mxu0
      %v507 = vunpack.c.l.b16 %v390
      %v508 = vunpack.c.l.b16 %v391
      %v509 = vunpack.c.l.b16 %v392
      %v510 = vunpack.c.l.b16 %v393
      %v511 = vunpack.c.l.b16 %v394
      %v512 = vunpack.c.l.b16 %v395
      %v513 = vunpack.c.l.b16 %v396
      %v514 = vunpack.c.l.b16 %v397
      %v515 = vunpack.c.l.b16 %v398
      %v516 = vunpack.c.l.b16 %v399
      %v517 = vunpack.c.l.b16 %v400
      %v518 = vunpack.c.l.b16 %v401
      %v519 = vpack.c.b16 %v508, %v507
      %v520 = vpack.c.b16 %v510, %v509
      %v521 = vpack.c.b16 %v512, %v511
      %v522 = vpack.c.b16 %v514, %v513
      %v523 = vpack.c.b16 %v516, %v515
      %v524 = vpack.c.b16 %v518, %v517
      %v532 = vsel %vm451, %v386, 0
      %534 = vmatprep.subr.bf16.mxu0 0
      %535 = vmatpush1.bf16.msra.mxu0 %v519
      %536 = vmatprep.subr.bf16.mxu0 0
      %537 = vmatpush1.bf16.msra.mxu0 %v520
      %538 = vmatprep.subr.bf16.mxu0 0
      %539 = vmatpush1.bf16.msra.mxu0 %v521
      %540 = vmatprep.subr.bf16.mxu0 0
      %541 = vmatpush1.bf16.msra.mxu0 %v522
      %542 = vmatprep.subr.bf16.mxu0 0
      %543 = vmatpush1.bf16.msra.mxu0 %v523
      %544 = vmatprep.subr.bf16.mxu0 0
      %545 = vmatpush1.bf16.msra.mxu0 %v524
      %546 = vmatprep.subr.bf16.mxu0 0
      %547 = vmatpush1.bf16.msra.mxu0 0
      %548 = vmatprep.subr.bf16.mxu0 0
      %549 = vmatpush1.bf16.msra.mxu0 0
      %550 = vmatprep.subr.bf16.mxu0 0
      %551 = vmatpush1.bf16.msra.mxu0 0
      %552 = vmatprep.subr.bf16.mxu0 0
      %553 = vmatpush1.bf16.msra.mxu0 0
      %554 = vmatprep.subr.bf16.mxu0 0
      %555 = vmatpush1.bf16.msra.mxu0 0
      %556 = vmatprep.subr.bf16.mxu0 0
      %557 = vmatpush1.bf16.msra.mxu0 0
      %558 = vmatprep.subr.bf16.mxu0 0
      %559 = vmatpush1.bf16.msra.mxu0 0
      %560 = vmatprep.subr.bf16.mxu0 0
      %561 = vmatpush1.bf16.msra.mxu0 0
      %562 = vmatprep.subr.bf16.mxu0 0
      %563 = vmatpush1.bf16.msra.mxu0 0
      %564 = vmatprep.subr.bf16.mxu0 0
      %565 = vmatpush1.bf16.msra.mxu0 0
      %566 = vmatprep.mubr.bf16.mxu0 0
      %567 = vmatmul.mubr.bf16.gmra.mrb[0].mxu0 %v532
      %v568 = vpop.f32.mrb[0].mxu0
      %v569 = vadd.f32 %v490, %v568
      %v570 = vpop.f32.mrb[0].mxu0
      %v571 = vpop.f32.mrb[0].mxu0
      %v572 = vpop.f32.mrb[0].mxu0
      %573 = vdwg.mxu0
      %s574 = scalar_lea.vmem %s1, 96
      %v575 = vld [vmem:[%s574] sm:$0xf]
      %v576 = vld [vmem:[%s574 + $0x4] sm:$0xf]
      %v577 = vld [vmem:[%s574 + $0x8] sm:$0xf]
      %v578 = vld [vmem:[%s574 + $0xc] sm:$0xf]
      %v579 = vld [vmem:[%s574 + $0x10] sm:$0xf]
      %v580 = vld [vmem:[%s574 + $0x14] sm:$0xf]
      %v581 = vld [vmem:[%s574 + $0x18] sm:$0xf]
      %v582 = vld [vmem:[%s574 + $0x1c] sm:$0xf]
      %v583 = vld [vmem:[%s574 + $0x20] sm:$0xf]
      %v584 = vld [vmem:[%s574 + $0x24] sm:$0xf]
      %v585 = vld [vmem:[%s574 + $0x28] sm:$0xf]
      %v586 = vld [vmem:[%s574 + $0x2c] sm:$0xf]
      %v599 = vunpack.c.l.b16 %v575
      %v600 = vunpack.c.l.b16 %v576
      %v601 = vunpack.c.l.b16 %v577
      %v602 = vunpack.c.l.b16 %v578
      %v603 = vunpack.c.l.b16 %v579
      %v604 = vunpack.c.l.b16 %v580
      %v605 = vunpack.c.l.b16 %v581
      %v606 = vunpack.c.l.b16 %v582
      %v607 = vunpack.c.l.b16 %v583
      %v608 = vunpack.c.l.b16 %v584
      %v609 = vunpack.c.l.b16 %v585
      %v610 = vunpack.c.l.b16 %v586
      %v611 = vpack.c.b16 %v600, %v599
      %v612 = vpack.c.b16 %v602, %v601
      %v613 = vpack.c.b16 %v604, %v603
      %v614 = vpack.c.b16 %v606, %v605
      %v615 = vpack.c.b16 %v608, %v607
      %v616 = vpack.c.b16 %v610, %v609
      %v624 = vsel %vm451, %v388, 0
      %626 = vmatprep.subr.bf16.mxu0 0
      %627 = vmatpush1.bf16.msra.mxu0 %v611
      %628 = vmatprep.subr.bf16.mxu0 0
      %629 = vmatpush1.bf16.msra.mxu0 %v612
      %630 = vmatprep.subr.bf16.mxu0 0
      %631 = vmatpush1.bf16.msra.mxu0 %v613
      %632 = vmatprep.subr.bf16.mxu0 0
      %633 = vmatpush1.bf16.msra.mxu0 %v614
      %634 = vmatprep.subr.bf16.mxu0 0
      %635 = vmatpush1.bf16.msra.mxu0 %v615
      %636 = vmatprep.subr.bf16.mxu0 0
      %637 = vmatpush1.bf16.msra.mxu0 %v616
      %638 = vmatprep.subr.bf16.mxu0 0
      %639 = vmatpush1.bf16.msra.mxu0 0
      %640 = vmatprep.subr.bf16.mxu0 0
      %641 = vmatpush1.bf16.msra.mxu0 0
      %642 = vmatprep.subr.bf16.mxu0 0
      %643 = vmatpush1.bf16.msra.mxu0 0
      %644 = vmatprep.subr.bf16.mxu0 0
      %645 = vmatpush1.bf16.msra.mxu0 0
      %646 = vmatprep.subr.bf16.mxu0 0
      %647 = vmatpush1.bf16.msra.mxu0 0
      %648 = vmatprep.subr.bf16.mxu0 0
      %649 = vmatpush1.bf16.msra.mxu0 0
      %650 = vmatprep.subr.bf16.mxu0 0
      %651 = vmatpush1.bf16.msra.mxu0 0
      %652 = vmatprep.subr.bf16.mxu0 0
      %653 = vmatpush1.bf16.msra.mxu0 0
      %654 = vmatprep.subr.bf16.mxu0 0
      %655 = vmatpush1.bf16.msra.mxu0 0
      %656 = vmatprep.subr.bf16.mxu0 0
      %657 = vmatpush1.bf16.msra.mxu0 0
      %658 = vmatprep.mubr.bf16.mxu0 0
      %659 = vmatmul.mubr.bf16.gmra.mrb[0].mxu0 %v624
      %v660 = vpop.f32.mrb[0].mxu0
      %v661 = vadd.f32 0.0, %v660
      %v662 = vpop.f32.mrb[0].mxu0
      %v663 = vpop.f32.mrb[0].mxu0
      %v664 = vpop.f32.mrb[0].mxu0
      %665 = vdwg.mxu0
      %v666 = vadd.f32 %v569, %v661
      %s667 = scalar_lea.vmem %s1, 144
      %v668 = vld [vmem:[%s667] sm:$0xf]
      %v669 = vld [vmem:[%s667 + $0x4] sm:$0xf]
      %v670 = vld [vmem:[%s667 + $0x8] sm:$0xf]
      %v671 = vld [vmem:[%s667 + $0xc] sm:$0xf]
      %v672 = vld [vmem:[%s667 + $0x10] sm:$0xf]
      %v673 = vld [vmem:[%s667 + $0x14] sm:$0xf]
      %v674 = vld [vmem:[%s667 + $0x18] sm:$0xf]
      %v675 = vld [vmem:[%s667 + $0x1c] sm:$0xf]
      %v676 = vld [vmem:[%s667 + $0x20] sm:$0xf]
      %v677 = vld [vmem:[%s667 + $0x24] sm:$0xf]
      %v678 = vld [vmem:[%s667 + $0x28] sm:$0xf]
      %v679 = vld [vmem:[%s667 + $0x2c] sm:$0xf]
      %v692 = vunpack.c.l.b16 %v668
      %v693 = vunpack.c.l.b16 %v669
      %v694 = vunpack.c.l.b16 %v670
      %v695 = vunpack.c.l.b16 %v671
      %v696 = vunpack.c.l.b16 %v672
      %v697 = vunpack.c.l.b16 %v673
      %v698 = vunpack.c.l.b16 %v674
      %v699 = vunpack.c.l.b16 %v675
      %v700 = vunpack.c.l.b16 %v676
      %v701 = vunpack.c.l.b16 %v677
      %v702 = vunpack.c.l.b16 %v678
      %v703 = vunpack.c.l.b16 %v679
      %v704 = vpack.c.b16 %v693, %v692
      %v705 = vpack.c.b16 %v695, %v694
      %v706 = vpack.c.b16 %v697, %v696
      %v707 = vpack.c.b16 %v699, %v698
      %v708 = vpack.c.b16 %v701, %v700
      %v709 = vpack.c.b16 %v703, %v702
      %v717 = vsel %vm451, %v389, 0
      %719 = vmatprep.subr.bf16.mxu0 0
      %720 = vmatpush1.bf16.msra.mxu0 %v704
      %721 = vmatprep.subr.bf16.mxu0 0
      %722 = vmatpush1.bf16.msra.mxu0 %v705
      %723 = vmatprep.subr.bf16.mxu0 0
      %724 = vmatpush1.bf16.msra.mxu0 %v706
      %725 = vmatprep.subr.bf16.mxu0 0
      %726 = vmatpush1.bf16.msra.mxu0 %v707
      %727 = vmatprep.subr.bf16.mxu0 0
      %728 = vmatpush1.bf16.msra.mxu0 %v708
      %729 = vmatprep.subr.bf16.mxu0 0
      %730 = vmatpush1.bf16.msra.mxu0 %v709
      %731 = vmatprep.subr.bf16.mxu0 0
      %732 = vmatpush1.bf16.msra.mxu0 0
      %733 = vmatprep.subr.bf16.mxu0 0
      %734 = vmatpush1.bf16.msra.mxu0 0
      %735 = vmatprep.subr.bf16.mxu0 0
      %736 = vmatpush1.bf16.msra.mxu0 0
      %737 = vmatprep.subr.bf16.mxu0 0
      %738 = vmatpush1.bf16.msra.mxu0 0
      %739 = vmatprep.subr.bf16.mxu0 0
      %740 = vmatpush1.bf16.msra.mxu0 0
      %741 = vmatprep.subr.bf16.mxu0 0
      %742 = vmatpush1.bf16.msra.mxu0 0
      %743 = vmatprep.subr.bf16.mxu0 0
      %744 = vmatpush1.bf16.msra.mxu0 0
      %745 = vmatprep.subr.bf16.mxu0 0
      %746 = vmatpush1.bf16.msra.mxu0 0
      %747 = vmatprep.subr.bf16.mxu0 0
      %748 = vmatpush1.bf16.msra.mxu0 0
      %749 = vmatprep.subr.bf16.mxu0 0
      %750 = vmatpush1.bf16.msra.mxu0 0
      %751 = vmatprep.mubr.bf16.mxu0 0
      %752 = vmatmul.mubr.bf16.gmra.mrb[0].mxu0 %v717
      %v753 = vpop.f32.mrb[0].mxu0
      %v754 = vadd.f32 0.0, %v753
      %v755 = vpop.f32.mrb[0].mxu0
      %v756 = vpop.f32.mrb[0].mxu0
      %v757 = vpop.f32.mrb[0].mxu0
      %758 = vdwg.mxu0
      %v759 = vadd.f32 %v666, %v754
      %s760 = scalar_lea.vmem %s1, 192
      %v761 = vld [vmem:[%s760] sm:$0xf]
      %v762 = vld [vmem:[%s760 + $0x4] sm:$0xf]
      %v763 = vld [vmem:[%s760 + $0x8] sm:$0xf]
      %v764 = vld [vmem:[%s760 + $0xc] sm:$0xf]
      %v765 = vld [vmem:[%s760 + $0x10] sm:$0xf]
      %v766 = vld [vmem:[%s760 + $0x14] sm:$0xf]
      %v767 = vld [vmem:[%s760 + $0x18] sm:$0xf]
      %v768 = vld [vmem:[%s760 + $0x1c] sm:$0xf]
      %v769 = vld [vmem:[%s760 + $0x20] sm:$0xf]
      %v770 = vld [vmem:[%s760 + $0x24] sm:$0xf]
      %v771 = vld [vmem:[%s760 + $0x28] sm:$0xf]
      %v772 = vld [vmem:[%s760 + $0x2c] sm:$0xf]
      %v774 = vunpack.c.l.b16 %v386
      %v775 = vpack.c.b16 %v774, %v774
      %v777 = vshrl.u32 %v775, 16
      %v779 = vshll.u32 %v775, 16
      %v781 = vrot.slane %v779, 1
      %v782 = vor.u32 %v777, %v781
      %v795 = vunpack.c.l.b16 %v761
      %v796 = vunpack.c.l.b16 %v762
      %v797 = vunpack.c.l.b16 %v763
      %v798 = vunpack.c.l.b16 %v764
      %v799 = vunpack.c.l.b16 %v765
      %v800 = vunpack.c.l.b16 %v766
      %v801 = vunpack.c.l.b16 %v767
      %v802 = vunpack.c.l.b16 %v768
      %v803 = vunpack.c.l.b16 %v769
      %v804 = vunpack.c.l.b16 %v770
      %v805 = vunpack.c.l.b16 %v771
      %v806 = vunpack.c.l.b16 %v772
      %v807 = vpack.c.b16 %v796, %v795
      %v808 = vpack.c.b16 %v798, %v797
      %v809 = vpack.c.b16 %v800, %v799
      %v810 = vpack.c.b16 %v802, %v801
      %v811 = vpack.c.b16 %v804, %v803
      %v812 = vpack.c.b16 %v806, %v805
      %v820 = vsel %vm451, %v782, 0
      %822 = vmatprep.subr.bf16.mxu0 0
      %823 = vmatpush1.bf16.msra.mxu0 %v807
      %824 = vmatprep.subr.bf16.mxu0 0
      %825 = vmatpush1.bf16.msra.mxu0 %v808
      %826 = vmatprep.subr.bf16.mxu0 0
      %827 = vmatpush1.bf16.msra.mxu0 %v809
      %828 = vmatprep.subr.bf16.mxu0 0
      %829 = vmatpush1.bf16.msra.mxu0 %v810
      %830 = vmatprep.subr.bf16.mxu0 0
      %831 = vmatpush1.bf16.msra.mxu0 %v811
      %832 = vmatprep.subr.bf16.mxu0 0
      %833 = vmatpush1.bf16.msra.mxu0 %v812
      %834 = vmatprep.subr.bf16.mxu0 0
      %835 = vmatpush1.bf16.msra.mxu0 0
      %836 = vmatprep.subr.bf16.mxu0 0
      %837 = vmatpush1.bf16.msra.mxu0 0
      %838 = vmatprep.subr.bf16.mxu0 0
      %839 = vmatpush1.bf16.msra.mxu0 0
      %840 = vmatprep.subr.bf16.mxu0 0
      %841 = vmatpush1.bf16.msra.mxu0 0
      %842 = vmatprep.subr.bf16.mxu0 0
      %843 = vmatpush1.bf16.msra.mxu0 0
      %844 = vmatprep.subr.bf16.mxu0 0
      %845 = vmatpush1.bf16.msra.mxu0 0
      %846 = vmatprep.subr.bf16.mxu0 0
      %847 = vmatpush1.bf16.msra.mxu0 0
      %848 = vmatprep.subr.bf16.mxu0 0
      %849 = vmatpush1.bf16.msra.mxu0 0
      %850 = vmatprep.subr.bf16.mxu0 0
      %851 = vmatpush1.bf16.msra.mxu0 0
      %852 = vmatprep.subr.bf16.mxu0 0
      %853 = vmatpush1.bf16.msra.mxu0 0
      %854 = vmatprep.mubr.bf16.mxu0 0
      %855 = vmatmul.mubr.bf16.gmra.mrb[0].mxu0 %v820
      %v856 = vpop.f32.mrb[0].mxu0
      %v857 = vadd.f32 0.0, %v856
      %v858 = vpop.f32.mrb[0].mxu0
      %v859 = vpop.f32.mrb[0].mxu0
      %v860 = vpop.f32.mrb[0].mxu0
      %861 = vdwg.mxu0
      %v862 = vadd.f32 %v759, %v857
      %s863 = scalar_lea.vmem %s1, 240
      %v864 = vld [vmem:[%s863] sm:$0xf]
      %v865 = vld [vmem:[%s863 + $0x4] sm:$0xf]
      %v866 = vld [vmem:[%s863 + $0x8] sm:$0xf]
      %v867 = vld [vmem:[%s863 + $0xc] sm:$0xf]
      %v868 = vld [vmem:[%s863 + $0x10] sm:$0xf]
      %v869 = vld [vmem:[%s863 + $0x14] sm:$0xf]
      %v870 = vld [vmem:[%s863 + $0x18] sm:$0xf]
      %v871 = vld [vmem:[%s863 + $0x1c] sm:$0xf]
      %v872 = vld [vmem:[%s863 + $0x20] sm:$0xf]
      %v873 = vld [vmem:[%s863 + $0x24] sm:$0xf]
      %v874 = vld [vmem:[%s863 + $0x28] sm:$0xf]
      %v875 = vld [vmem:[%s863 + $0x2c] sm:$0xf]
      %s876 = scalar_lea.vmem %s1, 288
      %v877 = vld [vmem:[%s876] sm:$0xf]
      %v878 = vld [vmem:[%s876 + $0x4] sm:$0xf]
      %v879 = vld [vmem:[%s876 + $0x8] sm:$0xf]
      %v880 = vld [vmem:[%s876 + $0xc] sm:$0xf]
      %v881 = vld [vmem:[%s876 + $0x10] sm:$0xf]
      %v882 = vld [vmem:[%s876 + $0x14] sm:$0xf]
      %v883 = vld [vmem:[%s876 + $0x18] sm:$0xf]
      %v884 = vld [vmem:[%s876 + $0x1c] sm:$0xf]
      %v885 = vld [vmem:[%s876 + $0x20] sm:$0xf]
      %v886 = vld [vmem:[%s876 + $0x24] sm:$0xf]
      %v887 = vld [vmem:[%s876 + $0x28] sm:$0xf]
      %v888 = vld [vmem:[%s876 + $0x2c] sm:$0xf]
      %v901 = vunpack.c.l.b16 %v877
      %v902 = vunpack.c.l.b16 %v878
      %v903 = vunpack.c.l.b16 %v879
      %v904 = vunpack.c.l.b16 %v880
      %v905 = vunpack.c.l.b16 %v881
      %v906 = vunpack.c.l.b16 %v882
      %v907 = vunpack.c.l.b16 %v883
      %v908 = vunpack.c.l.b16 %v884
      %v909 = vunpack.c.l.b16 %v885
      %v910 = vunpack.c.l.b16 %v886
      %v911 = vunpack.c.l.b16 %v887
      %v912 = vunpack.c.l.b16 %v888
      %v913 = vpack.c.b16 %v902, %v901
      %v914 = vpack.c.b16 %v904, %v903
      %v915 = vpack.c.b16 %v906, %v905
      %v916 = vpack.c.b16 %v908, %v907
      %v917 = vpack.c.b16 %v910, %v909
      %v918 = vpack.c.b16 %v912, %v911
      %925 = vmatprep.subr.bf16.mxu0 0
      %926 = vmatpush1.bf16.msra.mxu0 %v913
      %927 = vmatprep.subr.bf16.mxu0 0
      %928 = vmatpush1.bf16.msra.mxu0 %v914
      %929 = vmatprep.subr.bf16.mxu0 0
      %930 = vmatpush1.bf16.msra.mxu0 %v915
      %931 = vmatprep.subr.bf16.mxu0 0
      %932 = vmatpush1.bf16.msra.mxu0 %v916
      %933 = vmatprep.subr.bf16.mxu0 0
      %934 = vmatpush1.bf16.msra.mxu0 %v917
      %935 = vmatprep.subr.bf16.mxu0 0
      %936 = vmatpush1.bf16.msra.mxu0 %v918
      %937 = vmatprep.subr.bf16.mxu0 0
      %938 = vmatpush1.bf16.msra.mxu0 0
      %939 = vmatprep.subr.bf16.mxu0 0
      %940 = vmatpush1.bf16.msra.mxu0 0
      %941 = vmatprep.subr.bf16.mxu0 0
      %942 = vmatpush1.bf16.msra.mxu0 0
      %943 = vmatprep.subr.bf16.mxu0 0
      %944 = vmatpush1.bf16.msra.mxu0 0
      %945 = vmatprep.subr.bf16.mxu0 0
      %946 = vmatpush1.bf16.msra.mxu0 0
      %947 = vmatprep.subr.bf16.mxu0 0
      %948 = vmatpush1.bf16.msra.mxu0 0
      %949 = vmatprep.subr.bf16.mxu0 0
      %950 = vmatpush1.bf16.msra.mxu0 0
      %951 = vmatprep.subr.bf16.mxu0 0
      %952 = vmatpush1.bf16.msra.mxu0 0
      %953 = vmatprep.subr.bf16.mxu0 0
      %954 = vmatpush1.bf16.msra.mxu0 0
      %955 = vmatprep.subr.bf16.mxu0 0
      %956 = vmatpush1.bf16.msra.mxu0 0
      %957 = vmatprep.mubr.bf16.mxu0 0
      %958 = vmatmul.mubr.bf16.gmra.mrb[0].mxu0 %v453
      %v959 = vpop.f32.mrb[0].mxu0
      %v960 = vadd.f32 0.0, %v959
      %v961 = vpop.f32.mrb[0].mxu0
      %v962 = vpop.f32.mrb[0].mxu0
      %v963 = vpop.f32.mrb[0].mxu0
      %964 = vdwg.mxu0
      %v977 = vunpack.c.l.b16 %v864
      %v978 = vunpack.c.l.b16 %v865
      %v979 = vunpack.c.l.b16 %v866
      %v980 = vunpack.c.l.b16 %v867
      %v981 = vunpack.c.l.b16 %v868
      %v982 = vunpack.c.l.b16 %v869
      %v983 = vunpack.c.l.b16 %v870
      %v984 = vunpack.c.l.b16 %v871
      %v985 = vunpack.c.l.b16 %v872
      %v986 = vunpack.c.l.b16 %v873
      %v987 = vunpack.c.l.b16 %v874
      %v988 = vunpack.c.l.b16 %v875
      %v989 = vpack.c.b16 %v978, %v977
      %v990 = vpack.c.b16 %v980, %v979
      %v991 = vpack.c.b16 %v982, %v981
      %v992 = vpack.c.b16 %v984, %v983
      %v993 = vpack.c.b16 %v986, %v985
      %v994 = vpack.c.b16 %v988, %v987
      %1001 = vmatprep.subr.bf16.mxu0 0
      %1002 = vmatpush1.bf16.msra.mxu0 %v989
      %1003 = vmatprep.subr.bf16.mxu0 0
      %1004 = vmatpush1.bf16.msra.mxu0 %v990
      %1005 = vmatprep.subr.bf16.mxu0 0
      %1006 = vmatpush1.bf16.msra.mxu0 %v991
      %1007 = vmatprep.subr.bf16.mxu0 0
      %1008 = vmatpush1.bf16.msra.mxu0 %v992
      %1009 = vmatprep.subr.bf16.mxu0 0
      %1010 = vmatpush1.bf16.msra.mxu0 %v993
      %1011 = vmatprep.subr.bf16.mxu0 0
      %1012 = vmatpush1.bf16.msra.mxu0 %v994
      %1013 = vmatprep.subr.bf16.mxu0 0
      %1014 = vmatpush1.bf16.msra.mxu0 0
      %1015 = vmatprep.subr.bf16.mxu0 0
      %1016 = vmatpush1.bf16.msra.mxu0 0
      %1017 = vmatprep.subr.bf16.mxu0 0
      %1018 = vmatpush1.bf16.msra.mxu0 0
      %1019 = vmatprep.subr.bf16.mxu0 0
      %1020 = vmatpush1.bf16.msra.mxu0 0
      %1021 = vmatprep.subr.bf16.mxu0 0
      %1022 = vmatpush1.bf16.msra.mxu0 0
      %1023 = vmatprep.subr.bf16.mxu0 0
      %1024 = vmatpush1.bf16.msra.mxu0 0
      %1025 = vmatprep.subr.bf16.mxu0 0
      %1026 = vmatpush1.bf16.msra.mxu0 0
      %1027 = vmatprep.subr.bf16.mxu0 0
      %1028 = vmatpush1.bf16.msra.mxu0 0
      %1029 = vmatprep.subr.bf16.mxu0 0
      %1030 = vmatpush1.bf16.msra.mxu0 0
      %1031 = vmatprep.subr.bf16.mxu0 0
      %1032 = vmatpush1.bf16.msra.mxu0 0
      %1033 = vmatprep.mubr.bf16.mxu0 0
      %1034 = vmatmul.mubr.bf16.gmra.mrb[0].mxu0 %v532
      %v1035 = vpop.f32.mrb[0].mxu0
      %v1036 = vadd.f32 %v960, %v1035
      %v1037 = vpop.f32.mrb[0].mxu0
      %v1038 = vpop.f32.mrb[0].mxu0
      %v1039 = vpop.f32.mrb[0].mxu0
      %1040 = vdwg.mxu0
      %s1041 = scalar_lea.vmem %s1, 336
      %v1042 = vld [vmem:[%s1041] sm:$0xf]
      %v1043 = vld [vmem:[%s1041 + $0x4] sm:$0xf]
      %v1044 = vld [vmem:[%s1041 + $0x8] sm:$0xf]
      %v1045 = vld [vmem:[%s1041 + $0xc] sm:$0xf]
      %v1046 = vld [vmem:[%s1041 + $0x10] sm:$0xf]
      %v1047 = vld [vmem:[%s1041 + $0x14] sm:$0xf]
      %v1048 = vld [vmem:[%s1041 + $0x18] sm:$0xf]
      %v1049 = vld [vmem:[%s1041 + $0x1c] sm:$0xf]
      %v1050 = vld [vmem:[%s1041 + $0x20] sm:$0xf]
      %v1051 = vld [vmem:[%s1041 + $0x24] sm:$0xf]
      %v1052 = vld [vmem:[%s1041 + $0x28] sm:$0xf]
      %v1053 = vld [vmem:[%s1041 + $0x2c] sm:$0xf]
      %v1066 = vunpack.c.l.b16 %v1042
      %v1067 = vunpack.c.l.b16 %v1043
      %v1068 = vunpack.c.l.b16 %v1044
      %v1069 = vunpack.c.l.b16 %v1045
      %v1070 = vunpack.c.l.b16 %v1046
      %v1071 = vunpack.c.l.b16 %v1047
      %v1072 = vunpack.c.l.b16 %v1048
      %v1073 = vunpack.c.l.b16 %v1049
      %v1074 = vunpack.c.l.b16 %v1050
      %v1075 = vunpack.c.l.b16 %v1051
      %v1076 = vunpack.c.l.b16 %v1052
      %v1077 = vunpack.c.l.b16 %v1053
      %v1078 = vpack.c.b16 %v1067, %v1066
      %v1079 = vpack.c.b16 %v1069, %v1068
      %v1080 = vpack.c.b16 %v1071, %v1070
      %v1081 = vpack.c.b16 %v1073, %v1072
      %v1082 = vpack.c.b16 %v1075, %v1074
      %v1083 = vpack.c.b16 %v1077, %v1076
      %1090 = vmatprep.subr.bf16.mxu0 0
      %1091 = vmatpush1.bf16.msra.mxu0 %v1078
      %1092 = vmatprep.subr.bf16.mxu0 0
      %1093 = vmatpush1.bf16.msra.mxu0 %v1079
      %1094 = vmatprep.subr.bf16.mxu0 0
      %1095 = vmatpush1.bf16.msra.mxu0 %v1080
      %1096 = vmatprep.subr.bf16.mxu0 0
      %1097 = vmatpush1.bf16.msra.mxu0 %v1081
      %1098 = vmatprep.subr.bf16.mxu0 0
      %1099 = vmatpush1.bf16.msra.mxu0 %v1082
      %1100 = vmatprep.subr.bf16.mxu0 0
      %1101 = vmatpush1.bf16.msra.mxu0 %v1083
      %1102 = vmatprep.subr.bf16.mxu0 0
      %1103 = vmatpush1.bf16.msra.mxu0 0
      %1104 = vmatprep.subr.bf16.mxu0 0
      %1105 = vmatpush1.bf16.msra.mxu0 0
      %1106 = vmatprep.subr.bf16.mxu0 0
      %1107 = vmatpush1.bf16.msra.mxu0 0
      %1108 = vmatprep.subr.bf16.mxu0 0
      %1109 = vmatpush1.bf16.msra.mxu0 0
      %1110 = vmatprep.subr.bf16.mxu0 0
      %1111 = vmatpush1.bf16.msra.mxu0 0
      %1112 = vmatprep.subr.bf16.mxu0 0
      %1113 = vmatpush1.bf16.msra.mxu0 0
      %1114 = vmatprep.subr.bf16.mxu0 0
      %1115 = vmatpush1.bf16.msra.mxu0 0
      %1116 = vmatprep.subr.bf16.mxu0 0
      %1117 = vmatpush1.bf16.msra.mxu0 0
      %1118 = vmatprep.subr.bf16.mxu0 0
      %1119 = vmatpush1.bf16.msra.mxu0 0
      %1120 = vmatprep.subr.bf16.mxu0 0
      %1121 = vmatpush1.bf16.msra.mxu0 0
      %1122 = vmatprep.mubr.bf16.mxu0 0
      %1123 = vmatmul.mubr.bf16.gmra.mrb[0].mxu0 %v624
      %v1124 = vpop.f32.mrb[0].mxu0
      %v1125 = vadd.f32 0.0, %v1124
      %v1126 = vpop.f32.mrb[0].mxu0
      %v1127 = vpop.f32.mrb[0].mxu0
      %v1128 = vpop.f32.mrb[0].mxu0
      %1129 = vdwg.mxu0
      %v1130 = vadd.f32 %v1036, %v1125
      %s1131 = scalar_lea.vmem %s1, 384
      %v1132 = vld [vmem:[%s1131] sm:$0xf]
      %v1133 = vld [vmem:[%s1131 + $0x4] sm:$0xf]
      %v1134 = vld [vmem:[%s1131 + $0x8] sm:$0xf]
      %v1135 = vld [vmem:[%s1131 + $0xc] sm:$0xf]
      %v1136 = vld [vmem:[%s1131 + $0x10] sm:$0xf]
      %v1137 = vld [vmem:[%s1131 + $0x14] sm:$0xf]
      %v1138 = vld [vmem:[%s1131 + $0x18] sm:$0xf]
      %v1139 = vld [vmem:[%s1131 + $0x1c] sm:$0xf]
      %v1140 = vld [vmem:[%s1131 + $0x20] sm:$0xf]
      %v1141 = vld [vmem:[%s1131 + $0x24] sm:$0xf]
      %v1142 = vld [vmem:[%s1131 + $0x28] sm:$0xf]
      %v1143 = vld [vmem:[%s1131 + $0x2c] sm:$0xf]
      %v1156 = vunpack.c.l.b16 %v1132
      %v1157 = vunpack.c.l.b16 %v1133
      %v1158 = vunpack.c.l.b16 %v1134
      %v1159 = vunpack.c.l.b16 %v1135
      %v1160 = vunpack.c.l.b16 %v1136
      %v1161 = vunpack.c.l.b16 %v1137
      %v1162 = vunpack.c.l.b16 %v1138
      %v1163 = vunpack.c.l.b16 %v1139
      %v1164 = vunpack.c.l.b16 %v1140
      %v1165 = vunpack.c.l.b16 %v1141
      %v1166 = vunpack.c.l.b16 %v1142
      %v1167 = vunpack.c.l.b16 %v1143
      %v1168 = vpack.c.b16 %v1157, %v1156
      %v1169 = vpack.c.b16 %v1159, %v1158
      %v1170 = vpack.c.b16 %v1161, %v1160
      %v1171 = vpack.c.b16 %v1163, %v1162
      %v1172 = vpack.c.b16 %v1165, %v1164
      %v1173 = vpack.c.b16 %v1167, %v1166
      %1180 = vmatprep.subr.bf16.mxu0 0
      %1181 = vmatpush1.bf16.msra.mxu0 %v1168
      %1182 = vmatprep.subr.bf16.mxu0 0
      %1183 = vmatpush1.bf16.msra.mxu0 %v1169
      %1184 = vmatprep.subr.bf16.mxu0 0
      %1185 = vmatpush1.bf16.msra.mxu0 %v1170
      %1186 = vmatprep.subr.bf16.mxu0 0
      %1187 = vmatpush1.bf16.msra.mxu0 %v1171
      %1188 = vmatprep.subr.bf16.mxu0 0
      %1189 = vmatpush1.bf16.msra.mxu0 %v1172
      %1190 = vmatprep.subr.bf16.mxu0 0
      %1191 = vmatpush1.bf16.msra.mxu0 %v1173
      %1192 = vmatprep.subr.bf16.mxu0 0
      %1193 = vmatpush1.bf16.msra.mxu0 0
      %1194 = vmatprep.subr.bf16.mxu0 0
      %1195 = vmatpush1.bf16.msra.mxu0 0
      %1196 = vmatprep.subr.bf16.mxu0 0
      %1197 = vmatpush1.bf16.msra.mxu0 0
      %1198 = vmatprep.subr.bf16.mxu0 0
      %1199 = vmatpush1.bf16.msra.mxu0 0
      %1200 = vmatprep.subr.bf16.mxu0 0
      %1201 = vmatpush1.bf16.msra.mxu0 0
      %1202 = vmatprep.subr.bf16.mxu0 0
      %1203 = vmatpush1.bf16.msra.mxu0 0
      %1204 = vmatprep.subr.bf16.mxu0 0
      %1205 = vmatpush1.bf16.msra.mxu0 0
      %1206 = vmatprep.subr.bf16.mxu0 0
      %1207 = vmatpush1.bf16.msra.mxu0 0
      %1208 = vmatprep.subr.bf16.mxu0 0
      %1209 = vmatpush1.bf16.msra.mxu0 0
      %1210 = vmatprep.subr.bf16.mxu0 0
      %1211 = vmatpush1.bf16.msra.mxu0 0
      %1212 = vmatprep.mubr.bf16.mxu0 0
      %1213 = vmatmul.mubr.bf16.gmra.mrb[0].mxu0 %v717
      %v1214 = vpop.f32.mrb[0].mxu0
      %v1215 = vadd.f32 0.0, %v1214
      %v1216 = vpop.f32.mrb[0].mxu0
      %v1217 = vpop.f32.mrb[0].mxu0
      %v1218 = vpop.f32.mrb[0].mxu0
      %1219 = vdwg.mxu0
      %v1220 = vadd.f32 %v1130, %v1215
      %s1221 = scalar_lea.vmem %s1, 432
      %v1222 = vld [vmem:[%s1221] sm:$0xf]
      %v1223 = vld [vmem:[%s1221 + $0x4] sm:$0xf]
      %v1224 = vld [vmem:[%s1221 + $0x8] sm:$0xf]
      %v1225 = vld [vmem:[%s1221 + $0xc] sm:$0xf]
      %v1226 = vld [vmem:[%s1221 + $0x10] sm:$0xf]
      %v1227 = vld [vmem:[%s1221 + $0x14] sm:$0xf]
      %v1228 = vld [vmem:[%s1221 + $0x18] sm:$0xf]
      %v1229 = vld [vmem:[%s1221 + $0x1c] sm:$0xf]
      %v1230 = vld [vmem:[%s1221 + $0x20] sm:$0xf]
      %v1231 = vld [vmem:[%s1221 + $0x24] sm:$0xf]
      %v1232 = vld [vmem:[%s1221 + $0x28] sm:$0xf]
      %v1233 = vld [vmem:[%s1221 + $0x2c] sm:$0xf]
      %v1246 = vunpack.c.l.b16 %v1222
      %v1247 = vunpack.c.l.b16 %v1223
      %v1248 = vunpack.c.l.b16 %v1224
      %v1249 = vunpack.c.l.b16 %v1225
      %v1250 = vunpack.c.l.b16 %v1226
      %v1251 = vunpack.c.l.b16 %v1227
      %v1252 = vunpack.c.l.b16 %v1228
      %v1253 = vunpack.c.l.b16 %v1229
      %v1254 = vunpack.c.l.b16 %v1230
      %v1255 = vunpack.c.l.b16 %v1231
      %v1256 = vunpack.c.l.b16 %v1232
      %v1257 = vunpack.c.l.b16 %v1233
      %v1258 = vpack.c.b16 %v1247, %v1246
      %v1259 = vpack.c.b16 %v1249, %v1248
      %v1260 = vpack.c.b16 %v1251, %v1250
      %v1261 = vpack.c.b16 %v1253, %v1252
      %v1262 = vpack.c.b16 %v1255, %v1254
      %v1263 = vpack.c.b16 %v1257, %v1256
      %1270 = vmatprep.subr.bf16.mxu0 0
      %1271 = vmatpush1.bf16.msra.mxu0 %v1258
      %1272 = vmatprep.subr.bf16.mxu0 0
      %1273 = vmatpush1.bf16.msra.mxu0 %v1259
      %1274 = vmatprep.subr.bf16.mxu0 0
      %1275 = vmatpush1.bf16.msra.mxu0 %v1260
      %1276 = vmatprep.subr.bf16.mxu0 0
      %1277 = vmatpush1.bf16.msra.mxu0 %v1261
      %1278 = vmatprep.subr.bf16.mxu0 0
      %1279 = vmatpush1.bf16.msra.mxu0 %v1262
      %1280 = vmatprep.subr.bf16.mxu0 0
      %1281 = vmatpush1.bf16.msra.mxu0 %v1263
      %1282 = vmatprep.subr.bf16.mxu0 0
      %1283 = vmatpush1.bf16.msra.mxu0 0
      %1284 = vmatprep.subr.bf16.mxu0 0
      %1285 = vmatpush1.bf16.msra.mxu0 0
      %1286 = vmatprep.subr.bf16.mxu0 0
      %1287 = vmatpush1.bf16.msra.mxu0 0
      %1288 = vmatprep.subr.bf16.mxu0 0
      %1289 = vmatpush1.bf16.msra.mxu0 0
      %1290 = vmatprep.subr.bf16.mxu0 0
      %1291 = vmatpush1.bf16.msra.mxu0 0
      %1292 = vmatprep.subr.bf16.mxu0 0
      %1293 = vmatpush1.bf16.msra.mxu0 0
      %1294 = vmatprep.subr.bf16.mxu0 0
      %1295 = vmatpush1.bf16.msra.mxu0 0
      %1296 = vmatprep.subr.bf16.mxu0 0
      %1297 = vmatpush1.bf16.msra.mxu0 0
      %1298 = vmatprep.subr.bf16.mxu0 0
      %1299 = vmatpush1.bf16.msra.mxu0 0
      %1300 = vmatprep.subr.bf16.mxu0 0
      %1301 = vmatpush1.bf16.msra.mxu0 0
      %1302 = vmatprep.mubr.bf16.mxu0 0
      %1303 = vmatmul.mubr.bf16.gmra.mrb[0].mxu0 %v820
      %v1304 = vpop.f32.mrb[0].mxu0
      %v1305 = vadd.f32 0.0, %v1304
      %v1306 = vpop.f32.mrb[0].mxu0
      %v1307 = vpop.f32.mrb[0].mxu0
      %v1308 = vpop.f32.mrb[0].mxu0
      %1309 = vdwg.mxu0
      %v1310 = vadd.f32 %v1220, %v1305
      %v1311 = vmax.f32 %v862, %v1310
      %1312 = vmatprep.subr.bf16.mxu0 0
      %1313 = vmatpush1.bf16.msra.mxu0 %v439
      %1314 = vmatprep.subr.bf16.mxu0 0
      %1315 = vmatpush1.bf16.msra.mxu0 %v440
      %1316 = vmatprep.subr.bf16.mxu0 0
      %1317 = vmatpush1.bf16.msra.mxu0 %v441
      %1318 = vmatprep.subr.bf16.mxu0 0
      %1319 = vmatpush1.bf16.msra.mxu0 %v442
      %1320 = vmatprep.subr.bf16.mxu0 0
      %1321 = vmatpush1.bf16.msra.mxu0 %v443
      %1322 = vmatprep.subr.bf16.mxu0 0
      %1323 = vmatpush1.bf16.msra.mxu0 %v444
      %1324 = vmatprep.subr.bf16.mxu0 0
      %1325 = vmatpush1.bf16.msra.mxu0 0
      %1326 = vmatprep.subr.bf16.mxu0 0
      %1327 = vmatpush1.bf16.msra.mxu0 0
      %1328 = vmatprep.subr.bf16.mxu0 0
      %1329 = vmatpush1.bf16.msra.mxu0 0
      %1330 = vmatprep.subr.bf16.mxu0 0
      %1331 = vmatpush1.bf16.msra.mxu0 0
      %1332 = vmatprep.subr.bf16.mxu0 0
      %1333 = vmatpush1.bf16.msra.mxu0 0
      %1334 = vmatprep.subr.bf16.mxu0 0
      %1335 = vmatpush1.bf16.msra.mxu0 0
      %1336 = vmatprep.subr.bf16.mxu0 0
      %1337 = vmatpush1.bf16.msra.mxu0 0
      %1338 = vmatprep.subr.bf16.mxu0 0
      %1339 = vmatpush1.bf16.msra.mxu0 0
      %1340 = vmatprep.subr.bf16.mxu0 0
      %1341 = vmatpush1.bf16.msra.mxu0 0
      %1342 = vmatprep.subr.bf16.mxu0 0
      %1343 = vmatpush1.bf16.msra.mxu0 0
      %1344 = vmatprep.mubr.bf16.mxu0 0
      %1345 = vmatmul.mubr.bf16.gmra.mrb[0].mxu0 %v624
      %v1346 = vpop.f32.mrb[0].mxu0
      %v1347 = vadd.f32 0.0, %v1346
      %v1348 = vpop.f32.mrb[0].mxu0
      %v1349 = vpop.f32.mrb[0].mxu0
      %v1350 = vpop.f32.mrb[0].mxu0
      %1351 = vdwg.mxu0
      %1352 = vmatprep.subr.bf16.mxu0 0
      %1353 = vmatpush1.bf16.msra.mxu0 %v519
      %1354 = vmatprep.subr.bf16.mxu0 0
      %1355 = vmatpush1.bf16.msra.mxu0 %v520
      %1356 = vmatprep.subr.bf16.mxu0 0
      %1357 = vmatpush1.bf16.msra.mxu0 %v521
      %1358 = vmatprep.subr.bf16.mxu0 0
      %1359 = vmatpush1.bf16.msra.mxu0 %v522
      %1360 = vmatprep.subr.bf16.mxu0 0
      %1361 = vmatpush1.bf16.msra.mxu0 %v523
      %1362 = vmatprep.subr.bf16.mxu0 0
      %1363 = vmatpush1.bf16.msra.mxu0 %v524
      %1364 = vmatprep.subr.bf16.mxu0 0
      %1365 = vmatpush1.bf16.msra.mxu0 0
      %1366 = vmatprep.subr.bf16.mxu0 0
      %1367 = vmatpush1.bf16.msra.mxu0 0
      %1368 = vmatprep.subr.bf16.mxu0 0
      %1369 = vmatpush1.bf16.msra.mxu0 0
      %1370 = vmatprep.subr.bf16.mxu0 0
      %1371 = vmatpush1.bf16.msra.mxu0 0
      %1372 = vmatprep.subr.bf16.mxu0 0
      %1373 = vmatpush1.bf16.msra.mxu0 0
      %1374 = vmatprep.subr.bf16.mxu0 0
      %1375 = vmatpush1.bf16.msra.mxu0 0
      %1376 = vmatprep.subr.bf16.mxu0 0
      %1377 = vmatpush1.bf16.msra.mxu0 0
      %1378 = vmatprep.subr.bf16.mxu0 0
      %1379 = vmatpush1.bf16.msra.mxu0 0
      %1380 = vmatprep.subr.bf16.mxu0 0
      %1381 = vmatpush1.bf16.msra.mxu0 0
      %1382 = vmatprep.subr.bf16.mxu0 0
      %1383 = vmatpush1.bf16.msra.mxu0 0
      %1384 = vmatprep.mubr.bf16.mxu0 0
      %1385 = vmatmul.mubr.bf16.gmra.mrb[0].mxu0 %v453
      %v1386 = vpop.f32.mrb[0].mxu0
      %v1387 = vadd.f32 %v1347, %v1386
      %v1388 = vpop.f32.mrb[0].mxu0
      %v1389 = vpop.f32.mrb[0].mxu0
      %v1390 = vpop.f32.mrb[0].mxu0
      %1391 = vdwg.mxu0
      %1392 = vmatprep.subr.bf16.mxu0 0
      %1393 = vmatpush1.bf16.msra.mxu0 %v611
      %1394 = vmatprep.subr.bf16.mxu0 0
      %1395 = vmatpush1.bf16.msra.mxu0 %v612
      %1396 = vmatprep.subr.bf16.mxu0 0
      %1397 = vmatpush1.bf16.msra.mxu0 %v613
      %1398 = vmatprep.subr.bf16.mxu0 0
      %1399 = vmatpush1.bf16.msra.mxu0 %v614
      %1400 = vmatprep.subr.bf16.mxu0 0
      %1401 = vmatpush1.bf16.msra.mxu0 %v615
      %1402 = vmatprep.subr.bf16.mxu0 0
      %1403 = vmatpush1.bf16.msra.mxu0 %v616
      %1404 = vmatprep.subr.bf16.mxu0 0
      %1405 = vmatpush1.bf16.msra.mxu0 0
      %1406 = vmatprep.subr.bf16.mxu0 0
      %1407 = vmatpush1.bf16.msra.mxu0 0
      %1408 = vmatprep.subr.bf16.mxu0 0
      %1409 = vmatpush1.bf16.msra.mxu0 0
      %1410 = vmatprep.subr.bf16.mxu0 0
      %1411 = vmatpush1.bf16.msra.mxu0 0
      %1412 = vmatprep.subr.bf16.mxu0 0
      %1413 = vmatpush1.bf16.msra.mxu0 0
      %1414 = vmatprep.subr.bf16.mxu0 0
      %1415 = vmatpush1.bf16.msra.mxu0 0
      %1416 = vmatprep.subr.bf16.mxu0 0
      %1417 = vmatpush1.bf16.msra.mxu0 0
      %1418 = vmatprep.subr.bf16.mxu0 0
      %1419 = vmatpush1.bf16.msra.mxu0 0
      %1420 = vmatprep.subr.bf16.mxu0 0
      %1421 = vmatpush1.bf16.msra.mxu0 0
      %1422 = vmatprep.subr.bf16.mxu0 0
      %1423 = vmatpush1.bf16.msra.mxu0 0
      %1424 = vmatprep.mubr.bf16.mxu0 0
      %1425 = vmatmul.mubr.bf16.gmra.mrb[0].mxu0 %v717
      %v1426 = vpop.f32.mrb[0].mxu0
      %v1427 = vadd.f32 0.0, %v1426
      %v1428 = vpop.f32.mrb[0].mxu0
      %v1429 = vpop.f32.mrb[0].mxu0
      %v1430 = vpop.f32.mrb[0].mxu0
      %1431 = vdwg.mxu0
      %v1432 = vadd.f32 %v1387, %v1427
      %1433 = vmatprep.subr.bf16.mxu0 0
      %1434 = vmatpush1.bf16.msra.mxu0 %v704
      %1435 = vmatprep.subr.bf16.mxu0 0
      %1436 = vmatpush1.bf16.msra.mxu0 %v705
      %1437 = vmatprep.subr.bf16.mxu0 0
      %1438 = vmatpush1.bf16.msra.mxu0 %v706
      %1439 = vmatprep.subr.bf16.mxu0 0
      %1440 = vmatpush1.bf16.msra.mxu0 %v707
      %1441 = vmatprep.subr.bf16.mxu0 0
      %1442 = vmatpush1.bf16.msra.mxu0 %v708
      %1443 = vmatprep.subr.bf16.mxu0 0
      %1444 = vmatpush1.bf16.msra.mxu0 %v709
      %1445 = vmatprep.subr.bf16.mxu0 0
      %1446 = vmatpush1.bf16.msra.mxu0 0
      %1447 = vmatprep.subr.bf16.mxu0 0
      %1448 = vmatpush1.bf16.msra.mxu0 0
      %1449 = vmatprep.subr.bf16.mxu0 0
      %1450 = vmatpush1.bf16.msra.mxu0 0
      %1451 = vmatprep.subr.bf16.mxu0 0
      %1452 = vmatpush1.bf16.msra.mxu0 0
      %1453 = vmatprep.subr.bf16.mxu0 0
      %1454 = vmatpush1.bf16.msra.mxu0 0
      %1455 = vmatprep.subr.bf16.mxu0 0
      %1456 = vmatpush1.bf16.msra.mxu0 0
      %1457 = vmatprep.subr.bf16.mxu0 0
      %1458 = vmatpush1.bf16.msra.mxu0 0
      %1459 = vmatprep.subr.bf16.mxu0 0
      %1460 = vmatpush1.bf16.msra.mxu0 0
      %1461 = vmatprep.subr.bf16.mxu0 0
      %1462 = vmatpush1.bf16.msra.mxu0 0
      %1463 = vmatprep.subr.bf16.mxu0 0
      %1464 = vmatpush1.bf16.msra.mxu0 0
      %1465 = vmatprep.mubr.bf16.mxu0 0
      %1466 = vmatmul.mubr.bf16.gmra.mrb[0].mxu0 %v820
      %v1467 = vpop.f32.mrb[0].mxu0
      %v1468 = vadd.f32 0.0, %v1467
      %v1469 = vpop.f32.mrb[0].mxu0
      %v1470 = vpop.f32.mrb[0].mxu0
      %v1471 = vpop.f32.mrb[0].mxu0
      %1472 = vdwg.mxu0
      %v1473 = vadd.f32 %v1432, %v1468
      %v1475 = vunpack.c.l.b16 %v387
      %v1476 = vpack.c.b16 %v1475, %v1475
      %v1478 = vshrl.u32 %v1476, 16
      %v1480 = vshll.u32 %v1476, 16
      %v1482 = vrot.slane %v1480, 1
      %v1483 = vor.u32 %v1478, %v1482
      %v1485 = vsel %vm451, %v1483, 0
      %1487 = vmatprep.subr.bf16.mxu0 0
      %1488 = vmatpush1.bf16.msra.mxu0 %v807
      %1489 = vmatprep.subr.bf16.mxu0 0
      %1490 = vmatpush1.bf16.msra.mxu0 %v808
      %1491 = vmatprep.subr.bf16.mxu0 0
      %1492 = vmatpush1.bf16.msra.mxu0 %v809
      %1493 = vmatprep.subr.bf16.mxu0 0
      %1494 = vmatpush1.bf16.msra.mxu0 %v810
      %1495 = vmatprep.subr.bf16.mxu0 0
      %1496 = vmatpush1.bf16.msra.mxu0 %v811
      %1497 = vmatprep.subr.bf16.mxu0 0
      %1498 = vmatpush1.bf16.msra.mxu0 %v812
      %1499 = vmatprep.subr.bf16.mxu0 0
      %1500 = vmatpush1.bf16.msra.mxu0 0
      %1501 = vmatprep.subr.bf16.mxu0 0
      %1502 = vmatpush1.bf16.msra.mxu0 0
      %1503 = vmatprep.subr.bf16.mxu0 0
      %1504 = vmatpush1.bf16.msra.mxu0 0
      %1505 = vmatprep.subr.bf16.mxu0 0
      %1506 = vmatpush1.bf16.msra.mxu0 0
      %1507 = vmatprep.subr.bf16.mxu0 0
      %1508 = vmatpush1.bf16.msra.mxu0 0
      %1509 = vmatprep.subr.bf16.mxu0 0
      %1510 = vmatpush1.bf16.msra.mxu0 0
      %1511 = vmatprep.subr.bf16.mxu0 0
      %1512 = vmatpush1.bf16.msra.mxu0 0
      %1513 = vmatprep.subr.bf16.mxu0 0
      %1514 = vmatpush1.bf16.msra.mxu0 0
      %1515 = vmatprep.subr.bf16.mxu0 0
      %1516 = vmatpush1.bf16.msra.mxu0 0
      %1517 = vmatprep.subr.bf16.mxu0 0
      %1518 = vmatpush1.bf16.msra.mxu0 0
      %1519 = vmatprep.mubr.bf16.mxu0 0
      %1520 = vmatmul.mubr.bf16.gmra.mrb[0].mxu0 %v1485
      %v1521 = vpop.f32.mrb[0].mxu0
      %v1522 = vadd.f32 0.0, %v1521
      %v1523 = vpop.f32.mrb[0].mxu0
      %v1524 = vpop.f32.mrb[0].mxu0
      %v1525 = vpop.f32.mrb[0].mxu0
      %1526 = vdwg.mxu0
      %v1527 = vadd.f32 %v1473, %v1522
      %v1528 = vmax.f32 %v1311, %v1527
      %1529 = vmatprep.subr.bf16.mxu0 0
      %1530 = vmatpush1.bf16.msra.mxu0 %v913
      %1531 = vmatprep.subr.bf16.mxu0 0
      %1532 = vmatpush1.bf16.msra.mxu0 %v914
      %1533 = vmatprep.subr.bf16.mxu0 0
      %1534 = vmatpush1.bf16.msra.mxu0 %v915
      %1535 = vmatprep.subr.bf16.mxu0 0
      %1536 = vmatpush1.bf16.msra.mxu0 %v916
      %1537 = vmatprep.subr.bf16.mxu0 0
      %1538 = vmatpush1.bf16.msra.mxu0 %v917
      %1539 = vmatprep.subr.bf16.mxu0 0
      %1540 = vmatpush1.bf16.msra.mxu0 %v918
      %1541 = vmatprep.subr.bf16.mxu0 0
      %1542 = vmatpush1.bf16.msra.mxu0 0
      %1543 = vmatprep.subr.bf16.mxu0 0
      %1544 = vmatpush1.bf16.msra.mxu0 0
      %1545 = vmatprep.subr.bf16.mxu0 0
      %1546 = vmatpush1.bf16.msra.mxu0 0
      %1547 = vmatprep.subr.bf16.mxu0 0
      %1548 = vmatpush1.bf16.msra.mxu0 0
      %1549 = vmatprep.subr.bf16.mxu0 0
      %1550 = vmatpush1.bf16.msra.mxu0 0
      %1551 = vmatprep.subr.bf16.mxu0 0
      %1552 = vmatpush1.bf16.msra.mxu0 0
      %1553 = vmatprep.subr.bf16.mxu0 0
      %1554 = vmatpush1.bf16.msra.mxu0 0
      %1555 = vmatprep.subr.bf16.mxu0 0
      %1556 = vmatpush1.bf16.msra.mxu0 0
      %1557 = vmatprep.subr.bf16.mxu0 0
      %1558 = vmatpush1.bf16.msra.mxu0 0
      %1559 = vmatprep.subr.bf16.mxu0 0
      %1560 = vmatpush1.bf16.msra.mxu0 0
      %1561 = vmatprep.mubr.bf16.mxu0 0
      %1562 = vmatmul.mubr.bf16.gmra.mrb[0].mxu0 %v624
      %v1563 = vpop.f32.mrb[0].mxu0
      %v1564 = vadd.f32 0.0, %v1563
      %v1565 = vpop.f32.mrb[0].mxu0
      %v1566 = vpop.f32.mrb[0].mxu0
      %v1567 = vpop.f32.mrb[0].mxu0
      %1568 = vdwg.mxu0
      %1569 = vmatprep.subr.bf16.mxu0 0
      %1570 = vmatpush1.bf16.msra.mxu0 %v989
      %1571 = vmatprep.subr.bf16.mxu0 0
      %1572 = vmatpush1.bf16.msra.mxu0 %v990
      %1573 = vmatprep.subr.bf16.mxu0 0
      %1574 = vmatpush1.bf16.msra.mxu0 %v991
      %1575 = vmatprep.subr.bf16.mxu0 0
      %1576 = vmatpush1.bf16.msra.mxu0 %v992
      %1577 = vmatprep.subr.bf16.mxu0 0
      %1578 = vmatpush1.bf16.msra.mxu0 %v993
      %1579 = vmatprep.subr.bf16.mxu0 0
      %1580 = vmatpush1.bf16.msra.mxu0 %v994
      %1581 = vmatprep.subr.bf16.mxu0 0
      %1582 = vmatpush1.bf16.msra.mxu0 0
      %1583 = vmatprep.subr.bf16.mxu0 0
      %1584 = vmatpush1.bf16.msra.mxu0 0
      %1585 = vmatprep.subr.bf16.mxu0 0
      %1586 = vmatpush1.bf16.msra.mxu0 0
      %1587 = vmatprep.subr.bf16.mxu0 0
      %1588 = vmatpush1.bf16.msra.mxu0 0
      %1589 = vmatprep.subr.bf16.mxu0 0
      %1590 = vmatpush1.bf16.msra.mxu0 0
      %1591 = vmatprep.subr.bf16.mxu0 0
      %1592 = vmatpush1.bf16.msra.mxu0 0
      %1593 = vmatprep.subr.bf16.mxu0 0
      %1594 = vmatpush1.bf16.msra.mxu0 0
      %1595 = vmatprep.subr.bf16.mxu0 0
      %1596 = vmatpush1.bf16.msra.mxu0 0
      %1597 = vmatprep.subr.bf16.mxu0 0
      %1598 = vmatpush1.bf16.msra.mxu0 0
      %1599 = vmatprep.subr.bf16.mxu0 0
      %1600 = vmatpush1.bf16.msra.mxu0 0
      %1601 = vmatprep.mubr.bf16.mxu0 0
      %1602 = vmatmul.mubr.bf16.gmra.mrb[0].mxu0 %v453
      %v1603 = vpop.f32.mrb[0].mxu0
      %v1604 = vadd.f32 %v1564, %v1603
      %v1605 = vpop.f32.mrb[0].mxu0
      %v1606 = vpop.f32.mrb[0].mxu0
      %v1607 = vpop.f32.mrb[0].mxu0
      %1608 = vdwg.mxu0
      %1609 = vmatprep.subr.bf16.mxu0 0
      %1610 = vmatpush1.bf16.msra.mxu0 %v1078
      %1611 = vmatprep.subr.bf16.mxu0 0
      %1612 = vmatpush1.bf16.msra.mxu0 %v1079
      %1613 = vmatprep.subr.bf16.mxu0 0
      %1614 = vmatpush1.bf16.msra.mxu0 %v1080
      %1615 = vmatprep.subr.bf16.mxu0 0
      %1616 = vmatpush1.bf16.msra.mxu0 %v1081
      %1617 = vmatprep.subr.bf16.mxu0 0
      %1618 = vmatpush1.bf16.msra.mxu0 %v1082
      %1619 = vmatprep.subr.bf16.mxu0 0
      %1620 = vmatpush1.bf16.msra.mxu0 %v1083
      %1621 = vmatprep.subr.bf16.mxu0 0
      %1622 = vmatpush1.bf16.msra.mxu0 0
      %1623 = vmatprep.subr.bf16.mxu0 0
      %1624 = vmatpush1.bf16.msra.mxu0 0
      %1625 = vmatprep.subr.bf16.mxu0 0
      %1626 = vmatpush1.bf16.msra.mxu0 0
      %1627 = vmatprep.subr.bf16.mxu0 0
      %1628 = vmatpush1.bf16.msra.mxu0 0
      %1629 = vmatprep.subr.bf16.mxu0 0
      %1630 = vmatpush1.bf16.msra.mxu0 0
      %1631 = vmatprep.subr.bf16.mxu0 0
      %1632 = vmatpush1.bf16.msra.mxu0 0
      %1633 = vmatprep.subr.bf16.mxu0 0
      %1634 = vmatpush1.bf16.msra.mxu0 0
      %1635 = vmatprep.subr.bf16.mxu0 0
      %1636 = vmatpush1.bf16.msra.mxu0 0
      %1637 = vmatprep.subr.bf16.mxu0 0
      %1638 = vmatpush1.bf16.msra.mxu0 0
      %1639 = vmatprep.subr.bf16.mxu0 0
      %1640 = vmatpush1.bf16.msra.mxu0 0
      %1641 = vmatprep.mubr.bf16.mxu0 0
      %1642 = vmatmul.mubr.bf16.gmra.mrb[0].mxu0 %v717
      %v1643 = vpop.f32.mrb[0].mxu0
      %v1644 = vadd.f32 0.0, %v1643
      %v1645 = vpop.f32.mrb[0].mxu0
      %v1646 = vpop.f32.mrb[0].mxu0
      %v1647 = vpop.f32.mrb[0].mxu0
      %1648 = vdwg.mxu0
      %v1649 = vadd.f32 %v1604, %v1644
      %1650 = vmatprep.subr.bf16.mxu0 0
      %1651 = vmatpush1.bf16.msra.mxu0 %v1168
      %1652 = vmatprep.subr.bf16.mxu0 0
      %1653 = vmatpush1.bf16.msra.mxu0 %v1169
      %1654 = vmatprep.subr.bf16.mxu0 0
      %1655 = vmatpush1.bf16.msra.mxu0 %v1170
      %1656 = vmatprep.subr.bf16.mxu0 0
      %1657 = vmatpush1.bf16.msra.mxu0 %v1171
      %1658 = vmatprep.subr.bf16.mxu0 0
      %1659 = vmatpush1.bf16.msra.mxu0 %v1172
      %1660 = vmatprep.subr.bf16.mxu0 0
      %1661 = vmatpush1.bf16.msra.mxu0 %v1173
      %1662 = vmatprep.subr.bf16.mxu0 0
      %1663 = vmatpush1.bf16.msra.mxu0 0
      %1664 = vmatprep.subr.bf16.mxu0 0
      %1665 = vmatpush1.bf16.msra.mxu0 0
      %1666 = vmatprep.subr.bf16.mxu0 0
      %1667 = vmatpush1.bf16.msra.mxu0 0
      %1668 = vmatprep.subr.bf16.mxu0 0
      %1669 = vmatpush1.bf16.msra.mxu0 0
      %1670 = vmatprep.subr.bf16.mxu0 0
      %1671 = vmatpush1.bf16.msra.mxu0 0
      %1672 = vmatprep.subr.bf16.mxu0 0
      %1673 = vmatpush1.bf16.msra.mxu0 0
      %1674 = vmatprep.subr.bf16.mxu0 0
      %1675 = vmatpush1.bf16.msra.mxu0 0
      %1676 = vmatprep.subr.bf16.mxu0 0
      %1677 = vmatpush1.bf16.msra.mxu0 0
      %1678 = vmatprep.subr.bf16.mxu0 0
      %1679 = vmatpush1.bf16.msra.mxu0 0
      %1680 = vmatprep.subr.bf16.mxu0 0
      %1681 = vmatpush1.bf16.msra.mxu0 0
      %1682 = vmatprep.mubr.bf16.mxu0 0
      %1683 = vmatmul.mubr.bf16.gmra.mrb[0].mxu0 %v820
      %v1684 = vpop.f32.mrb[0].mxu0
      %v1685 = vadd.f32 0.0, %v1684
      %v1686 = vpop.f32.mrb[0].mxu0
      %v1687 = vpop.f32.mrb[0].mxu0
      %v1688 = vpop.f32.mrb[0].mxu0
      %1689 = vdwg.mxu0
      %v1690 = vadd.f32 %v1649, %v1685
      %1691 = vmatprep.subr.bf16.mxu0 0
      %1692 = vmatpush1.bf16.msra.mxu0 %v1258
      %1693 = vmatprep.subr.bf16.mxu0 0
      %1694 = vmatpush1.bf16.msra.mxu0 %v1259
      %1695 = vmatprep.subr.bf16.mxu0 0
      %1696 = vmatpush1.bf16.msra.mxu0 %v1260
      %1697 = vmatprep.subr.bf16.mxu0 0
      %1698 = vmatpush1.bf16.msra.mxu0 %v1261
      %1699 = vmatprep.subr.bf16.mxu0 0
      %1700 = vmatpush1.bf16.msra.mxu0 %v1262
      %1701 = vmatprep.subr.bf16.mxu0 0
      %1702 = vmatpush1.bf16.msra.mxu0 %v1263
      %1703 = vmatprep.subr.bf16.mxu0 0
      %1704 = vmatpush1.bf16.msra.mxu0 0
      %1705 = vmatprep.subr.bf16.mxu0 0
      %1706 = vmatpush1.bf16.msra.mxu0 0
      %1707 = vmatprep.subr.bf16.mxu0 0
      %1708 = vmatpush1.bf16.msra.mxu0 0
      %1709 = vmatprep.subr.bf16.mxu0 0
      %1710 = vmatpush1.bf16.msra.mxu0 0
      %1711 = vmatprep.subr.bf16.mxu0 0
      %1712 = vmatpush1.bf16.msra.mxu0 0
      %1713 = vmatprep.subr.bf16.mxu0 0
      %1714 = vmatpush1.bf16.msra.mxu0 0
      %1715 = vmatprep.subr.bf16.mxu0 0
      %1716 = vmatpush1.bf16.msra.mxu0 0
      %1717 = vmatprep.subr.bf16.mxu0 0
      %1718 = vmatpush1.bf16.msra.mxu0 0
      %1719 = vmatprep.subr.bf16.mxu0 0
      %1720 = vmatpush1.bf16.msra.mxu0 0
      %1721 = vmatprep.subr.bf16.mxu0 0
      %1722 = vmatpush1.bf16.msra.mxu0 0
      %1723 = vmatprep.mubr.bf16.mxu0 0
      %1724 = vmatmul.mubr.bf16.gmra.mrb[0].mxu0 %v1485
      %v1725 = vpop.f32.mrb[0].mxu0
      %v1726 = vadd.f32 0.0, %v1725
      %v1727 = vpop.f32.mrb[0].mxu0
      %v1728 = vpop.f32.mrb[0].mxu0
      %v1729 = vpop.f32.mrb[0].mxu0
      %1730 = vdwg.mxu0
      %v1731 = vadd.f32 %v1690, %v1726
      %v1732 = vmax.f32 %v1528, %v1731
      %v1733 = vld [vmem:[%s2] sm:$0x1]
      %v1735 = vlaneseq
      %v1736 = vshrl.u32 %v1735, 7
      %v1737 = vsub.s32 0, %v1736
      %v1738 = vrot.slane %v1733, %v1737
      %v1740 = vadd.f32 %v1732, %v1738
      %v1741 = vmax.f32 %v1740, 0.0
      %v1742 = vpack.c.bf16 %v1741, %v1741
      %1743 = vmatprep.subr.bf16.mxu0 0
      %1744 = vmatpush1.bf16.msra.mxu0 %v439
      %1745 = vmatprep.subr.bf16.mxu0 0
      %1746 = vmatpush1.bf16.msra.mxu0 %v440
      %1747 = vmatprep.subr.bf16.mxu0 0
      %1748 = vmatpush1.bf16.msra.mxu0 %v441
      %1749 = vmatprep.subr.bf16.mxu0 0
      %1750 = vmatpush1.bf16.msra.mxu0 %v442
      %1751 = vmatprep.subr.bf16.mxu0 0
      %1752 = vmatpush1.bf16.msra.mxu0 %v443
      %1753 = vmatprep.subr.bf16.mxu0 0
      %1754 = vmatpush1.bf16.msra.mxu0 %v444
      %1755 = vmatprep.subr.bf16.mxu0 0
      %1756 = vmatpush1.bf16.msra.mxu0 0
      %1757 = vmatprep.subr.bf16.mxu0 0
      %1758 = vmatpush1.bf16.msra.mxu0 0
      %1759 = vmatprep.subr.bf16.mxu0 0
      %1760 = vmatpush1.bf16.msra.mxu0 0
      %1761 = vmatprep.subr.bf16.mxu0 0
      %1762 = vmatpush1.bf16.msra.mxu0 0
      %1763 = vmatprep.subr.bf16.mxu0 0
      %1764 = vmatpush1.bf16.msra.mxu0 0
      %1765 = vmatprep.subr.bf16.mxu0 0
      %1766 = vmatpush1.bf16.msra.mxu0 0
      %1767 = vmatprep.subr.bf16.mxu0 0
      %1768 = vmatpush1.bf16.msra.mxu0 0
      %1769 = vmatprep.subr.bf16.mxu0 0
      %1770 = vmatpush1.bf16.msra.mxu0 0
      %1771 = vmatprep.subr.bf16.mxu0 0
      %1772 = vmatpush1.bf16.msra.mxu0 0
      %1773 = vmatprep.subr.bf16.mxu0 0
      %1774 = vmatpush1.bf16.msra.mxu0 0
      %1775 = vmatprep.mubr.bf16.mxu0 0
      %1776 = vmatmul.mubr.bf16.gmra.mrb[0].mxu0 %v717
      %v1777 = vpop.f32.mrb[0].mxu0
      %v1778 = vadd.f32 0.0, %v1777
      %v1779 = vpop.f32.mrb[0].mxu0
      %v1780 = vpop.f32.mrb[0].mxu0
      %v1781 = vpop.f32.mrb[0].mxu0
      %1782 = vdwg.mxu0
      %1783 = vmatprep.subr.bf16.mxu0 0
      %1784 = vmatpush1.bf16.msra.mxu0 %v519
      %1785 = vmatprep.subr.bf16.mxu0 0
      %1786 = vmatpush1.bf16.msra.mxu0 %v520
      %1787 = vmatprep.subr.bf16.mxu0 0
      %1788 = vmatpush1.bf16.msra.mxu0 %v521
      %1789 = vmatprep.subr.bf16.mxu0 0
      %1790 = vmatpush1.bf16.msra.mxu0 %v522
      %1791 = vmatprep.subr.bf16.mxu0 0
      %1792 = vmatpush1.bf16.msra.mxu0 %v523
      %1793 = vmatprep.subr.bf16.mxu0 0
      %1794 = vmatpush1.bf16.msra.mxu0 %v524
      %1795 = vmatprep.subr.bf16.mxu0 0
      %1796 = vmatpush1.bf16.msra.mxu0 0
      %1797 = vmatprep.subr.bf16.mxu0 0
      %1798 = vmatpush1.bf16.msra.mxu0 0
      %1799 = vmatprep.subr.bf16.mxu0 0
      %1800 = vmatpush1.bf16.msra.mxu0 0
      %1801 = vmatprep.subr.bf16.mxu0 0
      %1802 = vmatpush1.bf16.msra.mxu0 0
      %1803 = vmatprep.subr.bf16.mxu0 0
      %1804 = vmatpush1.bf16.msra.mxu0 0
      %1805 = vmatprep.subr.bf16.mxu0 0
      %1806 = vmatpush1.bf16.msra.mxu0 0
      %1807 = vmatprep.subr.bf16.mxu0 0
      %1808 = vmatpush1.bf16.msra.mxu0 0
      %1809 = vmatprep.subr.bf16.mxu0 0
      %1810 = vmatpush1.bf16.msra.mxu0 0
      %1811 = vmatprep.subr.bf16.mxu0 0
      %1812 = vmatpush1.bf16.msra.mxu0 0
      %1813 = vmatprep.subr.bf16.mxu0 0
      %1814 = vmatpush1.bf16.msra.mxu0 0
      %1815 = vmatprep.mubr.bf16.mxu0 0
      %1816 = vmatmul.mubr.bf16.gmra.mrb[0].mxu0 %v624
      %v1817 = vpop.f32.mrb[0].mxu0
      %v1818 = vadd.f32 %v1778, %v1817
      %v1819 = vpop.f32.mrb[0].mxu0
      %v1820 = vpop.f32.mrb[0].mxu0
      %v1821 = vpop.f32.mrb[0].mxu0
      %1822 = vdwg.mxu0
      %1823 = vmatprep.subr.bf16.mxu0 0
      %1824 = vmatpush1.bf16.msra.mxu0 %v611
      %1825 = vmatprep.subr.bf16.mxu0 0
      %1826 = vmatpush1.bf16.msra.mxu0 %v612
      %1827 = vmatprep.subr.bf16.mxu0 0
      %1828 = vmatpush1.bf16.msra.mxu0 %v613
      %1829 = vmatprep.subr.bf16.mxu0 0
      %1830 = vmatpush1.bf16.msra.mxu0 %v614
      %1831 = vmatprep.subr.bf16.mxu0 0
      %1832 = vmatpush1.bf16.msra.mxu0 %v615
      %1833 = vmatprep.subr.bf16.mxu0 0
      %1834 = vmatpush1.bf16.msra.mxu0 %v616
      %1835 = vmatprep.subr.bf16.mxu0 0
      %1836 = vmatpush1.bf16.msra.mxu0 0
      %1837 = vmatprep.subr.bf16.mxu0 0
      %1838 = vmatpush1.bf16.msra.mxu0 0
      %1839 = vmatprep.subr.bf16.mxu0 0
      %1840 = vmatpush1.bf16.msra.mxu0 0
      %1841 = vmatprep.subr.bf16.mxu0 0
      %1842 = vmatpush1.bf16.msra.mxu0 0
      %1843 = vmatprep.subr.bf16.mxu0 0
      %1844 = vmatpush1.bf16.msra.mxu0 0
      %1845 = vmatprep.subr.bf16.mxu0 0
      %1846 = vmatpush1.bf16.msra.mxu0 0
      %1847 = vmatprep.subr.bf16.mxu0 0
      %1848 = vmatpush1.bf16.msra.mxu0 0
      %1849 = vmatprep.subr.bf16.mxu0 0
      %1850 = vmatpush1.bf16.msra.mxu0 0
      %1851 = vmatprep.subr.bf16.mxu0 0
      %1852 = vmatpush1.bf16.msra.mxu0 0
      %1853 = vmatprep.subr.bf16.mxu0 0
      %1854 = vmatpush1.bf16.msra.mxu0 0
      %1855 = vmatprep.mubr.bf16.mxu0 0
      %1856 = vmatmul.mubr.bf16.gmra.mrb[0].mxu0 %v820
      %v1857 = vpop.f32.mrb[0].mxu0
      %v1858 = vadd.f32 0.0, %v1857
      %v1859 = vpop.f32.mrb[0].mxu0
      %v1860 = vpop.f32.mrb[0].mxu0
      %v1861 = vpop.f32.mrb[0].mxu0
      %1862 = vdwg.mxu0
      %v1863 = vadd.f32 %v1818, %v1858
      %1864 = vmatprep.subr.bf16.mxu0 0
      %1865 = vmatpush1.bf16.msra.mxu0 %v704
      %1866 = vmatprep.subr.bf16.mxu0 0
      %1867 = vmatpush1.bf16.msra.mxu0 %v705
      %1868 = vmatprep.subr.bf16.mxu0 0
      %1869 = vmatpush1.bf16.msra.mxu0 %v706
      %1870 = vmatprep.subr.bf16.mxu0 0
      %1871 = vmatpush1.bf16.msra.mxu0 %v707
      %1872 = vmatprep.subr.bf16.mxu0 0
      %1873 = vmatpush1.bf16.msra.mxu0 %v708
      %1874 = vmatprep.subr.bf16.mxu0 0
      %1875 = vmatpush1.bf16.msra.mxu0 %v709
      %1876 = vmatprep.subr.bf16.mxu0 0
      %1877 = vmatpush1.bf16.msra.mxu0 0
      %1878 = vmatprep.subr.bf16.mxu0 0
      %1879 = vmatpush1.bf16.msra.mxu0 0
      %1880 = vmatprep.subr.bf16.mxu0 0
      %1881 = vmatpush1.bf16.msra.mxu0 0
      %1882 = vmatprep.subr.bf16.mxu0 0
      %1883 = vmatpush1.bf16.msra.mxu0 0
      %1884 = vmatprep.subr.bf16.mxu0 0
      %1885 = vmatpush1.bf16.msra.mxu0 0
      %1886 = vmatprep.subr.bf16.mxu0 0
      %1887 = vmatpush1.bf16.msra.mxu0 0
      %1888 = vmatprep.subr.bf16.mxu0 0
      %1889 = vmatpush1.bf16.msra.mxu0 0
      %1890 = vmatprep.subr.bf16.mxu0 0
      %1891 = vmatpush1.bf16.msra.mxu0 0
      %1892 = vmatprep.subr.bf16.mxu0 0
      %1893 = vmatpush1.bf16.msra.mxu0 0
      %1894 = vmatprep.subr.bf16.mxu0 0
      %1895 = vmatpush1.bf16.msra.mxu0 0
      %1896 = vmatprep.mubr.bf16.mxu0 0
      %1897 = vmatmul.mubr.bf16.gmra.mrb[0].mxu0 %v1485
      %v1898 = vpop.f32.mrb[0].mxu0
      %v1899 = vadd.f32 0.0, %v1898
      %v1900 = vpop.f32.mrb[0].mxu0
      %v1901 = vpop.f32.mrb[0].mxu0
      %v1902 = vpop.f32.mrb[0].mxu0
      %1903 = vdwg.mxu0
      %v1904 = vadd.f32 %v1863, %v1899
      %v1906 = vunpack.c.l.b16 %v388
      %v1907 = vpack.c.b16 %v1906, %v1906
      %v1909 = vshrl.u32 %v1907, 16
      %v1911 = vshll.u32 %v1907, 16
      %v1913 = vrot.slane %v1911, 1
      %v1914 = vor.u32 %v1909, %v1913
      %v1916 = vsel %vm451, %v1914, 0
      %1918 = vmatprep.subr.bf16.mxu0 0
      %1919 = vmatpush1.bf16.msra.mxu0 %v807
      %1920 = vmatprep.subr.bf16.mxu0 0
      %1921 = vmatpush1.bf16.msra.mxu0 %v808
      %1922 = vmatprep.subr.bf16.mxu0 0
      %1923 = vmatpush1.bf16.msra.mxu0 %v809
      %1924 = vmatprep.subr.bf16.mxu0 0
      %1925 = vmatpush1.bf16.msra.mxu0 %v810
      %1926 = vmatprep.subr.bf16.mxu0 0
      %1927 = vmatpush1.bf16.msra.mxu0 %v811
      %1928 = vmatprep.subr.bf16.mxu0 0
      %1929 = vmatpush1.bf16.msra.mxu0 %v812
      %1930 = vmatprep.subr.bf16.mxu0 0
      %1931 = vmatpush1.bf16.msra.mxu0 0
      %1932 = vmatprep.subr.bf16.mxu0 0
      %1933 = vmatpush1.bf16.msra.mxu0 0
      %1934 = vmatprep.subr.bf16.mxu0 0
      %1935 = vmatpush1.bf16.msra.mxu0 0
      %1936 = vmatprep.subr.bf16.mxu0 0
      %1937 = vmatpush1.bf16.msra.mxu0 0
      %1938 = vmatprep.subr.bf16.mxu0 0
      %1939 = vmatpush1.bf16.msra.mxu0 0
      %1940 = vmatprep.subr.bf16.mxu0 0
      %1941 = vmatpush1.bf16.msra.mxu0 0
      %1942 = vmatprep.subr.bf16.mxu0 0
      %1943 = vmatpush1.bf16.msra.mxu0 0
      %1944 = vmatprep.subr.bf16.mxu0 0
      %1945 = vmatpush1.bf16.msra.mxu0 0
      %1946 = vmatprep.subr.bf16.mxu0 0
      %1947 = vmatpush1.bf16.msra.mxu0 0
      %1948 = vmatprep.subr.bf16.mxu0 0
      %1949 = vmatpush1.bf16.msra.mxu0 0
      %1950 = vmatprep.mubr.bf16.mxu0 0
      %1951 = vmatmul.mubr.bf16.gmra.mrb[0].mxu0 %v1916
      %v1952 = vpop.f32.mrb[0].mxu0
      %v1953 = vadd.f32 0.0, %v1952
      %v1954 = vpop.f32.mrb[0].mxu0
      %v1955 = vpop.f32.mrb[0].mxu0
      %v1956 = vpop.f32.mrb[0].mxu0
      %1957 = vdwg.mxu0
      %v1958 = vadd.f32 %v1904, %v1953
      %1959 = vmatprep.subr.bf16.mxu0 0
      %1960 = vmatpush1.bf16.msra.mxu0 %v913
      %1961 = vmatprep.subr.bf16.mxu0 0
      %1962 = vmatpush1.bf16.msra.mxu0 %v914
      %1963 = vmatprep.subr.bf16.mxu0 0
      %1964 = vmatpush1.bf16.msra.mxu0 %v915
      %1965 = vmatprep.subr.bf16.mxu0 0
      %1966 = vmatpush1.bf16.msra.mxu0 %v916
      %1967 = vmatprep.subr.bf16.mxu0 0
      %1968 = vmatpush1.bf16.msra.mxu0 %v917
      %1969 = vmatprep.subr.bf16.mxu0 0
      %1970 = vmatpush1.bf16.msra.mxu0 %v918
      %1971 = vmatprep.subr.bf16.mxu0 0
      %1972 = vmatpush1.bf16.msra.mxu0 0
      %1973 = vmatprep.subr.bf16.mxu0 0
      %1974 = vmatpush1.bf16.msra.mxu0 0
      %1975 = vmatprep.subr.bf16.mxu0 0
      %1976 = vmatpush1.bf16.msra.mxu0 0
      %1977 = vmatprep.subr.bf16.mxu0 0
      %1978 = vmatpush1.bf16.msra.mxu0 0
      %1979 = vmatprep.subr.bf16.mxu0 0
      %1980 = vmatpush1.bf16.msra.mxu0 0
      %1981 = vmatprep.subr.bf16.mxu0 0
      %1982 = vmatpush1.bf16.msra.mxu0 0
      %1983 = vmatprep.subr.bf16.mxu0 0
      %1984 = vmatpush1.bf16.msra.mxu0 0
      %1985 = vmatprep.subr.bf16.mxu0 0
      %1986 = vmatpush1.bf16.msra.mxu0 0
      %1987 = vmatprep.subr.bf16.mxu0 0
      %1988 = vmatpush1.bf16.msra.mxu0 0
      %1989 = vmatprep.subr.bf16.mxu0 0
      %1990 = vmatpush1.bf16.msra.mxu0 0
      %1991 = vmatprep.mubr.bf16.mxu0 0
      %1992 = vmatmul.mubr.bf16.gmra.mrb[0].mxu0 %v717
      %v1993 = vpop.f32.mrb[0].mxu0
      %v1994 = vadd.f32 0.0, %v1993
      %v1995 = vpop.f32.mrb[0].mxu0
      %v1996 = vpop.f32.mrb[0].mxu0
      %v1997 = vpop.f32.mrb[0].mxu0
      %1998 = vdwg.mxu0
      %1999 = vmatprep.subr.bf16.mxu0 0
      %2000 = vmatpush1.bf16.msra.mxu0 %v989
      %2001 = vmatprep.subr.bf16.mxu0 0
      %2002 = vmatpush1.bf16.msra.mxu0 %v990
      %2003 = vmatprep.subr.bf16.mxu0 0
      %2004 = vmatpush1.bf16.msra.mxu0 %v991
      %2005 = vmatprep.subr.bf16.mxu0 0
      %2006 = vmatpush1.bf16.msra.mxu0 %v992
      %2007 = vmatprep.subr.bf16.mxu0 0
      %2008 = vmatpush1.bf16.msra.mxu0 %v993
      %2009 = vmatprep.subr.bf16.mxu0 0
      %2010 = vmatpush1.bf16.msra.mxu0 %v994
      %2011 = vmatprep.subr.bf16.mxu0 0
      %2012 = vmatpush1.bf16.msra.mxu0 0
      %2013 = vmatprep.subr.bf16.mxu0 0
      %2014 = vmatpush1.bf16.msra.mxu0 0
      %2015 = vmatprep.subr.bf16.mxu0 0
      %2016 = vmatpush1.bf16.msra.mxu0 0
      %2017 = vmatprep.subr.bf16.mxu0 0
      %2018 = vmatpush1.bf16.msra.mxu0 0
      %2019 = vmatprep.subr.bf16.mxu0 0
      %2020 = vmatpush1.bf16.msra.mxu0 0
      %2021 = vmatprep.subr.bf16.mxu0 0
      %2022 = vmatpush1.bf16.msra.mxu0 0
      %2023 = vmatprep.subr.bf16.mxu0 0
      %2024 = vmatpush1.bf16.msra.mxu0 0
      %2025 = vmatprep.subr.bf16.mxu0 0
      %2026 = vmatpush1.bf16.msra.mxu0 0
      %2027 = vmatprep.subr.bf16.mxu0 0
      %2028 = vmatpush1.bf16.msra.mxu0 0
      %2029 = vmatprep.subr.bf16.mxu0 0
      %2030 = vmatpush1.bf16.msra.mxu0 0
      %2031 = vmatprep.mubr.bf16.mxu0 0
      %2032 = vmatmul.mubr.bf16.gmra.mrb[0].mxu0 %v624
      %v2033 = vpop.f32.mrb[0].mxu0
      %v2034 = vadd.f32 %v1994, %v2033
      %v2035 = vpop.f32.mrb[0].mxu0
      %v2036 = vpop.f32.mrb[0].mxu0
      %v2037 = vpop.f32.mrb[0].mxu0
      %2038 = vdwg.mxu0
      %2039 = vmatprep.subr.bf16.mxu0 0
      %2040 = vmatpush1.bf16.msra.mxu0 %v1078
      %2041 = vmatprep.subr.bf16.mxu0 0
      %2042 = vmatpush1.bf16.msra.mxu0 %v1079
      %2043 = vmatprep.subr.bf16.mxu0 0
      %2044 = vmatpush1.bf16.msra.mxu0 %v1080
      %2045 = vmatprep.subr.bf16.mxu0 0
      %2046 = vmatpush1.bf16.msra.mxu0 %v1081
      %2047 = vmatprep.subr.bf16.mxu0 0
      %2048 = vmatpush1.bf16.msra.mxu0 %v1082
      %2049 = vmatprep.subr.bf16.mxu0 0
      %2050 = vmatpush1.bf16.msra.mxu0 %v1083
      %2051 = vmatprep.subr.bf16.mxu0 0
      %2052 = vmatpush1.bf16.msra.mxu0 0
      %2053 = vmatprep.subr.bf16.mxu0 0
      %2054 = vmatpush1.bf16.msra.mxu0 0
      %2055 = vmatprep.subr.bf16.mxu0 0
      %2056 = vmatpush1.bf16.msra.mxu0 0
      %2057 = vmatprep.subr.bf16.mxu0 0
      %2058 = vmatpush1.bf16.msra.mxu0 0
      %2059 = vmatprep.subr.bf16.mxu0 0
      %2060 = vmatpush1.bf16.msra.mxu0 0
      %2061 = vmatprep.subr.bf16.mxu0 0
      %2062 = vmatpush1.bf16.msra.mxu0 0
      %2063 = vmatprep.subr.bf16.mxu0 0
      %2064 = vmatpush1.bf16.msra.mxu0 0
      %2065 = vmatprep.subr.bf16.mxu0 0
      %2066 = vmatpush1.bf16.msra.mxu0 0
      %2067 = vmatprep.subr.bf16.mxu0 0
      %2068 = vmatpush1.bf16.msra.mxu0 0
      %2069 = vmatprep.subr.bf16.mxu0 0
      %2070 = vmatpush1.bf16.msra.mxu0 0
      %2071 = vmatprep.mubr.bf16.mxu0 0
      %2072 = vmatmul.mubr.bf16.gmra.mrb[0].mxu0 %v820
      %v2073 = vpop.f32.mrb[0].mxu0
      %v2074 = vadd.f32 0.0, %v2073
      %v2075 = vpop.f32.mrb[0].mxu0
      %v2076 = vpop.f32.mrb[0].mxu0
      %v2077 = vpop.f32.mrb[0].mxu0
      %2078 = vdwg.mxu0
      %v2079 = vadd.f32 %v2034, %v2074
      %2080 = vmatprep.subr.bf16.mxu0 0
      %2081 = vmatpush1.bf16.msra.mxu0 %v1168
      %2082 = vmatprep.subr.bf16.mxu0 0
      %2083 = vmatpush1.bf16.msra.mxu0 %v1169
      %2084 = vmatprep.subr.bf16.mxu0 0
      %2085 = vmatpush1.bf16.msra.mxu0 %v1170
      %2086 = vmatprep.subr.bf16.mxu0 0
      %2087 = vmatpush1.bf16.msra.mxu0 %v1171
      %2088 = vmatprep.subr.bf16.mxu0 0
      %2089 = vmatpush1.bf16.msra.mxu0 %v1172
      %2090 = vmatprep.subr.bf16.mxu0 0
      %2091 = vmatpush1.bf16.msra.mxu0 %v1173
      %2092 = vmatprep.subr.bf16.mxu0 0
      %2093 = vmatpush1.bf16.msra.mxu0 0
      %2094 = vmatprep.subr.bf16.mxu0 0
      %2095 = vmatpush1.bf16.msra.mxu0 0
      %2096 = vmatprep.subr.bf16.mxu0 0
      %2097 = vmatpush1.bf16.msra.mxu0 0
      %2098 = vmatprep.subr.bf16.mxu0 0
      %2099 = vmatpush1.bf16.msra.mxu0 0
      %2100 = vmatprep.subr.bf16.mxu0 0
      %2101 = vmatpush1.bf16.msra.mxu0 0
      %2102 = vmatprep.subr.bf16.mxu0 0
      %2103 = vmatpush1.bf16.msra.mxu0 0
      %2104 = vmatprep.subr.bf16.mxu0 0
      %2105 = vmatpush1.bf16.msra.mxu0 0
      %2106 = vmatprep.subr.bf16.mxu0 0
      %2107 = vmatpush1.bf16.msra.mxu0 0
      %2108 = vmatprep.subr.bf16.mxu0 0
      %2109 = vmatpush1.bf16.msra.mxu0 0
      %2110 = vmatprep.subr.bf16.mxu0 0
      %2111 = vmatpush1.bf16.msra.mxu0 0
      %2112 = vmatprep.mubr.bf16.mxu0 0
      %2113 = vmatmul.mubr.bf16.gmra.mrb[0].mxu0 %v1485
      %v2114 = vpop.f32.mrb[0].mxu0
      %v2115 = vadd.f32 0.0, %v2114
      %v2116 = vpop.f32.mrb[0].mxu0
      %v2117 = vpop.f32.mrb[0].mxu0
      %v2118 = vpop.f32.mrb[0].mxu0
      %2119 = vdwg.mxu0
      %v2120 = vadd.f32 %v2079, %v2115
      %2121 = vmatprep.subr.bf16.mxu0 0
      %2122 = vmatpush1.bf16.msra.mxu0 %v1258
      %2123 = vmatprep.subr.bf16.mxu0 0
      %2124 = vmatpush1.bf16.msra.mxu0 %v1259
      %2125 = vmatprep.subr.bf16.mxu0 0
      %2126 = vmatpush1.bf16.msra.mxu0 %v1260
      %2127 = vmatprep.subr.bf16.mxu0 0
      %2128 = vmatpush1.bf16.msra.mxu0 %v1261
      %2129 = vmatprep.subr.bf16.mxu0 0
      %2130 = vmatpush1.bf16.msra.mxu0 %v1262
      %2131 = vmatprep.subr.bf16.mxu0 0
      %2132 = vmatpush1.bf16.msra.mxu0 %v1263
      %2133 = vmatprep.subr.bf16.mxu0 0
      %2134 = vmatpush1.bf16.msra.mxu0 0
      %2135 = vmatprep.subr.bf16.mxu0 0
      %2136 = vmatpush1.bf16.msra.mxu0 0
      %2137 = vmatprep.subr.bf16.mxu0 0
      %2138 = vmatpush1.bf16.msra.mxu0 0
      %2139 = vmatprep.subr.bf16.mxu0 0
      %2140 = vmatpush1.bf16.msra.mxu0 0
      %2141 = vmatprep.subr.bf16.mxu0 0
      %2142 = vmatpush1.bf16.msra.mxu0 0
      %2143 = vmatprep.subr.bf16.mxu0 0
      %2144 = vmatpush1.bf16.msra.mxu0 0
      %2145 = vmatprep.subr.bf16.mxu0 0
      %2146 = vmatpush1.bf16.msra.mxu0 0
      %2147 = vmatprep.subr.bf16.mxu0 0
      %2148 = vmatpush1.bf16.msra.mxu0 0
      %2149 = vmatprep.subr.bf16.mxu0 0
      %2150 = vmatpush1.bf16.msra.mxu0 0
      %2151 = vmatprep.subr.bf16.mxu0 0
      %2152 = vmatpush1.bf16.msra.mxu0 0
      %2153 = vmatprep.mubr.bf16.mxu0 0
      %2154 = vmatmul.mubr.bf16.gmra.mrb[0].mxu0 %v1916
      %v2155 = vpop.f32.mrb[0].mxu0
      %v2156 = vadd.f32 0.0, %v2155
      %v2157 = vpop.f32.mrb[0].mxu0
      %v2158 = vpop.f32.mrb[0].mxu0
      %v2159 = vpop.f32.mrb[0].mxu0
      %2160 = vdwg.mxu0
      %v2161 = vadd.f32 %v2120, %v2156
      %v2162 = vmax.f32 %v1958, %v2161
      %2163 = vmatprep.subr.bf16.mxu0 0
      %2164 = vmatpush1.bf16.msra.mxu0 %v439
      %2165 = vmatprep.subr.bf16.mxu0 0
      %2166 = vmatpush1.bf16.msra.mxu0 %v440
      %2167 = vmatprep.subr.bf16.mxu0 0
      %2168 = vmatpush1.bf16.msra.mxu0 %v441
      %2169 = vmatprep.subr.bf16.mxu0 0
      %2170 = vmatpush1.bf16.msra.mxu0 %v442
      %2171 = vmatprep.subr.bf16.mxu0 0
      %2172 = vmatpush1.bf16.msra.mxu0 %v443
      %2173 = vmatprep.subr.bf16.mxu0 0
      %2174 = vmatpush1.bf16.msra.mxu0 %v444
      %2175 = vmatprep.subr.bf16.mxu0 0
      %2176 = vmatpush1.bf16.msra.mxu0 0
      %2177 = vmatprep.subr.bf16.mxu0 0
      %2178 = vmatpush1.bf16.msra.mxu0 0
      %2179 = vmatprep.subr.bf16.mxu0 0
      %2180 = vmatpush1.bf16.msra.mxu0 0
      %2181 = vmatprep.subr.bf16.mxu0 0
      %2182 = vmatpush1.bf16.msra.mxu0 0
      %2183 = vmatprep.subr.bf16.mxu0 0
      %2184 = vmatpush1.bf16.msra.mxu0 0
      %2185 = vmatprep.subr.bf16.mxu0 0
      %2186 = vmatpush1.bf16.msra.mxu0 0
      %2187 = vmatprep.subr.bf16.mxu0 0
      %2188 = vmatpush1.bf16.msra.mxu0 0
      %2189 = vmatprep.subr.bf16.mxu0 0
      %2190 = vmatpush1.bf16.msra.mxu0 0
      %2191 = vmatprep.subr.bf16.mxu0 0
      %2192 = vmatpush1.bf16.msra.mxu0 0
      %2193 = vmatprep.subr.bf16.mxu0 0
      %2194 = vmatpush1.bf16.msra.mxu0 0
      %2195 = vmatprep.mubr.bf16.mxu0 0
      %2196 = vmatmul.mubr.bf16.gmra.mrb[0].mxu0 %v820
      %v2197 = vpop.f32.mrb[0].mxu0
      %v2198 = vadd.f32 0.0, %v2197
      %v2199 = vpop.f32.mrb[0].mxu0
      %v2200 = vpop.f32.mrb[0].mxu0
      %v2201 = vpop.f32.mrb[0].mxu0
      %2202 = vdwg.mxu0
      %2203 = vmatprep.subr.bf16.mxu0 0
      %2204 = vmatpush1.bf16.msra.mxu0 %v519
      %2205 = vmatprep.subr.bf16.mxu0 0
      %2206 = vmatpush1.bf16.msra.mxu0 %v520
      %2207 = vmatprep.subr.bf16.mxu0 0
      %2208 = vmatpush1.bf16.msra.mxu0 %v521
      %2209 = vmatprep.subr.bf16.mxu0 0
      %2210 = vmatpush1.bf16.msra.mxu0 %v522
      %2211 = vmatprep.subr.bf16.mxu0 0
      %2212 = vmatpush1.bf16.msra.mxu0 %v523
      %2213 = vmatprep.subr.bf16.mxu0 0
      %2214 = vmatpush1.bf16.msra.mxu0 %v524
      %2215 = vmatprep.subr.bf16.mxu0 0
      %2216 = vmatpush1.bf16.msra.mxu0 0
      %2217 = vmatprep.subr.bf16.mxu0 0
      %2218 = vmatpush1.bf16.msra.mxu0 0
      %2219 = vmatprep.subr.bf16.mxu0 0
      %2220 = vmatpush1.bf16.msra.mxu0 0
      %2221 = vmatprep.subr.bf16.mxu0 0
      %2222 = vmatpush1.bf16.msra.mxu0 0
      %2223 = vmatprep.subr.bf16.mxu0 0
      %2224 = vmatpush1.bf16.msra.mxu0 0
      %2225 = vmatprep.subr.bf16.mxu0 0
      %2226 = vmatpush1.bf16.msra.mxu0 0
      %2227 = vmatprep.subr.bf16.mxu0 0
      %2228 = vmatpush1.bf16.msra.mxu0 0
      %2229 = vmatprep.subr.bf16.mxu0 0
      %2230 = vmatpush1.bf16.msra.mxu0 0
      %2231 = vmatprep.subr.bf16.mxu0 0
      %2232 = vmatpush1.bf16.msra.mxu0 0
      %2233 = vmatprep.subr.bf16.mxu0 0
      %2234 = vmatpush1.bf16.msra.mxu0 0
      %2235 = vmatprep.mubr.bf16.mxu0 0
      %2236 = vmatmul.mubr.bf16.gmra.mrb[0].mxu0 %v717
      %v2237 = vpop.f32.mrb[0].mxu0
      %v2238 = vadd.f32 %v2198, %v2237
      %v2239 = vpop.f32.mrb[0].mxu0
      %v2240 = vpop.f32.mrb[0].mxu0
      %v2241 = vpop.f32.mrb[0].mxu0
      %2242 = vdwg.mxu0
      %2243 = vmatprep.subr.bf16.mxu0 0
      %2244 = vmatpush1.bf16.msra.mxu0 %v611
      %2245 = vmatprep.subr.bf16.mxu0 0
      %2246 = vmatpush1.bf16.msra.mxu0 %v612
      %2247 = vmatprep.subr.bf16.mxu0 0
      %2248 = vmatpush1.bf16.msra.mxu0 %v613
      %2249 = vmatprep.subr.bf16.mxu0 0
      %2250 = vmatpush1.bf16.msra.mxu0 %v614
      %2251 = vmatprep.subr.bf16.mxu0 0
      %2252 = vmatpush1.bf16.msra.mxu0 %v615
      %2253 = vmatprep.subr.bf16.mxu0 0
      %2254 = vmatpush1.bf16.msra.mxu0 %v616
      %2255 = vmatprep.subr.bf16.mxu0 0
      %2256 = vmatpush1.bf16.msra.mxu0 0
      %2257 = vmatprep.subr.bf16.mxu0 0
      %2258 = vmatpush1.bf16.msra.mxu0 0
      %2259 = vmatprep.subr.bf16.mxu0 0
      %2260 = vmatpush1.bf16.msra.mxu0 0
      %2261 = vmatprep.subr.bf16.mxu0 0
      %2262 = vmatpush1.bf16.msra.mxu0 0
      %2263 = vmatprep.subr.bf16.mxu0 0
      %2264 = vmatpush1.bf16.msra.mxu0 0
      %2265 = vmatprep.subr.bf16.mxu0 0
      %2266 = vmatpush1.bf16.msra.mxu0 0
      %2267 = vmatprep.subr.bf16.mxu0 0
      %2268 = vmatpush1.bf16.msra.mxu0 0
      %2269 = vmatprep.subr.bf16.mxu0 0
      %2270 = vmatpush1.bf16.msra.mxu0 0
      %2271 = vmatprep.subr.bf16.mxu0 0
      %2272 = vmatpush1.bf16.msra.mxu0 0
      %2273 = vmatprep.subr.bf16.mxu0 0
      %2274 = vmatpush1.bf16.msra.mxu0 0
      %2275 = vmatprep.mubr.bf16.mxu0 0
      %2276 = vmatmul.mubr.bf16.gmra.mrb[0].mxu0 %v1485
      %v2277 = vpop.f32.mrb[0].mxu0
      %v2278 = vadd.f32 0.0, %v2277
      %v2279 = vpop.f32.mrb[0].mxu0
      %v2280 = vpop.f32.mrb[0].mxu0
      %v2281 = vpop.f32.mrb[0].mxu0
      %2282 = vdwg.mxu0
      %v2283 = vadd.f32 %v2238, %v2278
      %2284 = vmatprep.subr.bf16.mxu0 0
      %2285 = vmatpush1.bf16.msra.mxu0 %v704
      %2286 = vmatprep.subr.bf16.mxu0 0
      %2287 = vmatpush1.bf16.msra.mxu0 %v705
      %2288 = vmatprep.subr.bf16.mxu0 0
      %2289 = vmatpush1.bf16.msra.mxu0 %v706
      %2290 = vmatprep.subr.bf16.mxu0 0
      %2291 = vmatpush1.bf16.msra.mxu0 %v707
      %2292 = vmatprep.subr.bf16.mxu0 0
      %2293 = vmatpush1.bf16.msra.mxu0 %v708
      %2294 = vmatprep.subr.bf16.mxu0 0
      %2295 = vmatpush1.bf16.msra.mxu0 %v709
      %2296 = vmatprep.subr.bf16.mxu0 0
      %2297 = vmatpush1.bf16.msra.mxu0 0
      %2298 = vmatprep.subr.bf16.mxu0 0
      %2299 = vmatpush1.bf16.msra.mxu0 0
      %2300 = vmatprep.subr.bf16.mxu0 0
      %2301 = vmatpush1.bf16.msra.mxu0 0
      %2302 = vmatprep.subr.bf16.mxu0 0
      %2303 = vmatpush1.bf16.msra.mxu0 0
      %2304 = vmatprep.subr.bf16.mxu0 0
      %2305 = vmatpush1.bf16.msra.mxu0 0
      %2306 = vmatprep.subr.bf16.mxu0 0
      %2307 = vmatpush1.bf16.msra.mxu0 0
      %2308 = vmatprep.subr.bf16.mxu0 0
      %2309 = vmatpush1.bf16.msra.mxu0 0
      %2310 = vmatprep.subr.bf16.mxu0 0
      %2311 = vmatpush1.bf16.msra.mxu0 0
      %2312 = vmatprep.subr.bf16.mxu0 0
      %2313 = vmatpush1.bf16.msra.mxu0 0
      %2314 = vmatprep.subr.bf16.mxu0 0
      %2315 = vmatpush1.bf16.msra.mxu0 0
      %2316 = vmatprep.mubr.bf16.mxu0 0
      %2317 = vmatmul.mubr.bf16.gmra.mrb[0].mxu0 %v1916
      %v2318 = vpop.f32.mrb[0].mxu0
      %v2319 = vadd.f32 0.0, %v2318
      %v2320 = vpop.f32.mrb[0].mxu0
      %v2321 = vpop.f32.mrb[0].mxu0
      %v2322 = vpop.f32.mrb[0].mxu0
      %2323 = vdwg.mxu0
      %v2324 = vadd.f32 %v2283, %v2319
      %v2326 = vunpack.c.l.b16 %v389
      %v2327 = vpack.c.b16 %v2326, %v2326
      %v2329 = vshrl.u32 %v2327, 16
      %v2331 = vshll.u32 %v2327, 16
      %v2333 = vrot.slane %v2331, 1
      %v2334 = vor.u32 %v2329, %v2333
      %v2336 = vsel %vm451, %v2334, 0
      %2338 = vmatprep.subr.bf16.mxu0 0
      %2339 = vmatpush1.bf16.msra.mxu0 %v807
      %2340 = vmatprep.subr.bf16.mxu0 0
      %2341 = vmatpush1.bf16.msra.mxu0 %v808
      %2342 = vmatprep.subr.bf16.mxu0 0
      %2343 = vmatpush1.bf16.msra.mxu0 %v809
      %2344 = vmatprep.subr.bf16.mxu0 0
      %2345 = vmatpush1.bf16.msra.mxu0 %v810
      %2346 = vmatprep.subr.bf16.mxu0 0
      %2347 = vmatpush1.bf16.msra.mxu0 %v811
      %2348 = vmatprep.subr.bf16.mxu0 0
      %2349 = vmatpush1.bf16.msra.mxu0 %v812
      %2350 = vmatprep.subr.bf16.mxu0 0
      %2351 = vmatpush1.bf16.msra.mxu0 0
      %2352 = vmatprep.subr.bf16.mxu0 0
      %2353 = vmatpush1.bf16.msra.mxu0 0
      %2354 = vmatprep.subr.bf16.mxu0 0
      %2355 = vmatpush1.bf16.msra.mxu0 0
      %2356 = vmatprep.subr.bf16.mxu0 0
      %2357 = vmatpush1.bf16.msra.mxu0 0
      %2358 = vmatprep.subr.bf16.mxu0 0
      %2359 = vmatpush1.bf16.msra.mxu0 0
      %2360 = vmatprep.subr.bf16.mxu0 0
      %2361 = vmatpush1.bf16.msra.mxu0 0
      %2362 = vmatprep.subr.bf16.mxu0 0
      %2363 = vmatpush1.bf16.msra.mxu0 0
      %2364 = vmatprep.subr.bf16.mxu0 0
      %2365 = vmatpush1.bf16.msra.mxu0 0
      %2366 = vmatprep.subr.bf16.mxu0 0
      %2367 = vmatpush1.bf16.msra.mxu0 0
      %2368 = vmatprep.subr.bf16.mxu0 0
      %2369 = vmatpush1.bf16.msra.mxu0 0
      %2370 = vmatprep.mubr.bf16.mxu0 0
      %2371 = vmatmul.mubr.bf16.gmra.mrb[0].mxu0 %v2336
      %v2372 = vpop.f32.mrb[0].mxu0
      %v2373 = vadd.f32 0.0, %v2372
      %v2374 = vpop.f32.mrb[0].mxu0
      %v2375 = vpop.f32.mrb[0].mxu0
      %v2376 = vpop.f32.mrb[0].mxu0
      %2377 = vdwg.mxu0
      %v2378 = vadd.f32 %v2324, %v2373
      %v2379 = vmax.f32 %v2162, %v2378
      %2380 = vmatprep.subr.bf16.mxu0 0
      %2381 = vmatpush1.bf16.msra.mxu0 %v913
      %2382 = vmatprep.subr.bf16.mxu0 0
      %2383 = vmatpush1.bf16.msra.mxu0 %v914
      %2384 = vmatprep.subr.bf16.mxu0 0
      %2385 = vmatpush1.bf16.msra.mxu0 %v915
      %2386 = vmatprep.subr.bf16.mxu0 0
      %2387 = vmatpush1.bf16.msra.mxu0 %v916
      %2388 = vmatprep.subr.bf16.mxu0 0
      %2389 = vmatpush1.bf16.msra.mxu0 %v917
      %2390 = vmatprep.subr.bf16.mxu0 0
      %2391 = vmatpush1.bf16.msra.mxu0 %v918
      %2392 = vmatprep.subr.bf16.mxu0 0
      %2393 = vmatpush1.bf16.msra.mxu0 0
      %2394 = vmatprep.subr.bf16.mxu0 0
      %2395 = vmatpush1.bf16.msra.mxu0 0
      %2396 = vmatprep.subr.bf16.mxu0 0
      %2397 = vmatpush1.bf16.msra.mxu0 0
      %2398 = vmatprep.subr.bf16.mxu0 0
      %2399 = vmatpush1.bf16.msra.mxu0 0
      %2400 = vmatprep.subr.bf16.mxu0 0
      %2401 = vmatpush1.bf16.msra.mxu0 0
      %2402 = vmatprep.subr.bf16.mxu0 0
      %2403 = vmatpush1.bf16.msra.mxu0 0
      %2404 = vmatprep.subr.bf16.mxu0 0
      %2405 = vmatpush1.bf16.msra.mxu0 0
      %2406 = vmatprep.subr.bf16.mxu0 0
      %2407 = vmatpush1.bf16.msra.mxu0 0
      %2408 = vmatprep.subr.bf16.mxu0 0
      %2409 = vmatpush1.bf16.msra.mxu0 0
      %2410 = vmatprep.subr.bf16.mxu0 0
      %2411 = vmatpush1.bf16.msra.mxu0 0
      %2412 = vmatprep.mubr.bf16.mxu0 0
      %2413 = vmatmul.mubr.bf16.gmra.mrb[0].mxu0 %v820
      %v2414 = vpop.f32.mrb[0].mxu0
      %v2415 = vadd.f32 0.0, %v2414
      %v2416 = vpop.f32.mrb[0].mxu0
      %v2417 = vpop.f32.mrb[0].mxu0
      %v2418 = vpop.f32.mrb[0].mxu0
      %2419 = vdwg.mxu0
      %2420 = vmatprep.subr.bf16.mxu0 0
      %2421 = vmatpush1.bf16.msra.mxu0 %v989
      %2422 = vmatprep.subr.bf16.mxu0 0
      %2423 = vmatpush1.bf16.msra.mxu0 %v990
      %2424 = vmatprep.subr.bf16.mxu0 0
      %2425 = vmatpush1.bf16.msra.mxu0 %v991
      %2426 = vmatprep.subr.bf16.mxu0 0
      %2427 = vmatpush1.bf16.msra.mxu0 %v992
      %2428 = vmatprep.subr.bf16.mxu0 0
      %2429 = vmatpush1.bf16.msra.mxu0 %v993
      %2430 = vmatprep.subr.bf16.mxu0 0
      %2431 = vmatpush1.bf16.msra.mxu0 %v994
      %2432 = vmatprep.subr.bf16.mxu0 0
      %2433 = vmatpush1.bf16.msra.mxu0 0
      %2434 = vmatprep.subr.bf16.mxu0 0
      %2435 = vmatpush1.bf16.msra.mxu0 0
      %2436 = vmatprep.subr.bf16.mxu0 0
      %2437 = vmatpush1.bf16.msra.mxu0 0
      %2438 = vmatprep.subr.bf16.mxu0 0
      %2439 = vmatpush1.bf16.msra.mxu0 0
      %2440 = vmatprep.subr.bf16.mxu0 0
      %2441 = vmatpush1.bf16.msra.mxu0 0
      %2442 = vmatprep.subr.bf16.mxu0 0
      %2443 = vmatpush1.bf16.msra.mxu0 0
      %2444 = vmatprep.subr.bf16.mxu0 0
      %2445 = vmatpush1.bf16.msra.mxu0 0
      %2446 = vmatprep.subr.bf16.mxu0 0
      %2447 = vmatpush1.bf16.msra.mxu0 0
      %2448 = vmatprep.subr.bf16.mxu0 0
      %2449 = vmatpush1.bf16.msra.mxu0 0
      %2450 = vmatprep.subr.bf16.mxu0 0
      %2451 = vmatpush1.bf16.msra.mxu0 0
      %2452 = vmatprep.mubr.bf16.mxu0 0
      %2453 = vmatmul.mubr.bf16.gmra.mrb[0].mxu0 %v717
      %v2454 = vpop.f32.mrb[0].mxu0
      %v2455 = vadd.f32 %v2415, %v2454
      %v2456 = vpop.f32.mrb[0].mxu0
      %v2457 = vpop.f32.mrb[0].mxu0
      %v2458 = vpop.f32.mrb[0].mxu0
      %2459 = vdwg.mxu0
      %2460 = vmatprep.subr.bf16.mxu0 0
      %2461 = vmatpush1.bf16.msra.mxu0 %v1078
      %2462 = vmatprep.subr.bf16.mxu0 0
      %2463 = vmatpush1.bf16.msra.mxu0 %v1079
      %2464 = vmatprep.subr.bf16.mxu0 0
      %2465 = vmatpush1.bf16.msra.mxu0 %v1080
      %2466 = vmatprep.subr.bf16.mxu0 0
      %2467 = vmatpush1.bf16.msra.mxu0 %v1081
      %2468 = vmatprep.subr.bf16.mxu0 0
      %2469 = vmatpush1.bf16.msra.mxu0 %v1082
      %2470 = vmatprep.subr.bf16.mxu0 0
      %2471 = vmatpush1.bf16.msra.mxu0 %v1083
      %2472 = vmatprep.subr.bf16.mxu0 0
      %2473 = vmatpush1.bf16.msra.mxu0 0
      %2474 = vmatprep.subr.bf16.mxu0 0
      %2475 = vmatpush1.bf16.msra.mxu0 0
      %2476 = vmatprep.subr.bf16.mxu0 0
      %2477 = vmatpush1.bf16.msra.mxu0 0
      %2478 = vmatprep.subr.bf16.mxu0 0
      %2479 = vmatpush1.bf16.msra.mxu0 0
      %2480 = vmatprep.subr.bf16.mxu0 0
      %2481 = vmatpush1.bf16.msra.mxu0 0
      %2482 = vmatprep.subr.bf16.mxu0 0
      %2483 = vmatpush1.bf16.msra.mxu0 0
      %2484 = vmatprep.subr.bf16.mxu0 0
      %2485 = vmatpush1.bf16.msra.mxu0 0
      %2486 = vmatprep.subr.bf16.mxu0 0
      %2487 = vmatpush1.bf16.msra.mxu0 0
      %2488 = vmatprep.subr.bf16.mxu0 0
      %2489 = vmatpush1.bf16.msra.mxu0 0
      %2490 = vmatprep.subr.bf16.mxu0 0
      %2491 = vmatpush1.bf16.msra.mxu0 0
      %2492 = vmatprep.mubr.bf16.mxu0 0
      %2493 = vmatmul.mubr.bf16.gmra.mrb[0].mxu0 %v1485
      %v2494 = vpop.f32.mrb[0].mxu0
      %v2495 = vadd.f32 0.0, %v2494
      %v2496 = vpop.f32.mrb[0].mxu0
      %v2497 = vpop.f32.mrb[0].mxu0
      %v2498 = vpop.f32.mrb[0].mxu0
      %2499 = vdwg.mxu0
      %v2500 = vadd.f32 %v2455, %v2495
      %2501 = vmatprep.subr.bf16.mxu0 0
      %2502 = vmatpush1.bf16.msra.mxu0 %v1168
      %2503 = vmatprep.subr.bf16.mxu0 0
      %2504 = vmatpush1.bf16.msra.mxu0 %v1169
      %2505 = vmatprep.subr.bf16.mxu0 0
      %2506 = vmatpush1.bf16.msra.mxu0 %v1170
      %2507 = vmatprep.subr.bf16.mxu0 0
      %2508 = vmatpush1.bf16.msra.mxu0 %v1171
      %2509 = vmatprep.subr.bf16.mxu0 0
      %2510 = vmatpush1.bf16.msra.mxu0 %v1172
      %2511 = vmatprep.subr.bf16.mxu0 0
      %2512 = vmatpush1.bf16.msra.mxu0 %v1173
      %2513 = vmatprep.subr.bf16.mxu0 0
      %2514 = vmatpush1.bf16.msra.mxu0 0
      %2515 = vmatprep.subr.bf16.mxu0 0
      %2516 = vmatpush1.bf16.msra.mxu0 0
      %2517 = vmatprep.subr.bf16.mxu0 0
      %2518 = vmatpush1.bf16.msra.mxu0 0
      %2519 = vmatprep.subr.bf16.mxu0 0
      %2520 = vmatpush1.bf16.msra.mxu0 0
      %2521 = vmatprep.subr.bf16.mxu0 0
      %2522 = vmatpush1.bf16.msra.mxu0 0
      %2523 = vmatprep.subr.bf16.mxu0 0
      %2524 = vmatpush1.bf16.msra.mxu0 0
      %2525 = vmatprep.subr.bf16.mxu0 0
      %2526 = vmatpush1.bf16.msra.mxu0 0
      %2527 = vmatprep.subr.bf16.mxu0 0
      %2528 = vmatpush1.bf16.msra.mxu0 0
      %2529 = vmatprep.subr.bf16.mxu0 0
      %2530 = vmatpush1.bf16.msra.mxu0 0
      %2531 = vmatprep.subr.bf16.mxu0 0
      %2532 = vmatpush1.bf16.msra.mxu0 0
      %2533 = vmatprep.mubr.bf16.mxu0 0
      %2534 = vmatmul.mubr.bf16.gmra.mrb[0].mxu0 %v1916
      %v2535 = vpop.f32.mrb[0].mxu0
      %v2536 = vadd.f32 0.0, %v2535
      %v2537 = vpop.f32.mrb[0].mxu0
      %v2538 = vpop.f32.mrb[0].mxu0
      %v2539 = vpop.f32.mrb[0].mxu0
      %2540 = vdwg.mxu0
      %v2541 = vadd.f32 %v2500, %v2536
      %2542 = vmatprep.subr.bf16.mxu0 0
      %2543 = vmatpush1.bf16.msra.mxu0 %v1258
      %2544 = vmatprep.subr.bf16.mxu0 0
      %2545 = vmatpush1.bf16.msra.mxu0 %v1259
      %2546 = vmatprep.subr.bf16.mxu0 0
      %2547 = vmatpush1.bf16.msra.mxu0 %v1260
      %2548 = vmatprep.subr.bf16.mxu0 0
      %2549 = vmatpush1.bf16.msra.mxu0 %v1261
      %2550 = vmatprep.subr.bf16.mxu0 0
      %2551 = vmatpush1.bf16.msra.mxu0 %v1262
      %2552 = vmatprep.subr.bf16.mxu0 0
      %2553 = vmatpush1.bf16.msra.mxu0 %v1263
      %2554 = vmatprep.subr.bf16.mxu0 0
      %2555 = vmatpush1.bf16.msra.mxu0 0
      %2556 = vmatprep.subr.bf16.mxu0 0
      %2557 = vmatpush1.bf16.msra.mxu0 0
      %2558 = vmatprep.subr.bf16.mxu0 0
      %2559 = vmatpush1.bf16.msra.mxu0 0
      %2560 = vmatprep.subr.bf16.mxu0 0
      %2561 = vmatpush1.bf16.msra.mxu0 0
      %2562 = vmatprep.subr.bf16.mxu0 0
      %2563 = vmatpush1.bf16.msra.mxu0 0
      %2564 = vmatprep.subr.bf16.mxu0 0
      %2565 = vmatpush1.bf16.msra.mxu0 0
      %2566 = vmatprep.subr.bf16.mxu0 0
      %2567 = vmatpush1.bf16.msra.mxu0 0
      %2568 = vmatprep.subr.bf16.mxu0 0
      %2569 = vmatpush1.bf16.msra.mxu0 0
      %2570 = vmatprep.subr.bf16.mxu0 0
      %2571 = vmatpush1.bf16.msra.mxu0 0
      %2572 = vmatprep.subr.bf16.mxu0 0
      %2573 = vmatpush1.bf16.msra.mxu0 0
      %2574 = vmatprep.mubr.bf16.mxu0 0
      %2575 = vmatmul.mubr.bf16.gmra.mrb[0].mxu0 %v2336
      %v2576 = vpop.f32.mrb[0].mxu0
      %v2577 = vadd.f32 0.0, %v2576
      %v2578 = vpop.f32.mrb[0].mxu0
      %v2579 = vpop.f32.mrb[0].mxu0
      %v2580 = vpop.f32.mrb[0].mxu0
      %2581 = vdwg.mxu0
      %v2582 = vadd.f32 %v2541, %v2577
      %v2583 = vmax.f32 %v2379, %v2582
      %v2584 = vadd.f32 %v2583, %v1738
      %v2585 = vmax.f32 %v2584, 0.0
      %v2586 = vpack.c.bf16 %v2585, %v2585
      %v2587 = vld [vmem:[%s3] sm:$0xf]
      %v2588 = vld [vmem:[%s3 + $0x4] sm:$0xf]
      %v2589 = vld [vmem:[%s3 + $0x8] sm:$0xf]
      %v2590 = vld [vmem:[%s3 + $0xc] sm:$0xf]
      %v2591 = vld [vmem:[%s3 + $0x10] sm:$0xf]
      %v2592 = vld [vmem:[%s3 + $0x14] sm:$0xf]
      %v2593 = vld [vmem:[%s3 + $0x18] sm:$0xf]
      %v2594 = vld [vmem:[%s3 + $0x1c] sm:$0xf]
      %v2595 = vld [vmem:[%s3 + $0x20] sm:$0xf]
      %v2596 = vld [vmem:[%s3 + $0x24] sm:$0xf]
      %v2597 = vld [vmem:[%s3 + $0x28] sm:$0xf]
      %v2598 = vld [vmem:[%s3 + $0x2c] sm:$0xf]
      %v2599 = vld [vmem:[%s3 + $0x30] sm:$0xf]
      %v2600 = vld [vmem:[%s3 + $0x34] sm:$0xf]
      %v2601 = vld [vmem:[%s3 + $0x38] sm:$0xf]
      %v2602 = vld [vmem:[%s3 + $0x3c] sm:$0xf]
      %s2603 = scalar_lea.vmem %s3, 64
      %v2604 = vld [vmem:[%s2603] sm:$0xf]
      %v2605 = vld [vmem:[%s2603 + $0x4] sm:$0xf]
      %v2606 = vld [vmem:[%s2603 + $0x8] sm:$0xf]
      %v2607 = vld [vmem:[%s2603 + $0xc] sm:$0xf]
      %v2608 = vld [vmem:[%s2603 + $0x10] sm:$0xf]
      %v2609 = vld [vmem:[%s2603 + $0x14] sm:$0xf]
      %v2610 = vld [vmem:[%s2603 + $0x18] sm:$0xf]
      %v2611 = vld [vmem:[%s2603 + $0x1c] sm:$0xf]
      %v2612 = vld [vmem:[%s2603 + $0x20] sm:$0xf]
      %v2613 = vld [vmem:[%s2603 + $0x24] sm:$0xf]
      %v2614 = vld [vmem:[%s2603 + $0x28] sm:$0xf]
      %v2615 = vld [vmem:[%s2603 + $0x2c] sm:$0xf]
      %v2616 = vld [vmem:[%s2603 + $0x30] sm:$0xf]
      %v2617 = vld [vmem:[%s2603 + $0x34] sm:$0xf]
      %v2618 = vld [vmem:[%s2603 + $0x38] sm:$0xf]
      %v2619 = vld [vmem:[%s2603 + $0x3c] sm:$0xf]
      %v2636 = vunpack.c.l.b16 %v2604
      %v2637 = vunpack.c.l.b16 %v2605
      %v2638 = vunpack.c.l.b16 %v2606
      %v2639 = vunpack.c.l.b16 %v2607
      %v2640 = vunpack.c.l.b16 %v2608
      %v2641 = vunpack.c.l.b16 %v2609
      %v2642 = vunpack.c.l.b16 %v2610
      %v2643 = vunpack.c.l.b16 %v2611
      %v2644 = vunpack.c.l.b16 %v2612
      %v2645 = vunpack.c.l.b16 %v2613
      %v2646 = vunpack.c.l.b16 %v2614
      %v2647 = vunpack.c.l.b16 %v2615
      %v2648 = vunpack.c.l.b16 %v2616
      %v2649 = vunpack.c.l.b16 %v2617
      %v2650 = vunpack.c.l.b16 %v2618
      %v2651 = vunpack.c.l.b16 %v2619
      %v2652 = vpack.c.b16 %v2637, %v2636
      %v2653 = vpack.c.b16 %v2639, %v2638
      %v2654 = vpack.c.b16 %v2641, %v2640
      %v2655 = vpack.c.b16 %v2643, %v2642
      %v2656 = vpack.c.b16 %v2645, %v2644
      %v2657 = vpack.c.b16 %v2647, %v2646
      %v2658 = vpack.c.b16 %v2649, %v2648
      %v2659 = vpack.c.b16 %v2651, %v2650
      %2668 = vmatprep.subr.bf16.mxu0 0
      %2669 = vmatpush1.bf16.msra.mxu0 %v2652
      %2670 = vmatprep.subr.bf16.mxu0 0
      %2671 = vmatpush1.bf16.msra.mxu0 %v2653
      %2672 = vmatprep.subr.bf16.mxu0 0
      %2673 = vmatpush1.bf16.msra.mxu0 %v2654
      %2674 = vmatprep.subr.bf16.mxu0 0
      %2675 = vmatpush1.bf16.msra.mxu0 %v2655
      %2676 = vmatprep.subr.bf16.mxu0 0
      %2677 = vmatpush1.bf16.msra.mxu0 %v2656
      %2678 = vmatprep.subr.bf16.mxu0 0
      %2679 = vmatpush1.bf16.msra.mxu0 %v2657
      %2680 = vmatprep.subr.bf16.mxu0 0
      %2681 = vmatpush1.bf16.msra.mxu0 %v2658
      %2682 = vmatprep.subr.bf16.mxu0 0
      %2683 = vmatpush1.bf16.msra.mxu0 %v2659
      %2684 = vmatprep.subr.bf16.mxu0 0
      %2685 = vmatpush1.bf16.msra.mxu0 0
      %2686 = vmatprep.subr.bf16.mxu0 0
      %2687 = vmatpush1.bf16.msra.mxu0 0
      %2688 = vmatprep.subr.bf16.mxu0 0
      %2689 = vmatpush1.bf16.msra.mxu0 0
      %2690 = vmatprep.subr.bf16.mxu0 0
      %2691 = vmatpush1.bf16.msra.mxu0 0
      %2692 = vmatprep.subr.bf16.mxu0 0
      %2693 = vmatpush1.bf16.msra.mxu0 0
      %2694 = vmatprep.subr.bf16.mxu0 0
      %2695 = vmatpush1.bf16.msra.mxu0 0
      %2696 = vmatprep.subr.bf16.mxu0 0
      %2697 = vmatpush1.bf16.msra.mxu0 0
      %2698 = vmatprep.subr.bf16.mxu0 0
      %2699 = vmatpush1.bf16.msra.mxu0 0
      %2700 = vmatprep.mubr.bf16.mxu0 0
      %2701 = vmatmul.mubr.bf16.gmra.mrb[0].mxu0 %v2586
      %v2702 = vpop.f32.mrb[0].mxu0
      %v2703 = vadd.f32 0.0, %v2702
      %v2704 = vpop.f32.mrb[0].mxu0
      %v2705 = vpop.f32.mrb[0].mxu0
      %v2706 = vpop.f32.mrb[0].mxu0
      %2707 = vdwg.mxu0
      %v2724 = vunpack.c.l.b16 %v2587
      %v2725 = vunpack.c.l.b16 %v2588
      %v2726 = vunpack.c.l.b16 %v2589
      %v2727 = vunpack.c.l.b16 %v2590
      %v2728 = vunpack.c.l.b16 %v2591
      %v2729 = vunpack.c.l.b16 %v2592
      %v2730 = vunpack.c.l.b16 %v2593
      %v2731 = vunpack.c.l.b16 %v2594
      %v2732 = vunpack.c.l.b16 %v2595
      %v2733 = vunpack.c.l.b16 %v2596
      %v2734 = vunpack.c.l.b16 %v2597
      %v2735 = vunpack.c.l.b16 %v2598
      %v2736 = vunpack.c.l.b16 %v2599
      %v2737 = vunpack.c.l.b16 %v2600
      %v2738 = vunpack.c.l.b16 %v2601
      %v2739 = vunpack.c.l.b16 %v2602
      %v2740 = vpack.c.b16 %v2725, %v2724
      %v2741 = vpack.c.b16 %v2727, %v2726
      %v2742 = vpack.c.b16 %v2729, %v2728
      %v2743 = vpack.c.b16 %v2731, %v2730
      %v2744 = vpack.c.b16 %v2733, %v2732
      %v2745 = vpack.c.b16 %v2735, %v2734
      %v2746 = vpack.c.b16 %v2737, %v2736
      %v2747 = vpack.c.b16 %v2739, %v2738
      %2756 = vmatprep.subr.bf16.mxu0 0
      %2757 = vmatpush1.bf16.msra.mxu0 %v2740
      %2758 = vmatprep.subr.bf16.mxu0 0
      %2759 = vmatpush1.bf16.msra.mxu0 %v2741
      %2760 = vmatprep.subr.bf16.mxu0 0
      %2761 = vmatpush1.bf16.msra.mxu0 %v2742
      %2762 = vmatprep.subr.bf16.mxu0 0
      %2763 = vmatpush1.bf16.msra.mxu0 %v2743
      %2764 = vmatprep.subr.bf16.mxu0 0
      %2765 = vmatpush1.bf16.msra.mxu0 %v2744
      %2766 = vmatprep.subr.bf16.mxu0 0
      %2767 = vmatpush1.bf16.msra.mxu0 %v2745
      %2768 = vmatprep.subr.bf16.mxu0 0
      %2769 = vmatpush1.bf16.msra.mxu0 %v2746
      %2770 = vmatprep.subr.bf16.mxu0 0
      %2771 = vmatpush1.bf16.msra.mxu0 %v2747
      %2772 = vmatprep.subr.bf16.mxu0 0
      %2773 = vmatpush1.bf16.msra.mxu0 0
      %2774 = vmatprep.subr.bf16.mxu0 0
      %2775 = vmatpush1.bf16.msra.mxu0 0
      %2776 = vmatprep.subr.bf16.mxu0 0
      %2777 = vmatpush1.bf16.msra.mxu0 0
      %2778 = vmatprep.subr.bf16.mxu0 0
      %2779 = vmatpush1.bf16.msra.mxu0 0
      %2780 = vmatprep.subr.bf16.mxu0 0
      %2781 = vmatpush1.bf16.msra.mxu0 0
      %2782 = vmatprep.subr.bf16.mxu0 0
      %2783 = vmatpush1.bf16.msra.mxu0 0
      %2784 = vmatprep.subr.bf16.mxu0 0
      %2785 = vmatpush1.bf16.msra.mxu0 0
      %2786 = vmatprep.subr.bf16.mxu0 0
      %2787 = vmatpush1.bf16.msra.mxu0 0
      %2788 = vmatprep.mubr.bf16.mxu0 0
      %2789 = vmatmul.mubr.bf16.gmra.mrb[0].mxu0 %v1742
      %v2790 = vpop.f32.mrb[0].mxu0
      %v2791 = vadd.f32 %v2703, %v2790
      %v2792 = vpop.f32.mrb[0].mxu0
      %v2793 = vpop.f32.mrb[0].mxu0
      %v2794 = vpop.f32.mrb[0].mxu0
      %2795 = vdwg.mxu0
      %s2796 = scalar_lea.vmem %s3, 128
      %v2797 = vld [vmem:[%s2796] sm:$0xf]
      %v2798 = vld [vmem:[%s2796 + $0x4] sm:$0xf]
      %v2799 = vld [vmem:[%s2796 + $0x8] sm:$0xf]
      %v2800 = vld [vmem:[%s2796 + $0xc] sm:$0xf]
      %v2801 = vld [vmem:[%s2796 + $0x10] sm:$0xf]
      %v2802 = vld [vmem:[%s2796 + $0x14] sm:$0xf]
      %v2803 = vld [vmem:[%s2796 + $0x18] sm:$0xf]
      %v2804 = vld [vmem:[%s2796 + $0x1c] sm:$0xf]
      %v2805 = vld [vmem:[%s2796 + $0x20] sm:$0xf]
      %v2806 = vld [vmem:[%s2796 + $0x24] sm:$0xf]
      %v2807 = vld [vmem:[%s2796 + $0x28] sm:$0xf]
      %v2808 = vld [vmem:[%s2796 + $0x2c] sm:$0xf]
      %v2809 = vld [vmem:[%s2796 + $0x30] sm:$0xf]
      %v2810 = vld [vmem:[%s2796 + $0x34] sm:$0xf]
      %v2811 = vld [vmem:[%s2796 + $0x38] sm:$0xf]
      %v2812 = vld [vmem:[%s2796 + $0x3c] sm:$0xf]
      %v2814 = vshrl.u32 %v1742, 16
      %v2816 = vshll.u32 %v1742, 16
      %v2818 = vrot.slane %v2816, 1
      %v2819 = vor.u32 %v2814, %v2818
      %v2837 = vunpack.c.l.b16 %v2797
      %v2838 = vunpack.c.l.b16 %v2798
      %v2839 = vunpack.c.l.b16 %v2799
      %v2840 = vunpack.c.l.b16 %v2800
      %v2841 = vunpack.c.l.b16 %v2801
      %v2842 = vunpack.c.l.b16 %v2802
      %v2843 = vunpack.c.l.b16 %v2803
      %v2844 = vunpack.c.l.b16 %v2804
      %v2845 = vunpack.c.l.b16 %v2805
      %v2846 = vunpack.c.l.b16 %v2806
      %v2847 = vunpack.c.l.b16 %v2807
      %v2848 = vunpack.c.l.b16 %v2808
      %v2849 = vunpack.c.l.b16 %v2809
      %v2850 = vunpack.c.l.b16 %v2810
      %v2851 = vunpack.c.l.b16 %v2811
      %v2852 = vunpack.c.l.b16 %v2812
      %v2853 = vpack.c.b16 %v2838, %v2837
      %v2854 = vpack.c.b16 %v2840, %v2839
      %v2855 = vpack.c.b16 %v2842, %v2841
      %v2856 = vpack.c.b16 %v2844, %v2843
      %v2857 = vpack.c.b16 %v2846, %v2845
      %v2858 = vpack.c.b16 %v2848, %v2847
      %v2859 = vpack.c.b16 %v2850, %v2849
      %v2860 = vpack.c.b16 %v2852, %v2851
      %2869 = vmatprep.subr.bf16.mxu0 0
      %2870 = vmatpush1.bf16.msra.mxu0 %v2853
      %2871 = vmatprep.subr.bf16.mxu0 0
      %2872 = vmatpush1.bf16.msra.mxu0 %v2854
      %2873 = vmatprep.subr.bf16.mxu0 0
      %2874 = vmatpush1.bf16.msra.mxu0 %v2855
      %2875 = vmatprep.subr.bf16.mxu0 0
      %2876 = vmatpush1.bf16.msra.mxu0 %v2856
      %2877 = vmatprep.subr.bf16.mxu0 0
      %2878 = vmatpush1.bf16.msra.mxu0 %v2857
      %2879 = vmatprep.subr.bf16.mxu0 0
      %2880 = vmatpush1.bf16.msra.mxu0 %v2858
      %2881 = vmatprep.subr.bf16.mxu0 0
      %2882 = vmatpush1.bf16.msra.mxu0 %v2859
      %2883 = vmatprep.subr.bf16.mxu0 0
      %2884 = vmatpush1.bf16.msra.mxu0 %v2860
      %2885 = vmatprep.subr.bf16.mxu0 0
      %2886 = vmatpush1.bf16.msra.mxu0 0
      %2887 = vmatprep.subr.bf16.mxu0 0
      %2888 = vmatpush1.bf16.msra.mxu0 0
      %2889 = vmatprep.subr.bf16.mxu0 0
      %2890 = vmatpush1.bf16.msra.mxu0 0
      %2891 = vmatprep.subr.bf16.mxu0 0
      %2892 = vmatpush1.bf16.msra.mxu0 0
      %2893 = vmatprep.subr.bf16.mxu0 0
      %2894 = vmatpush1.bf16.msra.mxu0 0
      %2895 = vmatprep.subr.bf16.mxu0 0
      %2896 = vmatpush1.bf16.msra.mxu0 0
      %2897 = vmatprep.subr.bf16.mxu0 0
      %2898 = vmatpush1.bf16.msra.mxu0 0
      %2899 = vmatprep.subr.bf16.mxu0 0
      %2900 = vmatpush1.bf16.msra.mxu0 0
      %2901 = vmatprep.mubr.bf16.mxu0 0
      %2902 = vmatmul.mubr.bf16.gmra.mrb[0].mxu0 %v2819
      %v2903 = vpop.f32.mrb[0].mxu0
      %v2904 = vadd.f32 0.0, %v2903
      %v2905 = vpop.f32.mrb[0].mxu0
      %v2906 = vpop.f32.mrb[0].mxu0
      %v2907 = vpop.f32.mrb[0].mxu0
      %2908 = vdwg.mxu0
      %v2909 = vadd.f32 %v2791, %v2904
      %s2910 = scalar_lea.vmem %s3, 192
      %v2911 = vld [vmem:[%s2910] sm:$0xf]
      %v2912 = vld [vmem:[%s2910 + $0x4] sm:$0xf]
      %v2913 = vld [vmem:[%s2910 + $0x8] sm:$0xf]
      %v2914 = vld [vmem:[%s2910 + $0xc] sm:$0xf]
      %v2915 = vld [vmem:[%s2910 + $0x10] sm:$0xf]
      %v2916 = vld [vmem:[%s2910 + $0x14] sm:$0xf]
      %v2917 = vld [vmem:[%s2910 + $0x18] sm:$0xf]
      %v2918 = vld [vmem:[%s2910 + $0x1c] sm:$0xf]
      %v2919 = vld [vmem:[%s2910 + $0x20] sm:$0xf]
      %v2920 = vld [vmem:[%s2910 + $0x24] sm:$0xf]
      %v2921 = vld [vmem:[%s2910 + $0x28] sm:$0xf]
      %v2922 = vld [vmem:[%s2910 + $0x2c] sm:$0xf]
      %v2923 = vld [vmem:[%s2910 + $0x30] sm:$0xf]
      %v2924 = vld [vmem:[%s2910 + $0x34] sm:$0xf]
      %v2925 = vld [vmem:[%s2910 + $0x38] sm:$0xf]
      %v2926 = vld [vmem:[%s2910 + $0x3c] sm:$0xf]
      %v2928 = vshrl.u32 %v2586, 16
      %v2930 = vshll.u32 %v2586, 16
      %v2932 = vrot.slane %v2930, 1
      %v2933 = vor.u32 %v2928, %v2932
      %v2951 = vunpack.c.l.b16 %v2911
      %v2952 = vunpack.c.l.b16 %v2912
      %v2953 = vunpack.c.l.b16 %v2913
      %v2954 = vunpack.c.l.b16 %v2914
      %v2955 = vunpack.c.l.b16 %v2915
      %v2956 = vunpack.c.l.b16 %v2916
      %v2957 = vunpack.c.l.b16 %v2917
      %v2958 = vunpack.c.l.b16 %v2918
      %v2959 = vunpack.c.l.b16 %v2919
      %v2960 = vunpack.c.l.b16 %v2920
      %v2961 = vunpack.c.l.b16 %v2921
      %v2962 = vunpack.c.l.b16 %v2922
      %v2963 = vunpack.c.l.b16 %v2923
      %v2964 = vunpack.c.l.b16 %v2924
      %v2965 = vunpack.c.l.b16 %v2925
      %v2966 = vunpack.c.l.b16 %v2926
      %v2967 = vpack.c.b16 %v2952, %v2951
      %v2968 = vpack.c.b16 %v2954, %v2953
      %v2969 = vpack.c.b16 %v2956, %v2955
      %v2970 = vpack.c.b16 %v2958, %v2957
      %v2971 = vpack.c.b16 %v2960, %v2959
      %v2972 = vpack.c.b16 %v2962, %v2961
      %v2973 = vpack.c.b16 %v2964, %v2963
      %v2974 = vpack.c.b16 %v2966, %v2965
      %2983 = vmatprep.subr.bf16.mxu0 0
      %2984 = vmatpush1.bf16.msra.mxu0 %v2967
      %2985 = vmatprep.subr.bf16.mxu0 0
      %2986 = vmatpush1.bf16.msra.mxu0 %v2968
      %2987 = vmatprep.subr.bf16.mxu0 0
      %2988 = vmatpush1.bf16.msra.mxu0 %v2969
      %2989 = vmatprep.subr.bf16.mxu0 0
      %2990 = vmatpush1.bf16.msra.mxu0 %v2970
      %2991 = vmatprep.subr.bf16.mxu0 0
      %2992 = vmatpush1.bf16.msra.mxu0 %v2971
      %2993 = vmatprep.subr.bf16.mxu0 0
      %2994 = vmatpush1.bf16.msra.mxu0 %v2972
      %2995 = vmatprep.subr.bf16.mxu0 0
      %2996 = vmatpush1.bf16.msra.mxu0 %v2973
      %2997 = vmatprep.subr.bf16.mxu0 0
      %2998 = vmatpush1.bf16.msra.mxu0 %v2974
      %2999 = vmatprep.subr.bf16.mxu0 0
      %3000 = vmatpush1.bf16.msra.mxu0 0
      %3001 = vmatprep.subr.bf16.mxu0 0
      %3002 = vmatpush1.bf16.msra.mxu0 0
      %3003 = vmatprep.subr.bf16.mxu0 0
      %3004 = vmatpush1.bf16.msra.mxu0 0
      %3005 = vmatprep.subr.bf16.mxu0 0
      %3006 = vmatpush1.bf16.msra.mxu0 0
      %3007 = vmatprep.subr.bf16.mxu0 0
      %3008 = vmatpush1.bf16.msra.mxu0 0
      %3009 = vmatprep.subr.bf16.mxu0 0
      %3010 = vmatpush1.bf16.msra.mxu0 0
      %3011 = vmatprep.subr.bf16.mxu0 0
      %3012 = vmatpush1.bf16.msra.mxu0 0
      %3013 = vmatprep.subr.bf16.mxu0 0
      %3014 = vmatpush1.bf16.msra.mxu0 0
      %3015 = vmatprep.mubr.bf16.mxu0 0
      %3016 = vmatmul.mubr.bf16.gmra.mrb[0].mxu0 %v2933
      %v3017 = vpop.f32.mrb[0].mxu0
      %v3018 = vadd.f32 0.0, %v3017
      %v3019 = vpop.f32.mrb[0].mxu0
      %v3020 = vpop.f32.mrb[0].mxu0
      %v3021 = vpop.f32.mrb[0].mxu0
      %3022 = vdwg.mxu0
      %v3023 = vadd.f32 %v2909, %v3018
      %s3024 = scalar_lea.vmem %s3, 256
      %v3025 = vld [vmem:[%s3024] sm:$0xf]
      %v3026 = vld [vmem:[%s3024 + $0x4] sm:$0xf]
      %v3027 = vld [vmem:[%s3024 + $0x8] sm:$0xf]
      %v3028 = vld [vmem:[%s3024 + $0xc] sm:$0xf]
      %v3029 = vld [vmem:[%s3024 + $0x10] sm:$0xf]
      %v3030 = vld [vmem:[%s3024 + $0x14] sm:$0xf]
      %v3031 = vld [vmem:[%s3024 + $0x18] sm:$0xf]
      %v3032 = vld [vmem:[%s3024 + $0x1c] sm:$0xf]
      %v3033 = vld [vmem:[%s3024 + $0x20] sm:$0xf]
      %v3034 = vld [vmem:[%s3024 + $0x24] sm:$0xf]
      %v3035 = vld [vmem:[%s3024 + $0x28] sm:$0xf]
      %v3036 = vld [vmem:[%s3024 + $0x2c] sm:$0xf]
      %v3037 = vld [vmem:[%s3024 + $0x30] sm:$0xf]
      %v3038 = vld [vmem:[%s3024 + $0x34] sm:$0xf]
      %v3039 = vld [vmem:[%s3024 + $0x38] sm:$0xf]
      %v3040 = vld [vmem:[%s3024 + $0x3c] sm:$0xf]
      %v3042 = vrot.slane %v1742, 1
      %v3060 = vunpack.c.l.b16 %v3025
      %v3061 = vunpack.c.l.b16 %v3026
      %v3062 = vunpack.c.l.b16 %v3027
      %v3063 = vunpack.c.l.b16 %v3028
      %v3064 = vunpack.c.l.b16 %v3029
      %v3065 = vunpack.c.l.b16 %v3030
      %v3066 = vunpack.c.l.b16 %v3031
      %v3067 = vunpack.c.l.b16 %v3032
      %v3068 = vunpack.c.l.b16 %v3033
      %v3069 = vunpack.c.l.b16 %v3034
      %v3070 = vunpack.c.l.b16 %v3035
      %v3071 = vunpack.c.l.b16 %v3036
      %v3072 = vunpack.c.l.b16 %v3037
      %v3073 = vunpack.c.l.b16 %v3038
      %v3074 = vunpack.c.l.b16 %v3039
      %v3075 = vunpack.c.l.b16 %v3040
      %v3076 = vpack.c.b16 %v3061, %v3060
      %v3077 = vpack.c.b16 %v3063, %v3062
      %v3078 = vpack.c.b16 %v3065, %v3064
      %v3079 = vpack.c.b16 %v3067, %v3066
      %v3080 = vpack.c.b16 %v3069, %v3068
      %v3081 = vpack.c.b16 %v3071, %v3070
      %v3082 = vpack.c.b16 %v3073, %v3072
      %v3083 = vpack.c.b16 %v3075, %v3074
      %3092 = vmatprep.subr.bf16.mxu0 0
      %3093 = vmatpush1.bf16.msra.mxu0 %v3076
      %3094 = vmatprep.subr.bf16.mxu0 0
      %3095 = vmatpush1.bf16.msra.mxu0 %v3077
      %3096 = vmatprep.subr.bf16.mxu0 0
      %3097 = vmatpush1.bf16.msra.mxu0 %v3078
      %3098 = vmatprep.subr.bf16.mxu0 0
      %3099 = vmatpush1.bf16.msra.mxu0 %v3079
      %3100 = vmatprep.subr.bf16.mxu0 0
      %3101 = vmatpush1.bf16.msra.mxu0 %v3080
      %3102 = vmatprep.subr.bf16.mxu0 0
      %3103 = vmatpush1.bf16.msra.mxu0 %v3081
      %3104 = vmatprep.subr.bf16.mxu0 0
      %3105 = vmatpush1.bf16.msra.mxu0 %v3082
      %3106 = vmatprep.subr.bf16.mxu0 0
      %3107 = vmatpush1.bf16.msra.mxu0 %v3083
      %3108 = vmatprep.subr.bf16.mxu0 0
      %3109 = vmatpush1.bf16.msra.mxu0 0
      %3110 = vmatprep.subr.bf16.mxu0 0
      %3111 = vmatpush1.bf16.msra.mxu0 0
      %3112 = vmatprep.subr.bf16.mxu0 0
      %3113 = vmatpush1.bf16.msra.mxu0 0
      %3114 = vmatprep.subr.bf16.mxu0 0
      %3115 = vmatpush1.bf16.msra.mxu0 0
      %3116 = vmatprep.subr.bf16.mxu0 0
      %3117 = vmatpush1.bf16.msra.mxu0 0
      %3118 = vmatprep.subr.bf16.mxu0 0
      %3119 = vmatpush1.bf16.msra.mxu0 0
      %3120 = vmatprep.subr.bf16.mxu0 0
      %3121 = vmatpush1.bf16.msra.mxu0 0
      %3122 = vmatprep.subr.bf16.mxu0 0
      %3123 = vmatpush1.bf16.msra.mxu0 0
      %3124 = vmatprep.mubr.bf16.mxu0 0
      %3125 = vmatmul.mubr.bf16.gmra.mrb[0].mxu0 %v3042
      %v3126 = vpop.f32.mrb[0].mxu0
      %v3127 = vadd.f32 0.0, %v3126
      %v3128 = vpop.f32.mrb[0].mxu0
      %v3129 = vpop.f32.mrb[0].mxu0
      %v3130 = vpop.f32.mrb[0].mxu0
      %3131 = vdwg.mxu0
      %v3132 = vadd.f32 %v3023, %v3127
      %s3133 = scalar_lea.vmem %s3, 320
      %v3134 = vld [vmem:[%s3133] sm:$0xf]
      %v3135 = vld [vmem:[%s3133 + $0x4] sm:$0xf]
      %v3136 = vld [vmem:[%s3133 + $0x8] sm:$0xf]
      %v3137 = vld [vmem:[%s3133 + $0xc] sm:$0xf]
      %v3138 = vld [vmem:[%s3133 + $0x10] sm:$0xf]
      %v3139 = vld [vmem:[%s3133 + $0x14] sm:$0xf]
      %v3140 = vld [vmem:[%s3133 + $0x18] sm:$0xf]
      %v3141 = vld [vmem:[%s3133 + $0x1c] sm:$0xf]
      %v3142 = vld [vmem:[%s3133 + $0x20] sm:$0xf]
      %v3143 = vld [vmem:[%s3133 + $0x24] sm:$0xf]
      %v3144 = vld [vmem:[%s3133 + $0x28] sm:$0xf]
      %v3145 = vld [vmem:[%s3133 + $0x2c] sm:$0xf]
      %v3146 = vld [vmem:[%s3133 + $0x30] sm:$0xf]
      %v3147 = vld [vmem:[%s3133 + $0x34] sm:$0xf]
      %v3148 = vld [vmem:[%s3133 + $0x38] sm:$0xf]
      %v3149 = vld [vmem:[%s3133 + $0x3c] sm:$0xf]
      %s3150 = scalar_lea.vmem %s3, 384
      %v3151 = vld [vmem:[%s3150] sm:$0xf]
      %v3152 = vld [vmem:[%s3150 + $0x4] sm:$0xf]
      %v3153 = vld [vmem:[%s3150 + $0x8] sm:$0xf]
      %v3154 = vld [vmem:[%s3150 + $0xc] sm:$0xf]
      %v3155 = vld [vmem:[%s3150 + $0x10] sm:$0xf]
      %v3156 = vld [vmem:[%s3150 + $0x14] sm:$0xf]
      %v3157 = vld [vmem:[%s3150 + $0x18] sm:$0xf]
      %v3158 = vld [vmem:[%s3150 + $0x1c] sm:$0xf]
      %v3159 = vld [vmem:[%s3150 + $0x20] sm:$0xf]
      %v3160 = vld [vmem:[%s3150 + $0x24] sm:$0xf]
      %v3161 = vld [vmem:[%s3150 + $0x28] sm:$0xf]
      %v3162 = vld [vmem:[%s3150 + $0x2c] sm:$0xf]
      %v3163 = vld [vmem:[%s3150 + $0x30] sm:$0xf]
      %v3164 = vld [vmem:[%s3150 + $0x34] sm:$0xf]
      %v3165 = vld [vmem:[%s3150 + $0x38] sm:$0xf]
      %v3166 = vld [vmem:[%s3150 + $0x3c] sm:$0xf]
      %v3183 = vunpack.c.l.b16 %v3151
      %v3184 = vunpack.c.l.b16 %v3152
      %v3185 = vunpack.c.l.b16 %v3153
      %v3186 = vunpack.c.l.b16 %v3154
      %v3187 = vunpack.c.l.b16 %v3155
      %v3188 = vunpack.c.l.b16 %v3156
      %v3189 = vunpack.c.l.b16 %v3157
      %v3190 = vunpack.c.l.b16 %v3158
      %v3191 = vunpack.c.l.b16 %v3159
      %v3192 = vunpack.c.l.b16 %v3160
      %v3193 = vunpack.c.l.b16 %v3161
      %v3194 = vunpack.c.l.b16 %v3162
      %v3195 = vunpack.c.l.b16 %v3163
      %v3196 = vunpack.c.l.b16 %v3164
      %v3197 = vunpack.c.l.b16 %v3165
      %v3198 = vunpack.c.l.b16 %v3166
      %v3199 = vpack.c.b16 %v3184, %v3183
      %v3200 = vpack.c.b16 %v3186, %v3185
      %v3201 = vpack.c.b16 %v3188, %v3187
      %v3202 = vpack.c.b16 %v3190, %v3189
      %v3203 = vpack.c.b16 %v3192, %v3191
      %v3204 = vpack.c.b16 %v3194, %v3193
      %v3205 = vpack.c.b16 %v3196, %v3195
      %v3206 = vpack.c.b16 %v3198, %v3197
      %3215 = vmatprep.subr.bf16.mxu0 0
      %3216 = vmatpush1.bf16.msra.mxu0 %v3199
      %3217 = vmatprep.subr.bf16.mxu0 0
      %3218 = vmatpush1.bf16.msra.mxu0 %v3200
      %3219 = vmatprep.subr.bf16.mxu0 0
      %3220 = vmatpush1.bf16.msra.mxu0 %v3201
      %3221 = vmatprep.subr.bf16.mxu0 0
      %3222 = vmatpush1.bf16.msra.mxu0 %v3202
      %3223 = vmatprep.subr.bf16.mxu0 0
      %3224 = vmatpush1.bf16.msra.mxu0 %v3203
      %3225 = vmatprep.subr.bf16.mxu0 0
      %3226 = vmatpush1.bf16.msra.mxu0 %v3204
      %3227 = vmatprep.subr.bf16.mxu0 0
      %3228 = vmatpush1.bf16.msra.mxu0 %v3205
      %3229 = vmatprep.subr.bf16.mxu0 0
      %3230 = vmatpush1.bf16.msra.mxu0 %v3206
      %3231 = vmatprep.subr.bf16.mxu0 0
      %3232 = vmatpush1.bf16.msra.mxu0 0
      %3233 = vmatprep.subr.bf16.mxu0 0
      %3234 = vmatpush1.bf16.msra.mxu0 0
      %3235 = vmatprep.subr.bf16.mxu0 0
      %3236 = vmatpush1.bf16.msra.mxu0 0
      %3237 = vmatprep.subr.bf16.mxu0 0
      %3238 = vmatpush1.bf16.msra.mxu0 0
      %3239 = vmatprep.subr.bf16.mxu0 0
      %3240 = vmatpush1.bf16.msra.mxu0 0
      %3241 = vmatprep.subr.bf16.mxu0 0
      %3242 = vmatpush1.bf16.msra.mxu0 0
      %3243 = vmatprep.subr.bf16.mxu0 0
      %3244 = vmatpush1.bf16.msra.mxu0 0
      %3245 = vmatprep.subr.bf16.mxu0 0
      %3246 = vmatpush1.bf16.msra.mxu0 0
      %3247 = vmatprep.mubr.bf16.mxu0 0
      %3248 = vmatmul.mubr.bf16.gmra.mrb[0].mxu0 %v2586
      %v3249 = vpop.f32.mrb[0].mxu0
      %v3250 = vadd.f32 0.0, %v3249
      %v3251 = vpop.f32.mrb[0].mxu0
      %v3252 = vpop.f32.mrb[0].mxu0
      %v3253 = vpop.f32.mrb[0].mxu0
      %3254 = vdwg.mxu0
      %v3271 = vunpack.c.l.b16 %v3134
      %v3272 = vunpack.c.l.b16 %v3135
      %v3273 = vunpack.c.l.b16 %v3136
      %v3274 = vunpack.c.l.b16 %v3137
      %v3275 = vunpack.c.l.b16 %v3138
      %v3276 = vunpack.c.l.b16 %v3139
      %v3277 = vunpack.c.l.b16 %v3140
      %v3278 = vunpack.c.l.b16 %v3141
      %v3279 = vunpack.c.l.b16 %v3142
      %v3280 = vunpack.c.l.b16 %v3143
      %v3281 = vunpack.c.l.b16 %v3144
      %v3282 = vunpack.c.l.b16 %v3145
      %v3283 = vunpack.c.l.b16 %v3146
      %v3284 = vunpack.c.l.b16 %v3147
      %v3285 = vunpack.c.l.b16 %v3148
      %v3286 = vunpack.c.l.b16 %v3149
      %v3287 = vpack.c.b16 %v3272, %v3271
      %v3288 = vpack.c.b16 %v3274, %v3273
      %v3289 = vpack.c.b16 %v3276, %v3275
      %v3290 = vpack.c.b16 %v3278, %v3277
      %v3291 = vpack.c.b16 %v3280, %v3279
      %v3292 = vpack.c.b16 %v3282, %v3281
      %v3293 = vpack.c.b16 %v3284, %v3283
      %v3294 = vpack.c.b16 %v3286, %v3285
      %3303 = vmatprep.subr.bf16.mxu0 0
      %3304 = vmatpush1.bf16.msra.mxu0 %v3287
      %3305 = vmatprep.subr.bf16.mxu0 0
      %3306 = vmatpush1.bf16.msra.mxu0 %v3288
      %3307 = vmatprep.subr.bf16.mxu0 0
      %3308 = vmatpush1.bf16.msra.mxu0 %v3289
      %3309 = vmatprep.subr.bf16.mxu0 0
      %3310 = vmatpush1.bf16.msra.mxu0 %v3290
      %3311 = vmatprep.subr.bf16.mxu0 0
      %3312 = vmatpush1.bf16.msra.mxu0 %v3291
      %3313 = vmatprep.subr.bf16.mxu0 0
      %3314 = vmatpush1.bf16.msra.mxu0 %v3292
      %3315 = vmatprep.subr.bf16.mxu0 0
      %3316 = vmatpush1.bf16.msra.mxu0 %v3293
      %3317 = vmatprep.subr.bf16.mxu0 0
      %3318 = vmatpush1.bf16.msra.mxu0 %v3294
      %3319 = vmatprep.subr.bf16.mxu0 0
      %3320 = vmatpush1.bf16.msra.mxu0 0
      %3321 = vmatprep.subr.bf16.mxu0 0
      %3322 = vmatpush1.bf16.msra.mxu0 0
      %3323 = vmatprep.subr.bf16.mxu0 0
      %3324 = vmatpush1.bf16.msra.mxu0 0
      %3325 = vmatprep.subr.bf16.mxu0 0
      %3326 = vmatpush1.bf16.msra.mxu0 0
      %3327 = vmatprep.subr.bf16.mxu0 0
      %3328 = vmatpush1.bf16.msra.mxu0 0
      %3329 = vmatprep.subr.bf16.mxu0 0
      %3330 = vmatpush1.bf16.msra.mxu0 0
      %3331 = vmatprep.subr.bf16.mxu0 0
      %3332 = vmatpush1.bf16.msra.mxu0 0
      %3333 = vmatprep.subr.bf16.mxu0 0
      %3334 = vmatpush1.bf16.msra.mxu0 0
      %3335 = vmatprep.mubr.bf16.mxu0 0
      %3336 = vmatmul.mubr.bf16.gmra.mrb[0].mxu0 %v1742
      %v3337 = vpop.f32.mrb[0].mxu0
      %v3338 = vadd.f32 %v3250, %v3337
      %v3339 = vpop.f32.mrb[0].mxu0
      %v3340 = vpop.f32.mrb[0].mxu0
      %v3341 = vpop.f32.mrb[0].mxu0
      %3342 = vdwg.mxu0
      %s3343 = scalar_lea.vmem %s3, 448
      %v3344 = vld [vmem:[%s3343] sm:$0xf]
      %v3345 = vld [vmem:[%s3343 + $0x4] sm:$0xf]
      %v3346 = vld [vmem:[%s3343 + $0x8] sm:$0xf]
      %v3347 = vld [vmem:[%s3343 + $0xc] sm:$0xf]
      %v3348 = vld [vmem:[%s3343 + $0x10] sm:$0xf]
      %v3349 = vld [vmem:[%s3343 + $0x14] sm:$0xf]
      %v3350 = vld [vmem:[%s3343 + $0x18] sm:$0xf]
      %v3351 = vld [vmem:[%s3343 + $0x1c] sm:$0xf]
      %v3352 = vld [vmem:[%s3343 + $0x20] sm:$0xf]
      %v3353 = vld [vmem:[%s3343 + $0x24] sm:$0xf]
      %v3354 = vld [vmem:[%s3343 + $0x28] sm:$0xf]
      %v3355 = vld [vmem:[%s3343 + $0x2c] sm:$0xf]
      %v3356 = vld [vmem:[%s3343 + $0x30] sm:$0xf]
      %v3357 = vld [vmem:[%s3343 + $0x34] sm:$0xf]
      %v3358 = vld [vmem:[%s3343 + $0x38] sm:$0xf]
      %v3359 = vld [vmem:[%s3343 + $0x3c] sm:$0xf]
      %v3376 = vunpack.c.l.b16 %v3344
      %v3377 = vunpack.c.l.b16 %v3345
      %v3378 = vunpack.c.l.b16 %v3346
      %v3379 = vunpack.c.l.b16 %v3347
      %v3380 = vunpack.c.l.b16 %v3348
      %v3381 = vunpack.c.l.b16 %v3349
      %v3382 = vunpack.c.l.b16 %v3350
      %v3383 = vunpack.c.l.b16 %v3351
      %v3384 = vunpack.c.l.b16 %v3352
      %v3385 = vunpack.c.l.b16 %v3353
      %v3386 = vunpack.c.l.b16 %v3354
      %v3387 = vunpack.c.l.b16 %v3355
      %v3388 = vunpack.c.l.b16 %v3356
      %v3389 = vunpack.c.l.b16 %v3357
      %v3390 = vunpack.c.l.b16 %v3358
      %v3391 = vunpack.c.l.b16 %v3359
      %v3392 = vpack.c.b16 %v3377, %v3376
      %v3393 = vpack.c.b16 %v3379, %v3378
      %v3394 = vpack.c.b16 %v3381, %v3380
      %v3395 = vpack.c.b16 %v3383, %v3382
      %v3396 = vpack.c.b16 %v3385, %v3384
      %v3397 = vpack.c.b16 %v3387, %v3386
      %v3398 = vpack.c.b16 %v3389, %v3388
      %v3399 = vpack.c.b16 %v3391, %v3390
      %3408 = vmatprep.subr.bf16.mxu0 0
      %3409 = vmatpush1.bf16.msra.mxu0 %v3392
      %3410 = vmatprep.subr.bf16.mxu0 0
      %3411 = vmatpush1.bf16.msra.mxu0 %v3393
      %3412 = vmatprep.subr.bf16.mxu0 0
      %3413 = vmatpush1.bf16.msra.mxu0 %v3394
      %3414 = vmatprep.subr.bf16.mxu0 0
      %3415 = vmatpush1.bf16.msra.mxu0 %v3395
      %3416 = vmatprep.subr.bf16.mxu0 0
      %3417 = vmatpush1.bf16.msra.mxu0 %v3396
      %3418 = vmatprep.subr.bf16.mxu0 0
      %3419 = vmatpush1.bf16.msra.mxu0 %v3397
      %3420 = vmatprep.subr.bf16.mxu0 0
      %3421 = vmatpush1.bf16.msra.mxu0 %v3398
      %3422 = vmatprep.subr.bf16.mxu0 0
      %3423 = vmatpush1.bf16.msra.mxu0 %v3399
      %3424 = vmatprep.subr.bf16.mxu0 0
      %3425 = vmatpush1.bf16.msra.mxu0 0
      %3426 = vmatprep.subr.bf16.mxu0 0
      %3427 = vmatpush1.bf16.msra.mxu0 0
      %3428 = vmatprep.subr.bf16.mxu0 0
      %3429 = vmatpush1.bf16.msra.mxu0 0
      %3430 = vmatprep.subr.bf16.mxu0 0
      %3431 = vmatpush1.bf16.msra.mxu0 0
      %3432 = vmatprep.subr.bf16.mxu0 0
      %3433 = vmatpush1.bf16.msra.mxu0 0
      %3434 = vmatprep.subr.bf16.mxu0 0
      %3435 = vmatpush1.bf16.msra.mxu0 0
      %3436 = vmatprep.subr.bf16.mxu0 0
      %3437 = vmatpush1.bf16.msra.mxu0 0
      %3438 = vmatprep.subr.bf16.mxu0 0
      %3439 = vmatpush1.bf16.msra.mxu0 0
      %3440 = vmatprep.mubr.bf16.mxu0 0
      %3441 = vmatmul.mubr.bf16.gmra.mrb[0].mxu0 %v2819
      %v3442 = vpop.f32.mrb[0].mxu0
      %v3443 = vadd.f32 0.0, %v3442
      %v3444 = vpop.f32.mrb[0].mxu0
      %v3445 = vpop.f32.mrb[0].mxu0
      %v3446 = vpop.f32.mrb[0].mxu0
      %3447 = vdwg.mxu0
      %v3448 = vadd.f32 %v3338, %v3443
      %s3449 = scalar_lea.vmem %s3, 512
      %v3450 = vld [vmem:[%s3449] sm:$0xf]
      %v3451 = vld [vmem:[%s3449 + $0x4] sm:$0xf]
      %v3452 = vld [vmem:[%s3449 + $0x8] sm:$0xf]
      %v3453 = vld [vmem:[%s3449 + $0xc] sm:$0xf]
      %v3454 = vld [vmem:[%s3449 + $0x10] sm:$0xf]
      %v3455 = vld [vmem:[%s3449 + $0x14] sm:$0xf]
      %v3456 = vld [vmem:[%s3449 + $0x18] sm:$0xf]
      %v3457 = vld [vmem:[%s3449 + $0x1c] sm:$0xf]
      %v3458 = vld [vmem:[%s3449 + $0x20] sm:$0xf]
      %v3459 = vld [vmem:[%s3449 + $0x24] sm:$0xf]
      %v3460 = vld [vmem:[%s3449 + $0x28] sm:$0xf]
      %v3461 = vld [vmem:[%s3449 + $0x2c] sm:$0xf]
      %v3462 = vld [vmem:[%s3449 + $0x30] sm:$0xf]
      %v3463 = vld [vmem:[%s3449 + $0x34] sm:$0xf]
      %v3464 = vld [vmem:[%s3449 + $0x38] sm:$0xf]
      %v3465 = vld [vmem:[%s3449 + $0x3c] sm:$0xf]
      %v3482 = vunpack.c.l.b16 %v3450
      %v3483 = vunpack.c.l.b16 %v3451
      %v3484 = vunpack.c.l.b16 %v3452
      %v3485 = vunpack.c.l.b16 %v3453
      %v3486 = vunpack.c.l.b16 %v3454
      %v3487 = vunpack.c.l.b16 %v3455
      %v3488 = vunpack.c.l.b16 %v3456
      %v3489 = vunpack.c.l.b16 %v3457
      %v3490 = vunpack.c.l.b16 %v3458
      %v3491 = vunpack.c.l.b16 %v3459
      %v3492 = vunpack.c.l.b16 %v3460
      %v3493 = vunpack.c.l.b16 %v3461
      %v3494 = vunpack.c.l.b16 %v3462
      %v3495 = vunpack.c.l.b16 %v3463
      %v3496 = vunpack.c.l.b16 %v3464
      %v3497 = vunpack.c.l.b16 %v3465
      %v3498 = vpack.c.b16 %v3483, %v3482
      %v3499 = vpack.c.b16 %v3485, %v3484
      %v3500 = vpack.c.b16 %v3487, %v3486
      %v3501 = vpack.c.b16 %v3489, %v3488
      %v3502 = vpack.c.b16 %v3491, %v3490
      %v3503 = vpack.c.b16 %v3493, %v3492
      %v3504 = vpack.c.b16 %v3495, %v3494
      %v3505 = vpack.c.b16 %v3497, %v3496
      %3514 = vmatprep.subr.bf16.mxu0 0
      %3515 = vmatpush1.bf16.msra.mxu0 %v3498
      %3516 = vmatprep.subr.bf16.mxu0 0
      %3517 = vmatpush1.bf16.msra.mxu0 %v3499
      %3518 = vmatprep.subr.bf16.mxu0 0
      %3519 = vmatpush1.bf16.msra.mxu0 %v3500
      %3520 = vmatprep.subr.bf16.mxu0 0
      %3521 = vmatpush1.bf16.msra.mxu0 %v3501
      %3522 = vmatprep.subr.bf16.mxu0 0
      %3523 = vmatpush1.bf16.msra.mxu0 %v3502
      %3524 = vmatprep.subr.bf16.mxu0 0
      %3525 = vmatpush1.bf16.msra.mxu0 %v3503
      %3526 = vmatprep.subr.bf16.mxu0 0
      %3527 = vmatpush1.bf16.msra.mxu0 %v3504
      %3528 = vmatprep.subr.bf16.mxu0 0
      %3529 = vmatpush1.bf16.msra.mxu0 %v3505
      %3530 = vmatprep.subr.bf16.mxu0 0
      %3531 = vmatpush1.bf16.msra.mxu0 0
      %3532 = vmatprep.subr.bf16.mxu0 0
      %3533 = vmatpush1.bf16.msra.mxu0 0
      %3534 = vmatprep.subr.bf16.mxu0 0
      %3535 = vmatpush1.bf16.msra.mxu0 0
      %3536 = vmatprep.subr.bf16.mxu0 0
      %3537 = vmatpush1.bf16.msra.mxu0 0
      %3538 = vmatprep.subr.bf16.mxu0 0
      %3539 = vmatpush1.bf16.msra.mxu0 0
      %3540 = vmatprep.subr.bf16.mxu0 0
      %3541 = vmatpush1.bf16.msra.mxu0 0
      %3542 = vmatprep.subr.bf16.mxu0 0
      %3543 = vmatpush1.bf16.msra.mxu0 0
      %3544 = vmatprep.subr.bf16.mxu0 0
      %3545 = vmatpush1.bf16.msra.mxu0 0
      %3546 = vmatprep.mubr.bf16.mxu0 0
      %3547 = vmatmul.mubr.bf16.gmra.mrb[0].mxu0 %v2933
      %v3548 = vpop.f32.mrb[0].mxu0
      %v3549 = vadd.f32 0.0, %v3548
      %v3550 = vpop.f32.mrb[0].mxu0
      %v3551 = vpop.f32.mrb[0].mxu0
      %v3552 = vpop.f32.mrb[0].mxu0
      %3553 = vdwg.mxu0
      %v3554 = vadd.f32 %v3448, %v3549
      %s3555 = scalar_lea.vmem %s3, 576
      %v3556 = vld [vmem:[%s3555] sm:$0xf]
      %v3557 = vld [vmem:[%s3555 + $0x4] sm:$0xf]
      %v3558 = vld [vmem:[%s3555 + $0x8] sm:$0xf]
      %v3559 = vld [vmem:[%s3555 + $0xc] sm:$0xf]
      %v3560 = vld [vmem:[%s3555 + $0x10] sm:$0xf]
      %v3561 = vld [vmem:[%s3555 + $0x14] sm:$0xf]
      %v3562 = vld [vmem:[%s3555 + $0x18] sm:$0xf]
      %v3563 = vld [vmem:[%s3555 + $0x1c] sm:$0xf]
      %v3564 = vld [vmem:[%s3555 + $0x20] sm:$0xf]
      %v3565 = vld [vmem:[%s3555 + $0x24] sm:$0xf]
      %v3566 = vld [vmem:[%s3555 + $0x28] sm:$0xf]
      %v3567 = vld [vmem:[%s3555 + $0x2c] sm:$0xf]
      %v3568 = vld [vmem:[%s3555 + $0x30] sm:$0xf]
      %v3569 = vld [vmem:[%s3555 + $0x34] sm:$0xf]
      %v3570 = vld [vmem:[%s3555 + $0x38] sm:$0xf]
      %v3571 = vld [vmem:[%s3555 + $0x3c] sm:$0xf]
      %v3588 = vunpack.c.l.b16 %v3556
      %v3589 = vunpack.c.l.b16 %v3557
      %v3590 = vunpack.c.l.b16 %v3558
      %v3591 = vunpack.c.l.b16 %v3559
      %v3592 = vunpack.c.l.b16 %v3560
      %v3593 = vunpack.c.l.b16 %v3561
      %v3594 = vunpack.c.l.b16 %v3562
      %v3595 = vunpack.c.l.b16 %v3563
      %v3596 = vunpack.c.l.b16 %v3564
      %v3597 = vunpack.c.l.b16 %v3565
      %v3598 = vunpack.c.l.b16 %v3566
      %v3599 = vunpack.c.l.b16 %v3567
      %v3600 = vunpack.c.l.b16 %v3568
      %v3601 = vunpack.c.l.b16 %v3569
      %v3602 = vunpack.c.l.b16 %v3570
      %v3603 = vunpack.c.l.b16 %v3571
      %v3604 = vpack.c.b16 %v3589, %v3588
      %v3605 = vpack.c.b16 %v3591, %v3590
      %v3606 = vpack.c.b16 %v3593, %v3592
      %v3607 = vpack.c.b16 %v3595, %v3594
      %v3608 = vpack.c.b16 %v3597, %v3596
      %v3609 = vpack.c.b16 %v3599, %v3598
      %v3610 = vpack.c.b16 %v3601, %v3600
      %v3611 = vpack.c.b16 %v3603, %v3602
      %3620 = vmatprep.subr.bf16.mxu0 0
      %3621 = vmatpush1.bf16.msra.mxu0 %v3604
      %3622 = vmatprep.subr.bf16.mxu0 0
      %3623 = vmatpush1.bf16.msra.mxu0 %v3605
      %3624 = vmatprep.subr.bf16.mxu0 0
      %3625 = vmatpush1.bf16.msra.mxu0 %v3606
      %3626 = vmatprep.subr.bf16.mxu0 0
      %3627 = vmatpush1.bf16.msra.mxu0 %v3607
      %3628 = vmatprep.subr.bf16.mxu0 0
      %3629 = vmatpush1.bf16.msra.mxu0 %v3608
      %3630 = vmatprep.subr.bf16.mxu0 0
      %3631 = vmatpush1.bf16.msra.mxu0 %v3609
      %3632 = vmatprep.subr.bf16.mxu0 0
      %3633 = vmatpush1.bf16.msra.mxu0 %v3610
      %3634 = vmatprep.subr.bf16.mxu0 0
      %3635 = vmatpush1.bf16.msra.mxu0 %v3611
      %3636 = vmatprep.subr.bf16.mxu0 0
      %3637 = vmatpush1.bf16.msra.mxu0 0
      %3638 = vmatprep.subr.bf16.mxu0 0
      %3639 = vmatpush1.bf16.msra.mxu0 0
      %3640 = vmatprep.subr.bf16.mxu0 0
      %3641 = vmatpush1.bf16.msra.mxu0 0
      %3642 = vmatprep.subr.bf16.mxu0 0
      %3643 = vmatpush1.bf16.msra.mxu0 0
      %3644 = vmatprep.subr.bf16.mxu0 0
      %3645 = vmatpush1.bf16.msra.mxu0 0
      %3646 = vmatprep.subr.bf16.mxu0 0
      %3647 = vmatpush1.bf16.msra.mxu0 0
      %3648 = vmatprep.subr.bf16.mxu0 0
      %3649 = vmatpush1.bf16.msra.mxu0 0
      %3650 = vmatprep.subr.bf16.mxu0 0
      %3651 = vmatpush1.bf16.msra.mxu0 0
      %3652 = vmatprep.mubr.bf16.mxu0 0
      %3653 = vmatmul.mubr.bf16.gmra.mrb[0].mxu0 %v3042
      %v3654 = vpop.f32.mrb[0].mxu0
      %v3655 = vadd.f32 0.0, %v3654
      %v3656 = vpop.f32.mrb[0].mxu0
      %v3657 = vpop.f32.mrb[0].mxu0
      %v3658 = vpop.f32.mrb[0].mxu0
      %3659 = vdwg.mxu0
      %v3660 = vadd.f32 %v3554, %v3655
      %v3661 = vmax.f32 %v3132, %v3660
      %3662 = vmatprep.subr.bf16.mxu0 0
      %3663 = vmatpush1.bf16.msra.mxu0 %v2652
      %3664 = vmatprep.subr.bf16.mxu0 0
      %3665 = vmatpush1.bf16.msra.mxu0 %v2653
      %3666 = vmatprep.subr.bf16.mxu0 0
      %3667 = vmatpush1.bf16.msra.mxu0 %v2654
      %3668 = vmatprep.subr.bf16.mxu0 0
      %3669 = vmatpush1.bf16.msra.mxu0 %v2655
      %3670 = vmatprep.subr.bf16.mxu0 0
      %3671 = vmatpush1.bf16.msra.mxu0 %v2656
      %3672 = vmatprep.subr.bf16.mxu0 0
      %3673 = vmatpush1.bf16.msra.mxu0 %v2657
      %3674 = vmatprep.subr.bf16.mxu0 0
      %3675 = vmatpush1.bf16.msra.mxu0 %v2658
      %3676 = vmatprep.subr.bf16.mxu0 0
      %3677 = vmatpush1.bf16.msra.mxu0 %v2659
      %3678 = vmatprep.subr.bf16.mxu0 0
      %3679 = vmatpush1.bf16.msra.mxu0 0
      %3680 = vmatprep.subr.bf16.mxu0 0
      %3681 = vmatpush1.bf16.msra.mxu0 0
      %3682 = vmatprep.subr.bf16.mxu0 0
      %3683 = vmatpush1.bf16.msra.mxu0 0
      %3684 = vmatprep.subr.bf16.mxu0 0
      %3685 = vmatpush1.bf16.msra.mxu0 0
      %3686 = vmatprep.subr.bf16.mxu0 0
      %3687 = vmatpush1.bf16.msra.mxu0 0
      %3688 = vmatprep.subr.bf16.mxu0 0
      %3689 = vmatpush1.bf16.msra.mxu0 0
      %3690 = vmatprep.subr.bf16.mxu0 0
      %3691 = vmatpush1.bf16.msra.mxu0 0
      %3692 = vmatprep.subr.bf16.mxu0 0
      %3693 = vmatpush1.bf16.msra.mxu0 0
      %3694 = vmatprep.mubr.bf16.mxu0 0
      %3695 = vmatmul.mubr.bf16.gmra.mrb[0].mxu0 %v2819
      %v3696 = vpop.f32.mrb[0].mxu0
      %v3697 = vadd.f32 0.0, %v3696
      %v3698 = vpop.f32.mrb[0].mxu0
      %v3699 = vpop.f32.mrb[0].mxu0
      %v3700 = vpop.f32.mrb[0].mxu0
      %3701 = vdwg.mxu0
      %3702 = vmatprep.subr.bf16.mxu0 0
      %3703 = vmatpush1.bf16.msra.mxu0 %v2740
      %3704 = vmatprep.subr.bf16.mxu0 0
      %3705 = vmatpush1.bf16.msra.mxu0 %v2741
      %3706 = vmatprep.subr.bf16.mxu0 0
      %3707 = vmatpush1.bf16.msra.mxu0 %v2742
      %3708 = vmatprep.subr.bf16.mxu0 0
      %3709 = vmatpush1.bf16.msra.mxu0 %v2743
      %3710 = vmatprep.subr.bf16.mxu0 0
      %3711 = vmatpush1.bf16.msra.mxu0 %v2744
      %3712 = vmatprep.subr.bf16.mxu0 0
      %3713 = vmatpush1.bf16.msra.mxu0 %v2745
      %3714 = vmatprep.subr.bf16.mxu0 0
      %3715 = vmatpush1.bf16.msra.mxu0 %v2746
      %3716 = vmatprep.subr.bf16.mxu0 0
      %3717 = vmatpush1.bf16.msra.mxu0 %v2747
      %3718 = vmatprep.subr.bf16.mxu0 0
      %3719 = vmatpush1.bf16.msra.mxu0 0
      %3720 = vmatprep.subr.bf16.mxu0 0
      %3721 = vmatpush1.bf16.msra.mxu0 0
      %3722 = vmatprep.subr.bf16.mxu0 0
      %3723 = vmatpush1.bf16.msra.mxu0 0
      %3724 = vmatprep.subr.bf16.mxu0 0
      %3725 = vmatpush1.bf16.msra.mxu0 0
      %3726 = vmatprep.subr.bf16.mxu0 0
      %3727 = vmatpush1.bf16.msra.mxu0 0
      %3728 = vmatprep.subr.bf16.mxu0 0
      %3729 = vmatpush1.bf16.msra.mxu0 0
      %3730 = vmatprep.subr.bf16.mxu0 0
      %3731 = vmatpush1.bf16.msra.mxu0 0
      %3732 = vmatprep.subr.bf16.mxu0 0
      %3733 = vmatpush1.bf16.msra.mxu0 0
      %3734 = vmatprep.mubr.bf16.mxu0 0
      %3735 = vmatmul.mubr.bf16.gmra.mrb[0].mxu0 %v2586
      %v3736 = vpop.f32.mrb[0].mxu0
      %v3737 = vadd.f32 %v3697, %v3736
      %v3738 = vpop.f32.mrb[0].mxu0
      %v3739 = vpop.f32.mrb[0].mxu0
      %v3740 = vpop.f32.mrb[0].mxu0
      %3741 = vdwg.mxu0
      %3742 = vmatprep.subr.bf16.mxu0 0
      %3743 = vmatpush1.bf16.msra.mxu0 %v2853
      %3744 = vmatprep.subr.bf16.mxu0 0
      %3745 = vmatpush1.bf16.msra.mxu0 %v2854
      %3746 = vmatprep.subr.bf16.mxu0 0
      %3747 = vmatpush1.bf16.msra.mxu0 %v2855
      %3748 = vmatprep.subr.bf16.mxu0 0
      %3749 = vmatpush1.bf16.msra.mxu0 %v2856
      %3750 = vmatprep.subr.bf16.mxu0 0
      %3751 = vmatpush1.bf16.msra.mxu0 %v2857
      %3752 = vmatprep.subr.bf16.mxu0 0
      %3753 = vmatpush1.bf16.msra.mxu0 %v2858
      %3754 = vmatprep.subr.bf16.mxu0 0
      %3755 = vmatpush1.bf16.msra.mxu0 %v2859
      %3756 = vmatprep.subr.bf16.mxu0 0
      %3757 = vmatpush1.bf16.msra.mxu0 %v2860
      %3758 = vmatprep.subr.bf16.mxu0 0
      %3759 = vmatpush1.bf16.msra.mxu0 0
      %3760 = vmatprep.subr.bf16.mxu0 0
      %3761 = vmatpush1.bf16.msra.mxu0 0
      %3762 = vmatprep.subr.bf16.mxu0 0
      %3763 = vmatpush1.bf16.msra.mxu0 0
      %3764 = vmatprep.subr.bf16.mxu0 0
      %3765 = vmatpush1.bf16.msra.mxu0 0
      %3766 = vmatprep.subr.bf16.mxu0 0
      %3767 = vmatpush1.bf16.msra.mxu0 0
      %3768 = vmatprep.subr.bf16.mxu0 0
      %3769 = vmatpush1.bf16.msra.mxu0 0
      %3770 = vmatprep.subr.bf16.mxu0 0
      %3771 = vmatpush1.bf16.msra.mxu0 0
      %3772 = vmatprep.subr.bf16.mxu0 0
      %3773 = vmatpush1.bf16.msra.mxu0 0
      %3774 = vmatprep.mubr.bf16.mxu0 0
      %3775 = vmatmul.mubr.bf16.gmra.mrb[0].mxu0 %v2933
      %v3776 = vpop.f32.mrb[0].mxu0
      %v3777 = vadd.f32 0.0, %v3776
      %v3778 = vpop.f32.mrb[0].mxu0
      %v3779 = vpop.f32.mrb[0].mxu0
      %v3780 = vpop.f32.mrb[0].mxu0
      %3781 = vdwg.mxu0
      %v3782 = vadd.f32 %v3737, %v3777
      %3783 = vmatprep.subr.bf16.mxu0 0
      %3784 = vmatpush1.bf16.msra.mxu0 %v2967
      %3785 = vmatprep.subr.bf16.mxu0 0
      %3786 = vmatpush1.bf16.msra.mxu0 %v2968
      %3787 = vmatprep.subr.bf16.mxu0 0
      %3788 = vmatpush1.bf16.msra.mxu0 %v2969
      %3789 = vmatprep.subr.bf16.mxu0 0
      %3790 = vmatpush1.bf16.msra.mxu0 %v2970
      %3791 = vmatprep.subr.bf16.mxu0 0
      %3792 = vmatpush1.bf16.msra.mxu0 %v2971
      %3793 = vmatprep.subr.bf16.mxu0 0
      %3794 = vmatpush1.bf16.msra.mxu0 %v2972
      %3795 = vmatprep.subr.bf16.mxu0 0
      %3796 = vmatpush1.bf16.msra.mxu0 %v2973
      %3797 = vmatprep.subr.bf16.mxu0 0
      %3798 = vmatpush1.bf16.msra.mxu0 %v2974
      %3799 = vmatprep.subr.bf16.mxu0 0
      %3800 = vmatpush1.bf16.msra.mxu0 0
      %3801 = vmatprep.subr.bf16.mxu0 0
      %3802 = vmatpush1.bf16.msra.mxu0 0
      %3803 = vmatprep.subr.bf16.mxu0 0
      %3804 = vmatpush1.bf16.msra.mxu0 0
      %3805 = vmatprep.subr.bf16.mxu0 0
      %3806 = vmatpush1.bf16.msra.mxu0 0
      %3807 = vmatprep.subr.bf16.mxu0 0
      %3808 = vmatpush1.bf16.msra.mxu0 0
      %3809 = vmatprep.subr.bf16.mxu0 0
      %3810 = vmatpush1.bf16.msra.mxu0 0
      %3811 = vmatprep.subr.bf16.mxu0 0
      %3812 = vmatpush1.bf16.msra.mxu0 0
      %3813 = vmatprep.subr.bf16.mxu0 0
      %3814 = vmatpush1.bf16.msra.mxu0 0
      %3815 = vmatprep.mubr.bf16.mxu0 0
      %3816 = vmatmul.mubr.bf16.gmra.mrb[0].mxu0 %v3042
      %v3817 = vpop.f32.mrb[0].mxu0
      %v3818 = vadd.f32 0.0, %v3817
      %v3819 = vpop.f32.mrb[0].mxu0
      %v3820 = vpop.f32.mrb[0].mxu0
      %v3821 = vpop.f32.mrb[0].mxu0
      %3822 = vdwg.mxu0
      %v3823 = vadd.f32 %v3782, %v3818
      %v3825 = vrot.slane %v2586, 1
      %3827 = vmatprep.subr.bf16.mxu0 0
      %3828 = vmatpush1.bf16.msra.mxu0 %v3076
      %3829 = vmatprep.subr.bf16.mxu0 0
      %3830 = vmatpush1.bf16.msra.mxu0 %v3077
      %3831 = vmatprep.subr.bf16.mxu0 0
      %3832 = vmatpush1.bf16.msra.mxu0 %v3078
      %3833 = vmatprep.subr.bf16.mxu0 0
      %3834 = vmatpush1.bf16.msra.mxu0 %v3079
      %3835 = vmatprep.subr.bf16.mxu0 0
      %3836 = vmatpush1.bf16.msra.mxu0 %v3080
      %3837 = vmatprep.subr.bf16.mxu0 0
      %3838 = vmatpush1.bf16.msra.mxu0 %v3081
      %3839 = vmatprep.subr.bf16.mxu0 0
      %3840 = vmatpush1.bf16.msra.mxu0 %v3082
      %3841 = vmatprep.subr.bf16.mxu0 0
      %3842 = vmatpush1.bf16.msra.mxu0 %v3083
      %3843 = vmatprep.subr.bf16.mxu0 0
      %3844 = vmatpush1.bf16.msra.mxu0 0
      %3845 = vmatprep.subr.bf16.mxu0 0
      %3846 = vmatpush1.bf16.msra.mxu0 0
      %3847 = vmatprep.subr.bf16.mxu0 0
      %3848 = vmatpush1.bf16.msra.mxu0 0
      %3849 = vmatprep.subr.bf16.mxu0 0
      %3850 = vmatpush1.bf16.msra.mxu0 0
      %3851 = vmatprep.subr.bf16.mxu0 0
      %3852 = vmatpush1.bf16.msra.mxu0 0
      %3853 = vmatprep.subr.bf16.mxu0 0
      %3854 = vmatpush1.bf16.msra.mxu0 0
      %3855 = vmatprep.subr.bf16.mxu0 0
      %3856 = vmatpush1.bf16.msra.mxu0 0
      %3857 = vmatprep.subr.bf16.mxu0 0
      %3858 = vmatpush1.bf16.msra.mxu0 0
      %3859 = vmatprep.mubr.bf16.mxu0 0
      %3860 = vmatmul.mubr.bf16.gmra.mrb[0].mxu0 %v3825
      %v3861 = vpop.f32.mrb[0].mxu0
      %v3862 = vadd.f32 0.0, %v3861
      %v3863 = vpop.f32.mrb[0].mxu0
      %v3864 = vpop.f32.mrb[0].mxu0
      %v3865 = vpop.f32.mrb[0].mxu0
      %3866 = vdwg.mxu0
      %v3867 = vadd.f32 %v3823, %v3862
      %v3868 = vmax.f32 %v3661, %v3867
      %3869 = vmatprep.subr.bf16.mxu0 0
      %3870 = vmatpush1.bf16.msra.mxu0 %v3199
      %3871 = vmatprep.subr.bf16.mxu0 0
      %3872 = vmatpush1.bf16.msra.mxu0 %v3200
      %3873 = vmatprep.subr.bf16.mxu0 0
      %3874 = vmatpush1.bf16.msra.mxu0 %v3201
      %3875 = vmatprep.subr.bf16.mxu0 0
      %3876 = vmatpush1.bf16.msra.mxu0 %v3202
      %3877 = vmatprep.subr.bf16.mxu0 0
      %3878 = vmatpush1.bf16.msra.mxu0 %v3203
      %3879 = vmatprep.subr.bf16.mxu0 0
      %3880 = vmatpush1.bf16.msra.mxu0 %v3204
      %3881 = vmatprep.subr.bf16.mxu0 0
      %3882 = vmatpush1.bf16.msra.mxu0 %v3205
      %3883 = vmatprep.subr.bf16.mxu0 0
      %3884 = vmatpush1.bf16.msra.mxu0 %v3206
      %3885 = vmatprep.subr.bf16.mxu0 0
      %3886 = vmatpush1.bf16.msra.mxu0 0
      %3887 = vmatprep.subr.bf16.mxu0 0
      %3888 = vmatpush1.bf16.msra.mxu0 0
      %3889 = vmatprep.subr.bf16.mxu0 0
      %3890 = vmatpush1.bf16.msra.mxu0 0
      %3891 = vmatprep.subr.bf16.mxu0 0
      %3892 = vmatpush1.bf16.msra.mxu0 0
      %3893 = vmatprep.subr.bf16.mxu0 0
      %3894 = vmatpush1.bf16.msra.mxu0 0
      %3895 = vmatprep.subr.bf16.mxu0 0
      %3896 = vmatpush1.bf16.msra.mxu0 0
      %3897 = vmatprep.subr.bf16.mxu0 0
      %3898 = vmatpush1.bf16.msra.mxu0 0
      %3899 = vmatprep.subr.bf16.mxu0 0
      %3900 = vmatpush1.bf16.msra.mxu0 0
      %3901 = vmatprep.mubr.bf16.mxu0 0
      %3902 = vmatmul.mubr.bf16.gmra.mrb[0].mxu0 %v2819
      %v3903 = vpop.f32.mrb[0].mxu0
      %v3904 = vadd.f32 0.0, %v3903
      %v3905 = vpop.f32.mrb[0].mxu0
      %v3906 = vpop.f32.mrb[0].mxu0
      %v3907 = vpop.f32.mrb[0].mxu0
      %3908 = vdwg.mxu0
      %3909 = vmatprep.subr.bf16.mxu0 0
      %3910 = vmatpush1.bf16.msra.mxu0 %v3287
      %3911 = vmatprep.subr.bf16.mxu0 0
      %3912 = vmatpush1.bf16.msra.mxu0 %v3288
      %3913 = vmatprep.subr.bf16.mxu0 0
      %3914 = vmatpush1.bf16.msra.mxu0 %v3289
      %3915 = vmatprep.subr.bf16.mxu0 0
      %3916 = vmatpush1.bf16.msra.mxu0 %v3290
      %3917 = vmatprep.subr.bf16.mxu0 0
      %3918 = vmatpush1.bf16.msra.mxu0 %v3291
      %3919 = vmatprep.subr.bf16.mxu0 0
      %3920 = vmatpush1.bf16.msra.mxu0 %v3292
      %3921 = vmatprep.subr.bf16.mxu0 0
      %3922 = vmatpush1.bf16.msra.mxu0 %v3293
      %3923 = vmatprep.subr.bf16.mxu0 0
      %3924 = vmatpush1.bf16.msra.mxu0 %v3294
      %3925 = vmatprep.subr.bf16.mxu0 0
      %3926 = vmatpush1.bf16.msra.mxu0 0
      %3927 = vmatprep.subr.bf16.mxu0 0
      %3928 = vmatpush1.bf16.msra.mxu0 0
      %3929 = vmatprep.subr.bf16.mxu0 0
      %3930 = vmatpush1.bf16.msra.mxu0 0
      %3931 = vmatprep.subr.bf16.mxu0 0
      %3932 = vmatpush1.bf16.msra.mxu0 0
      %3933 = vmatprep.subr.bf16.mxu0 0
      %3934 = vmatpush1.bf16.msra.mxu0 0
      %3935 = vmatprep.subr.bf16.mxu0 0
      %3936 = vmatpush1.bf16.msra.mxu0 0
      %3937 = vmatprep.subr.bf16.mxu0 0
      %3938 = vmatpush1.bf16.msra.mxu0 0
      %3939 = vmatprep.subr.bf16.mxu0 0
      %3940 = vmatpush1.bf16.msra.mxu0 0
      %3941 = vmatprep.mubr.bf16.mxu0 0
      %3942 = vmatmul.mubr.bf16.gmra.mrb[0].mxu0 %v2586
      %v3943 = vpop.f32.mrb[0].mxu0
      %v3944 = vadd.f32 %v3904, %v3943
      %v3945 = vpop.f32.mrb[0].mxu0
      %v3946 = vpop.f32.mrb[0].mxu0
      %v3947 = vpop.f32.mrb[0].mxu0
      %3948 = vdwg.mxu0
      %3949 = vmatprep.subr.bf16.mxu0 0
      %3950 = vmatpush1.bf16.msra.mxu0 %v3392
      %3951 = vmatprep.subr.bf16.mxu0 0
      %3952 = vmatpush1.bf16.msra.mxu0 %v3393
      %3953 = vmatprep.subr.bf16.mxu0 0
      %3954 = vmatpush1.bf16.msra.mxu0 %v3394
      %3955 = vmatprep.subr.bf16.mxu0 0
      %3956 = vmatpush1.bf16.msra.mxu0 %v3395
      %3957 = vmatprep.subr.bf16.mxu0 0
      %3958 = vmatpush1.bf16.msra.mxu0 %v3396
      %3959 = vmatprep.subr.bf16.mxu0 0
      %3960 = vmatpush1.bf16.msra.mxu0 %v3397
      %3961 = vmatprep.subr.bf16.mxu0 0
      %3962 = vmatpush1.bf16.msra.mxu0 %v3398
      %3963 = vmatprep.subr.bf16.mxu0 0
      %3964 = vmatpush1.bf16.msra.mxu0 %v3399
      %3965 = vmatprep.subr.bf16.mxu0 0
      %3966 = vmatpush1.bf16.msra.mxu0 0
      %3967 = vmatprep.subr.bf16.mxu0 0
      %3968 = vmatpush1.bf16.msra.mxu0 0
      %3969 = vmatprep.subr.bf16.mxu0 0
      %3970 = vmatpush1.bf16.msra.mxu0 0
      %3971 = vmatprep.subr.bf16.mxu0 0
      %3972 = vmatpush1.bf16.msra.mxu0 0
      %3973 = vmatprep.subr.bf16.mxu0 0
      %3974 = vmatpush1.bf16.msra.mxu0 0
      %3975 = vmatprep.subr.bf16.mxu0 0
      %3976 = vmatpush1.bf16.msra.mxu0 0
      %3977 = vmatprep.subr.bf16.mxu0 0
      %3978 = vmatpush1.bf16.msra.mxu0 0
      %3979 = vmatprep.subr.bf16.mxu0 0
      %3980 = vmatpush1.bf16.msra.mxu0 0
      %3981 = vmatprep.mubr.bf16.mxu0 0
      %3982 = vmatmul.mubr.bf16.gmra.mrb[0].mxu0 %v2933
      %v3983 = vpop.f32.mrb[0].mxu0
      %v3984 = vadd.f32 0.0, %v3983
      %v3985 = vpop.f32.mrb[0].mxu0
      %v3986 = vpop.f32.mrb[0].mxu0
      %v3987 = vpop.f32.mrb[0].mxu0
      %3988 = vdwg.mxu0
      %v3989 = vadd.f32 %v3944, %v3984
      %3990 = vmatprep.subr.bf16.mxu0 0
      %3991 = vmatpush1.bf16.msra.mxu0 %v3498
      %3992 = vmatprep.subr.bf16.mxu0 0
      %3993 = vmatpush1.bf16.msra.mxu0 %v3499
      %3994 = vmatprep.subr.bf16.mxu0 0
      %3995 = vmatpush1.bf16.msra.mxu0 %v3500
      %3996 = vmatprep.subr.bf16.mxu0 0
      %3997 = vmatpush1.bf16.msra.mxu0 %v3501
      %3998 = vmatprep.subr.bf16.mxu0 0
      %3999 = vmatpush1.bf16.msra.mxu0 %v3502
      %4000 = vmatprep.subr.bf16.mxu0 0
      %4001 = vmatpush1.bf16.msra.mxu0 %v3503
      %4002 = vmatprep.subr.bf16.mxu0 0
      %4003 = vmatpush1.bf16.msra.mxu0 %v3504
      %4004 = vmatprep.subr.bf16.mxu0 0
      %4005 = vmatpush1.bf16.msra.mxu0 %v3505
      %4006 = vmatprep.subr.bf16.mxu0 0
      %4007 = vmatpush1.bf16.msra.mxu0 0
      %4008 = vmatprep.subr.bf16.mxu0 0
      %4009 = vmatpush1.bf16.msra.mxu0 0
      %4010 = vmatprep.subr.bf16.mxu0 0
      %4011 = vmatpush1.bf16.msra.mxu0 0
      %4012 = vmatprep.subr.bf16.mxu0 0
      %4013 = vmatpush1.bf16.msra.mxu0 0
      %4014 = vmatprep.subr.bf16.mxu0 0
      %4015 = vmatpush1.bf16.msra.mxu0 0
      %4016 = vmatprep.subr.bf16.mxu0 0
      %4017 = vmatpush1.bf16.msra.mxu0 0
      %4018 = vmatprep.subr.bf16.mxu0 0
      %4019 = vmatpush1.bf16.msra.mxu0 0
      %4020 = vmatprep.subr.bf16.mxu0 0
      %4021 = vmatpush1.bf16.msra.mxu0 0
      %4022 = vmatprep.mubr.bf16.mxu0 0
      %4023 = vmatmul.mubr.bf16.gmra.mrb[0].mxu0 %v3042
      %v4024 = vpop.f32.mrb[0].mxu0
      %v4025 = vadd.f32 0.0, %v4024
      %v4026 = vpop.f32.mrb[0].mxu0
      %v4027 = vpop.f32.mrb[0].mxu0
      %v4028 = vpop.f32.mrb[0].mxu0
      %4029 = vdwg.mxu0
      %v4030 = vadd.f32 %v3989, %v4025
      %4031 = vmatprep.subr.bf16.mxu0 0
      %4032 = vmatpush1.bf16.msra.mxu0 %v3604
      %4033 = vmatprep.subr.bf16.mxu0 0
      %4034 = vmatpush1.bf16.msra.mxu0 %v3605
      %4035 = vmatprep.subr.bf16.mxu0 0
      %4036 = vmatpush1.bf16.msra.mxu0 %v3606
      %4037 = vmatprep.subr.bf16.mxu0 0
      %4038 = vmatpush1.bf16.msra.mxu0 %v3607
      %4039 = vmatprep.subr.bf16.mxu0 0
      %4040 = vmatpush1.bf16.msra.mxu0 %v3608
      %4041 = vmatprep.subr.bf16.mxu0 0
      %4042 = vmatpush1.bf16.msra.mxu0 %v3609
      %4043 = vmatprep.subr.bf16.mxu0 0
      %4044 = vmatpush1.bf16.msra.mxu0 %v3610
      %4045 = vmatprep.subr.bf16.mxu0 0
      %4046 = vmatpush1.bf16.msra.mxu0 %v3611
      %4047 = vmatprep.subr.bf16.mxu0 0
      %4048 = vmatpush1.bf16.msra.mxu0 0
      %4049 = vmatprep.subr.bf16.mxu0 0
      %4050 = vmatpush1.bf16.msra.mxu0 0
      %4051 = vmatprep.subr.bf16.mxu0 0
      %4052 = vmatpush1.bf16.msra.mxu0 0
      %4053 = vmatprep.subr.bf16.mxu0 0
      %4054 = vmatpush1.bf16.msra.mxu0 0
      %4055 = vmatprep.subr.bf16.mxu0 0
      %4056 = vmatpush1.bf16.msra.mxu0 0
      %4057 = vmatprep.subr.bf16.mxu0 0
      %4058 = vmatpush1.bf16.msra.mxu0 0
      %4059 = vmatprep.subr.bf16.mxu0 0
      %4060 = vmatpush1.bf16.msra.mxu0 0
      %4061 = vmatprep.subr.bf16.mxu0 0
      %4062 = vmatpush1.bf16.msra.mxu0 0
      %4063 = vmatprep.mubr.bf16.mxu0 0
      %4064 = vmatmul.mubr.bf16.gmra.mrb[0].mxu0 %v3825
      %v4065 = vpop.f32.mrb[0].mxu0
      %v4066 = vadd.f32 0.0, %v4065
      %v4067 = vpop.f32.mrb[0].mxu0
      %v4068 = vpop.f32.mrb[0].mxu0
      %v4069 = vpop.f32.mrb[0].mxu0
      %4070 = vdwg.mxu0
      %v4071 = vadd.f32 %v4030, %v4066
      %v4072 = vmax.f32 %v3868, %v4071
      %v4073 = vld [vmem:[%s4] sm:$0x1]
      %v4075 = vlaneseq
      %v4076 = vshrl.u32 %v4075, 7
      %v4077 = vsub.s32 0, %v4076
      %v4078 = vrot.slane %v4073, %v4077
      %v4080 = vadd.f32 %v4072, %v4078
      %v4081 = vmax.f32 %v4080, 0.0
      %v4082 = vpack.c.bf16 %v4081, %v4081
      %v4083 = vld [vmem:[%s5] sm:$0xf]
      %v4084 = vld [vmem:[%s5 + $0x4] sm:$0xf]
      %v4085 = vld [vmem:[%s5 + $0x8] sm:$0xf]
      %v4086 = vld [vmem:[%s5 + $0xc] sm:$0xf]
      %v4087 = vld [vmem:[%s5 + $0x10] sm:$0xf]
      %v4088 = vld [vmem:[%s5 + $0x14] sm:$0xf]
      %v4089 = vld [vmem:[%s5 + $0x18] sm:$0xf]
      %v4090 = vld [vmem:[%s5 + $0x1c] sm:$0xf]
      %v4091 = vld [vmem:[%s5 + $0x20] sm:$0xf]
      %v4092 = vld [vmem:[%s5 + $0x24] sm:$0xf]
      %v4093 = vld [vmem:[%s5 + $0x28] sm:$0xf]
      %v4094 = vld [vmem:[%s5 + $0x2c] sm:$0xf]
      %v4095 = vld [vmem:[%s5 + $0x30] sm:$0xf]
      %v4096 = vld [vmem:[%s5 + $0x34] sm:$0xf]
      %v4097 = vld [vmem:[%s5 + $0x38] sm:$0xf]
      %v4098 = vld [vmem:[%s5 + $0x3c] sm:$0xf]
      %s4099 = scalar_lea.vmem %s5, 64
      %v4100 = vld [vmem:[%s4099] sm:$0xf]
      %v4101 = vld [vmem:[%s4099 + $0x4] sm:$0xf]
      %v4102 = vld [vmem:[%s4099 + $0x8] sm:$0xf]
      %v4103 = vld [vmem:[%s4099 + $0xc] sm:$0xf]
      %v4104 = vld [vmem:[%s4099 + $0x10] sm:$0xf]
      %v4105 = vld [vmem:[%s4099 + $0x14] sm:$0xf]
      %v4106 = vld [vmem:[%s4099 + $0x18] sm:$0xf]
      %v4107 = vld [vmem:[%s4099 + $0x1c] sm:$0xf]
      %v4108 = vld [vmem:[%s4099 + $0x20] sm:$0xf]
      %v4109 = vld [vmem:[%s4099 + $0x24] sm:$0xf]
      %v4110 = vld [vmem:[%s4099 + $0x28] sm:$0xf]
      %v4111 = vld [vmem:[%s4099 + $0x2c] sm:$0xf]
      %v4112 = vld [vmem:[%s4099 + $0x30] sm:$0xf]
      %v4113 = vld [vmem:[%s4099 + $0x34] sm:$0xf]
      %v4114 = vld [vmem:[%s4099 + $0x38] sm:$0xf]
      %v4115 = vld [vmem:[%s4099 + $0x3c] sm:$0xf]
      %v4117 = vshrl.u32 %v4082, 16
      %v4136 = vunpack.c.l.b16 %v4100
      %v4137 = vunpack.c.l.b16 %v4101
      %v4138 = vunpack.c.l.b16 %v4102
      %v4139 = vunpack.c.l.b16 %v4103
      %v4140 = vunpack.c.l.b16 %v4104
      %v4141 = vunpack.c.l.b16 %v4105
      %v4142 = vunpack.c.l.b16 %v4106
      %v4143 = vunpack.c.l.b16 %v4107
      %v4144 = vunpack.c.l.b16 %v4108
      %v4145 = vunpack.c.l.b16 %v4109
      %v4146 = vunpack.c.l.b16 %v4110
      %v4147 = vunpack.c.l.b16 %v4111
      %v4148 = vunpack.c.l.b16 %v4112
      %v4149 = vunpack.c.l.b16 %v4113
      %v4150 = vunpack.c.l.b16 %v4114
      %v4151 = vunpack.c.l.b16 %v4115
      %v4152 = vpack.c.b16 %v4137, %v4136
      %v4153 = vpack.c.b16 %v4139, %v4138
      %v4154 = vpack.c.b16 %v4141, %v4140
      %v4155 = vpack.c.b16 %v4143, %v4142
      %v4156 = vpack.c.b16 %v4145, %v4144
      %v4157 = vpack.c.b16 %v4147, %v4146
      %v4158 = vpack.c.b16 %v4149, %v4148
      %v4159 = vpack.c.b16 %v4151, %v4150
      %4168 = vmatprep.subr.bf16.mxu0 0
      %4169 = vmatpush1.bf16.msra.mxu0 %v4152
      %4170 = vmatprep.subr.bf16.mxu0 0
      %4171 = vmatpush1.bf16.msra.mxu0 %v4153
      %4172 = vmatprep.subr.bf16.mxu0 0
      %4173 = vmatpush1.bf16.msra.mxu0 %v4154
      %4174 = vmatprep.subr.bf16.mxu0 0
      %4175 = vmatpush1.bf16.msra.mxu0 %v4155
      %4176 = vmatprep.subr.bf16.mxu0 0
      %4177 = vmatpush1.bf16.msra.mxu0 %v4156
      %4178 = vmatprep.subr.bf16.mxu0 0
      %4179 = vmatpush1.bf16.msra.mxu0 %v4157
      %4180 = vmatprep.subr.bf16.mxu0 0
      %4181 = vmatpush1.bf16.msra.mxu0 %v4158
      %4182 = vmatprep.subr.bf16.mxu0 0
      %4183 = vmatpush1.bf16.msra.mxu0 %v4159
      %4184 = vmatprep.subr.bf16.mxu0 0
      %4185 = vmatpush1.bf16.msra.mxu0 0
      %4186 = vmatprep.subr.bf16.mxu0 0
      %4187 = vmatpush1.bf16.msra.mxu0 0
      %4188 = vmatprep.subr.bf16.mxu0 0
      %4189 = vmatpush1.bf16.msra.mxu0 0
      %4190 = vmatprep.subr.bf16.mxu0 0
      %4191 = vmatpush1.bf16.msra.mxu0 0
      %4192 = vmatprep.subr.bf16.mxu0 0
      %4193 = vmatpush1.bf16.msra.mxu0 0
      %4194 = vmatprep.subr.bf16.mxu0 0
      %4195 = vmatpush1.bf16.msra.mxu0 0
      %4196 = vmatprep.subr.bf16.mxu0 0
      %4197 = vmatpush1.bf16.msra.mxu0 0
      %4198 = vmatprep.subr.bf16.mxu0 0
      %4199 = vmatpush1.bf16.msra.mxu0 0
      %4200 = vmatprep.mubr.bf16.mxu0 0
      %4201 = vmatmul.mubr.bf16.gmra.mrb[0].mxu0 %v4117
      %v4202 = vpop.f32.mrb[0].mxu0
      %v4203 = vadd.f32 0.0, %v4202
      %v4204 = vpop.f32.mrb[0].mxu0
      %v4205 = vpop.f32.mrb[0].mxu0
      %v4206 = vpop.f32.mrb[0].mxu0
      %4207 = vdwg.mxu0
      %v4224 = vunpack.c.l.b16 %v4083
      %v4225 = vunpack.c.l.b16 %v4084
      %v4226 = vunpack.c.l.b16 %v4085
      %v4227 = vunpack.c.l.b16 %v4086
      %v4228 = vunpack.c.l.b16 %v4087
      %v4229 = vunpack.c.l.b16 %v4088
      %v4230 = vunpack.c.l.b16 %v4089
      %v4231 = vunpack.c.l.b16 %v4090
      %v4232 = vunpack.c.l.b16 %v4091
      %v4233 = vunpack.c.l.b16 %v4092
      %v4234 = vunpack.c.l.b16 %v4093
      %v4235 = vunpack.c.l.b16 %v4094
      %v4236 = vunpack.c.l.b16 %v4095
      %v4237 = vunpack.c.l.b16 %v4096
      %v4238 = vunpack.c.l.b16 %v4097
      %v4239 = vunpack.c.l.b16 %v4098
      %v4240 = vpack.c.b16 %v4225, %v4224
      %v4241 = vpack.c.b16 %v4227, %v4226
      %v4242 = vpack.c.b16 %v4229, %v4228
      %v4243 = vpack.c.b16 %v4231, %v4230
      %v4244 = vpack.c.b16 %v4233, %v4232
      %v4245 = vpack.c.b16 %v4235, %v4234
      %v4246 = vpack.c.b16 %v4237, %v4236
      %v4247 = vpack.c.b16 %v4239, %v4238
      %4256 = vmatprep.subr.bf16.mxu0 0
      %4257 = vmatpush1.bf16.msra.mxu0 %v4240
      %4258 = vmatprep.subr.bf16.mxu0 0
      %4259 = vmatpush1.bf16.msra.mxu0 %v4241
      %4260 = vmatprep.subr.bf16.mxu0 0
      %4261 = vmatpush1.bf16.msra.mxu0 %v4242
      %4262 = vmatprep.subr.bf16.mxu0 0
      %4263 = vmatpush1.bf16.msra.mxu0 %v4243
      %4264 = vmatprep.subr.bf16.mxu0 0
      %4265 = vmatpush1.bf16.msra.mxu0 %v4244
      %4266 = vmatprep.subr.bf16.mxu0 0
      %4267 = vmatpush1.bf16.msra.mxu0 %v4245
      %4268 = vmatprep.subr.bf16.mxu0 0
      %4269 = vmatpush1.bf16.msra.mxu0 %v4246
      %4270 = vmatprep.subr.bf16.mxu0 0
      %4271 = vmatpush1.bf16.msra.mxu0 %v4247
      %4272 = vmatprep.subr.bf16.mxu0 0
      %4273 = vmatpush1.bf16.msra.mxu0 0
      %4274 = vmatprep.subr.bf16.mxu0 0
      %4275 = vmatpush1.bf16.msra.mxu0 0
      %4276 = vmatprep.subr.bf16.mxu0 0
      %4277 = vmatpush1.bf16.msra.mxu0 0
      %4278 = vmatprep.subr.bf16.mxu0 0
      %4279 = vmatpush1.bf16.msra.mxu0 0
      %4280 = vmatprep.subr.bf16.mxu0 0
      %4281 = vmatpush1.bf16.msra.mxu0 0
      %4282 = vmatprep.subr.bf16.mxu0 0
      %4283 = vmatpush1.bf16.msra.mxu0 0
      %4284 = vmatprep.subr.bf16.mxu0 0
      %4285 = vmatpush1.bf16.msra.mxu0 0
      %4286 = vmatprep.subr.bf16.mxu0 0
      %4287 = vmatpush1.bf16.msra.mxu0 0
      %4288 = vmatprep.mubr.bf16.mxu0 0
      %4289 = vmatmul.mubr.bf16.gmra.mrb[0].mxu0 %v4082
      %v4290 = vpop.f32.mrb[0].mxu0
      %v4291 = vadd.f32 %v4203, %v4290
      %v4292 = vpop.f32.mrb[0].mxu0
      %v4293 = vpop.f32.mrb[0].mxu0
      %v4294 = vpop.f32.mrb[0].mxu0
      %4295 = vdwg.mxu0
      %s4296 = scalar_lea.vmem %s5, 128
      %v4297 = vld [vmem:[%s4296] sm:$0xf]
      %v4298 = vld [vmem:[%s4296 + $0x4] sm:$0xf]
      %v4299 = vld [vmem:[%s4296 + $0x8] sm:$0xf]
      %v4300 = vld [vmem:[%s4296 + $0xc] sm:$0xf]
      %v4301 = vld [vmem:[%s4296 + $0x10] sm:$0xf]
      %v4302 = vld [vmem:[%s4296 + $0x14] sm:$0xf]
      %v4303 = vld [vmem:[%s4296 + $0x18] sm:$0xf]
      %v4304 = vld [vmem:[%s4296 + $0x1c] sm:$0xf]
      %v4305 = vld [vmem:[%s4296 + $0x20] sm:$0xf]
      %v4306 = vld [vmem:[%s4296 + $0x24] sm:$0xf]
      %v4307 = vld [vmem:[%s4296 + $0x28] sm:$0xf]
      %v4308 = vld [vmem:[%s4296 + $0x2c] sm:$0xf]
      %v4309 = vld [vmem:[%s4296 + $0x30] sm:$0xf]
      %v4310 = vld [vmem:[%s4296 + $0x34] sm:$0xf]
      %v4311 = vld [vmem:[%s4296 + $0x38] sm:$0xf]
      %v4312 = vld [vmem:[%s4296 + $0x3c] sm:$0xf]
      %v4314 = vrot.slane %v4082, 1
      %v4332 = vunpack.c.l.b16 %v4297
      %v4333 = vunpack.c.l.b16 %v4298
      %v4334 = vunpack.c.l.b16 %v4299
      %v4335 = vunpack.c.l.b16 %v4300
      %v4336 = vunpack.c.l.b16 %v4301
      %v4337 = vunpack.c.l.b16 %v4302
      %v4338 = vunpack.c.l.b16 %v4303
      %v4339 = vunpack.c.l.b16 %v4304
      %v4340 = vunpack.c.l.b16 %v4305
      %v4341 = vunpack.c.l.b16 %v4306
      %v4342 = vunpack.c.l.b16 %v4307
      %v4343 = vunpack.c.l.b16 %v4308
      %v4344 = vunpack.c.l.b16 %v4309
      %v4345 = vunpack.c.l.b16 %v4310
      %v4346 = vunpack.c.l.b16 %v4311
      %v4347 = vunpack.c.l.b16 %v4312
      %v4348 = vpack.c.b16 %v4333, %v4332
      %v4349 = vpack.c.b16 %v4335, %v4334
      %v4350 = vpack.c.b16 %v4337, %v4336
      %v4351 = vpack.c.b16 %v4339, %v4338
      %v4352 = vpack.c.b16 %v4341, %v4340
      %v4353 = vpack.c.b16 %v4343, %v4342
      %v4354 = vpack.c.b16 %v4345, %v4344
      %v4355 = vpack.c.b16 %v4347, %v4346
      %4364 = vmatprep.subr.bf16.mxu0 0
      %4365 = vmatpush1.bf16.msra.mxu0 %v4348
      %4366 = vmatprep.subr.bf16.mxu0 0
      %4367 = vmatpush1.bf16.msra.mxu0 %v4349
      %4368 = vmatprep.subr.bf16.mxu0 0
      %4369 = vmatpush1.bf16.msra.mxu0 %v4350
      %4370 = vmatprep.subr.bf16.mxu0 0
      %4371 = vmatpush1.bf16.msra.mxu0 %v4351
      %4372 = vmatprep.subr.bf16.mxu0 0
      %4373 = vmatpush1.bf16.msra.mxu0 %v4352
      %4374 = vmatprep.subr.bf16.mxu0 0
      %4375 = vmatpush1.bf16.msra.mxu0 %v4353
      %4376 = vmatprep.subr.bf16.mxu0 0
      %4377 = vmatpush1.bf16.msra.mxu0 %v4354
      %4378 = vmatprep.subr.bf16.mxu0 0
      %4379 = vmatpush1.bf16.msra.mxu0 %v4355
      %4380 = vmatprep.subr.bf16.mxu0 0
      %4381 = vmatpush1.bf16.msra.mxu0 0
      %4382 = vmatprep.subr.bf16.mxu0 0
      %4383 = vmatpush1.bf16.msra.mxu0 0
      %4384 = vmatprep.subr.bf16.mxu0 0
      %4385 = vmatpush1.bf16.msra.mxu0 0
      %4386 = vmatprep.subr.bf16.mxu0 0
      %4387 = vmatpush1.bf16.msra.mxu0 0
      %4388 = vmatprep.subr.bf16.mxu0 0
      %4389 = vmatpush1.bf16.msra.mxu0 0
      %4390 = vmatprep.subr.bf16.mxu0 0
      %4391 = vmatpush1.bf16.msra.mxu0 0
      %4392 = vmatprep.subr.bf16.mxu0 0
      %4393 = vmatpush1.bf16.msra.mxu0 0
      %4394 = vmatprep.subr.bf16.mxu0 0
      %4395 = vmatpush1.bf16.msra.mxu0 0
      %4396 = vmatprep.mubr.bf16.mxu0 0
      %4397 = vmatmul.mubr.bf16.gmra.mrb[0].mxu0 %v4314
      %v4398 = vpop.f32.mrb[0].mxu0
      %v4399 = vadd.f32 0.0, %v4398
      %v4400 = vpop.f32.mrb[0].mxu0
      %v4401 = vpop.f32.mrb[0].mxu0
      %v4402 = vpop.f32.mrb[0].mxu0
      %4403 = vdwg.mxu0
      %v4404 = vadd.f32 %v4291, %v4399
      %s4405 = scalar_lea.vmem %s5, 192
      %v4406 = vld [vmem:[%s4405] sm:$0xf]
      %v4407 = vld [vmem:[%s4405 + $0x4] sm:$0xf]
      %v4408 = vld [vmem:[%s4405 + $0x8] sm:$0xf]
      %v4409 = vld [vmem:[%s4405 + $0xc] sm:$0xf]
      %v4410 = vld [vmem:[%s4405 + $0x10] sm:$0xf]
      %v4411 = vld [vmem:[%s4405 + $0x14] sm:$0xf]
      %v4412 = vld [vmem:[%s4405 + $0x18] sm:$0xf]
      %v4413 = vld [vmem:[%s4405 + $0x1c] sm:$0xf]
      %v4414 = vld [vmem:[%s4405 + $0x20] sm:$0xf]
      %v4415 = vld [vmem:[%s4405 + $0x24] sm:$0xf]
      %v4416 = vld [vmem:[%s4405 + $0x28] sm:$0xf]
      %v4417 = vld [vmem:[%s4405 + $0x2c] sm:$0xf]
      %v4418 = vld [vmem:[%s4405 + $0x30] sm:$0xf]
      %v4419 = vld [vmem:[%s4405 + $0x34] sm:$0xf]
      %v4420 = vld [vmem:[%s4405 + $0x38] sm:$0xf]
      %v4421 = vld [vmem:[%s4405 + $0x3c] sm:$0xf]
      %v4422 = vrot.slane %v4117, 1
      %v4440 = vunpack.c.l.b16 %v4406
      %v4441 = vunpack.c.l.b16 %v4407
      %v4442 = vunpack.c.l.b16 %v4408
      %v4443 = vunpack.c.l.b16 %v4409
      %v4444 = vunpack.c.l.b16 %v4410
      %v4445 = vunpack.c.l.b16 %v4411
      %v4446 = vunpack.c.l.b16 %v4412
      %v4447 = vunpack.c.l.b16 %v4413
      %v4448 = vunpack.c.l.b16 %v4414
      %v4449 = vunpack.c.l.b16 %v4415
      %v4450 = vunpack.c.l.b16 %v4416
      %v4451 = vunpack.c.l.b16 %v4417
      %v4452 = vunpack.c.l.b16 %v4418
      %v4453 = vunpack.c.l.b16 %v4419
      %v4454 = vunpack.c.l.b16 %v4420
      %v4455 = vunpack.c.l.b16 %v4421
      %v4456 = vpack.c.b16 %v4441, %v4440
      %v4457 = vpack.c.b16 %v4443, %v4442
      %v4458 = vpack.c.b16 %v4445, %v4444
      %v4459 = vpack.c.b16 %v4447, %v4446
      %v4460 = vpack.c.b16 %v4449, %v4448
      %v4461 = vpack.c.b16 %v4451, %v4450
      %v4462 = vpack.c.b16 %v4453, %v4452
      %v4463 = vpack.c.b16 %v4455, %v4454
      %4472 = vmatprep.subr.bf16.mxu0 0
      %4473 = vmatpush1.bf16.msra.mxu0 %v4456
      %4474 = vmatprep.subr.bf16.mxu0 0
      %4475 = vmatpush1.bf16.msra.mxu0 %v4457
      %4476 = vmatprep.subr.bf16.mxu0 0
      %4477 = vmatpush1.bf16.msra.mxu0 %v4458
      %4478 = vmatprep.subr.bf16.mxu0 0
      %4479 = vmatpush1.bf16.msra.mxu0 %v4459
      %4480 = vmatprep.subr.bf16.mxu0 0
      %4481 = vmatpush1.bf16.msra.mxu0 %v4460
      %4482 = vmatprep.subr.bf16.mxu0 0
      %4483 = vmatpush1.bf16.msra.mxu0 %v4461
      %4484 = vmatprep.subr.bf16.mxu0 0
      %4485 = vmatpush1.bf16.msra.mxu0 %v4462
      %4486 = vmatprep.subr.bf16.mxu0 0
      %4487 = vmatpush1.bf16.msra.mxu0 %v4463
      %4488 = vmatprep.subr.bf16.mxu0 0
      %4489 = vmatpush1.bf16.msra.mxu0 0
      %4490 = vmatprep.subr.bf16.mxu0 0
      %4491 = vmatpush1.bf16.msra.mxu0 0
      %4492 = vmatprep.subr.bf16.mxu0 0
      %4493 = vmatpush1.bf16.msra.mxu0 0
      %4494 = vmatprep.subr.bf16.mxu0 0
      %4495 = vmatpush1.bf16.msra.mxu0 0
      %4496 = vmatprep.subr.bf16.mxu0 0
      %4497 = vmatpush1.bf16.msra.mxu0 0
      %4498 = vmatprep.subr.bf16.mxu0 0
      %4499 = vmatpush1.bf16.msra.mxu0 0
      %4500 = vmatprep.subr.bf16.mxu0 0
      %4501 = vmatpush1.bf16.msra.mxu0 0
      %4502 = vmatprep.subr.bf16.mxu0 0
      %4503 = vmatpush1.bf16.msra.mxu0 0
      %4504 = vmatprep.mubr.bf16.mxu0 0
      %4505 = vmatmul.mubr.bf16.gmra.mrb[0].mxu0 %v4422
      %v4506 = vpop.f32.mrb[0].mxu0
      %v4507 = vadd.f32 0.0, %v4506
      %v4508 = vpop.f32.mrb[0].mxu0
      %v4509 = vpop.f32.mrb[0].mxu0
      %v4510 = vpop.f32.mrb[0].mxu0
      %4511 = vdwg.mxu0
      %v4512 = vadd.f32 %v4404, %v4507
      %s4513 = scalar_lea.vmem %s5, 256
      %v4514 = vld [vmem:[%s4513] sm:$0xf]
      %v4515 = vld [vmem:[%s4513 + $0x4] sm:$0xf]
      %v4516 = vld [vmem:[%s4513 + $0x8] sm:$0xf]
      %v4517 = vld [vmem:[%s4513 + $0xc] sm:$0xf]
      %v4518 = vld [vmem:[%s4513 + $0x10] sm:$0xf]
      %v4519 = vld [vmem:[%s4513 + $0x14] sm:$0xf]
      %v4520 = vld [vmem:[%s4513 + $0x18] sm:$0xf]
      %v4521 = vld [vmem:[%s4513 + $0x1c] sm:$0xf]
      %v4522 = vld [vmem:[%s4513 + $0x20] sm:$0xf]
      %v4523 = vld [vmem:[%s4513 + $0x24] sm:$0xf]
      %v4524 = vld [vmem:[%s4513 + $0x28] sm:$0xf]
      %v4525 = vld [vmem:[%s4513 + $0x2c] sm:$0xf]
      %v4526 = vld [vmem:[%s4513 + $0x30] sm:$0xf]
      %v4527 = vld [vmem:[%s4513 + $0x34] sm:$0xf]
      %v4528 = vld [vmem:[%s4513 + $0x38] sm:$0xf]
      %v4529 = vld [vmem:[%s4513 + $0x3c] sm:$0xf]
      %v4530 = vrot.slane %v4082, 2
      %v4548 = vunpack.c.l.b16 %v4514
      %v4549 = vunpack.c.l.b16 %v4515
      %v4550 = vunpack.c.l.b16 %v4516
      %v4551 = vunpack.c.l.b16 %v4517
      %v4552 = vunpack.c.l.b16 %v4518
      %v4553 = vunpack.c.l.b16 %v4519
      %v4554 = vunpack.c.l.b16 %v4520
      %v4555 = vunpack.c.l.b16 %v4521
      %v4556 = vunpack.c.l.b16 %v4522
      %v4557 = vunpack.c.l.b16 %v4523
      %v4558 = vunpack.c.l.b16 %v4524
      %v4559 = vunpack.c.l.b16 %v4525
      %v4560 = vunpack.c.l.b16 %v4526
      %v4561 = vunpack.c.l.b16 %v4527
      %v4562 = vunpack.c.l.b16 %v4528
      %v4563 = vunpack.c.l.b16 %v4529
      %v4564 = vpack.c.b16 %v4549, %v4548
      %v4565 = vpack.c.b16 %v4551, %v4550
      %v4566 = vpack.c.b16 %v4553, %v4552
      %v4567 = vpack.c.b16 %v4555, %v4554
      %v4568 = vpack.c.b16 %v4557, %v4556
      %v4569 = vpack.c.b16 %v4559, %v4558
      %v4570 = vpack.c.b16 %v4561, %v4560
      %v4571 = vpack.c.b16 %v4563, %v4562
      %4580 = vmatprep.subr.bf16.mxu0 0
      %4581 = vmatpush1.bf16.msra.mxu0 %v4564
      %4582 = vmatprep.subr.bf16.mxu0 0
      %4583 = vmatpush1.bf16.msra.mxu0 %v4565
      %4584 = vmatprep.subr.bf16.mxu0 0
      %4585 = vmatpush1.bf16.msra.mxu0 %v4566
      %4586 = vmatprep.subr.bf16.mxu0 0
      %4587 = vmatpush1.bf16.msra.mxu0 %v4567
      %4588 = vmatprep.subr.bf16.mxu0 0
      %4589 = vmatpush1.bf16.msra.mxu0 %v4568
      %4590 = vmatprep.subr.bf16.mxu0 0
      %4591 = vmatpush1.bf16.msra.mxu0 %v4569
      %4592 = vmatprep.subr.bf16.mxu0 0
      %4593 = vmatpush1.bf16.msra.mxu0 %v4570
      %4594 = vmatprep.subr.bf16.mxu0 0
      %4595 = vmatpush1.bf16.msra.mxu0 %v4571
      %4596 = vmatprep.subr.bf16.mxu0 0
      %4597 = vmatpush1.bf16.msra.mxu0 0
      %4598 = vmatprep.subr.bf16.mxu0 0
      %4599 = vmatpush1.bf16.msra.mxu0 0
      %4600 = vmatprep.subr.bf16.mxu0 0
      %4601 = vmatpush1.bf16.msra.mxu0 0
      %4602 = vmatprep.subr.bf16.mxu0 0
      %4603 = vmatpush1.bf16.msra.mxu0 0
      %4604 = vmatprep.subr.bf16.mxu0 0
      %4605 = vmatpush1.bf16.msra.mxu0 0
      %4606 = vmatprep.subr.bf16.mxu0 0
      %4607 = vmatpush1.bf16.msra.mxu0 0
      %4608 = vmatprep.subr.bf16.mxu0 0
      %4609 = vmatpush1.bf16.msra.mxu0 0
      %4610 = vmatprep.subr.bf16.mxu0 0
      %4611 = vmatpush1.bf16.msra.mxu0 0
      %4612 = vmatprep.mubr.bf16.mxu0 0
      %4613 = vmatmul.mubr.bf16.gmra.mrb[0].mxu0 %v4530
      %v4614 = vpop.f32.mrb[0].mxu0
      %v4615 = vadd.f32 0.0, %v4614
      %v4616 = vpop.f32.mrb[0].mxu0
      %v4617 = vpop.f32.mrb[0].mxu0
      %v4618 = vpop.f32.mrb[0].mxu0
      %4619 = vdwg.mxu0
      %v4620 = vadd.f32 %v4512, %v4615
      %v4621 = vld [vmem:[%s6] sm:$0x1]
      %v4622 = vadd.f32 %v4620, %v4621
      %v4623 = vmax.f32 %v4622, 0.0
      %v4624 = vpack.c.bf16 %v4623, %v4623
      %v4625 = vld [vmem:[%s7] sm:$0xf]
      %v4626 = vld [vmem:[%s7 + $0x4] sm:$0xf]
      %v4627 = vld [vmem:[%s7 + $0x8] sm:$0xf]
      %v4628 = vld [vmem:[%s7 + $0xc] sm:$0xf]
      %v4629 = vld [vmem:[%s7 + $0x10] sm:$0xf]
      %v4630 = vld [vmem:[%s7 + $0x14] sm:$0xf]
      %v4631 = vld [vmem:[%s7 + $0x18] sm:$0xf]
      %v4632 = vld [vmem:[%s7 + $0x1c] sm:$0xf]
      %v4633 = vld [vmem:[%s7 + $0x20] sm:$0xf]
      %v4634 = vld [vmem:[%s7 + $0x24] sm:$0xf]
      %v4635 = vld [vmem:[%s7 + $0x28] sm:$0xf]
      %v4636 = vld [vmem:[%s7 + $0x2c] sm:$0xf]
      %v4637 = vld [vmem:[%s7 + $0x30] sm:$0xf]
      %v4638 = vld [vmem:[%s7 + $0x34] sm:$0xf]
      %v4639 = vld [vmem:[%s7 + $0x38] sm:$0xf]
      %v4640 = vld [vmem:[%s7 + $0x3c] sm:$0xf]
      %v4641 = vld [vmem:[%s8] sm:$0x1]
      %v4658 = vunpack.c.l.b16 %v4625
      %v4659 = vunpack.c.l.b16 %v4626
      %v4660 = vunpack.c.l.b16 %v4627
      %v4661 = vunpack.c.l.b16 %v4628
      %v4662 = vunpack.c.l.b16 %v4629
      %v4663 = vunpack.c.l.b16 %v4630
      %v4664 = vunpack.c.l.b16 %v4631
      %v4665 = vunpack.c.l.b16 %v4632
      %v4666 = vunpack.c.l.b16 %v4633
      %v4667 = vunpack.c.l.b16 %v4634
      %v4668 = vunpack.c.l.b16 %v4635
      %v4669 = vunpack.c.l.b16 %v4636
      %v4670 = vunpack.c.l.b16 %v4637
      %v4671 = vunpack.c.l.b16 %v4638
      %v4672 = vunpack.c.l.b16 %v4639
      %v4673 = vunpack.c.l.b16 %v4640
      %v4674 = vpack.c.b16 %v4659, %v4658
      %v4675 = vpack.c.b16 %v4661, %v4660
      %v4676 = vpack.c.b16 %v4663, %v4662
      %v4677 = vpack.c.b16 %v4665, %v4664
      %v4678 = vpack.c.b16 %v4667, %v4666
      %v4679 = vpack.c.b16 %v4669, %v4668
      %v4680 = vpack.c.b16 %v4671, %v4670
      %v4681 = vpack.c.b16 %v4673, %v4672
      %4690 = vmatprep.subr.bf16.mxu0 0
      %4691 = vmatpush1.bf16.msra.mxu0 %v4674
      %4692 = vmatprep.subr.bf16.mxu0 0
      %4693 = vmatpush1.bf16.msra.mxu0 %v4675
      %4694 = vmatprep.subr.bf16.mxu0 0
      %4695 = vmatpush1.bf16.msra.mxu0 %v4676
      %4696 = vmatprep.subr.bf16.mxu0 0
      %4697 = vmatpush1.bf16.msra.mxu0 %v4677
      %4698 = vmatprep.subr.bf16.mxu0 0
      %4699 = vmatpush1.bf16.msra.mxu0 %v4678
      %4700 = vmatprep.subr.bf16.mxu0 0
      %4701 = vmatpush1.bf16.msra.mxu0 %v4679
      %4702 = vmatprep.subr.bf16.mxu0 0
      %4703 = vmatpush1.bf16.msra.mxu0 %v4680
      %4704 = vmatprep.subr.bf16.mxu0 0
      %4705 = vmatpush1.bf16.msra.mxu0 %v4681
      %4706 = vmatprep.subr.bf16.mxu0 0
      %4707 = vmatpush1.bf16.msra.mxu0 0
      %4708 = vmatprep.subr.bf16.mxu0 0
      %4709 = vmatpush1.bf16.msra.mxu0 0
      %4710 = vmatprep.subr.bf16.mxu0 0
      %4711 = vmatpush1.bf16.msra.mxu0 0
      %4712 = vmatprep.subr.bf16.mxu0 0
      %4713 = vmatpush1.bf16.msra.mxu0 0
      %4714 = vmatprep.subr.bf16.mxu0 0
      %4715 = vmatpush1.bf16.msra.mxu0 0
      %4716 = vmatprep.subr.bf16.mxu0 0
      %4717 = vmatpush1.bf16.msra.mxu0 0
      %4718 = vmatprep.subr.bf16.mxu0 0
      %4719 = vmatpush1.bf16.msra.mxu0 0
      %4720 = vmatprep.subr.bf16.mxu0 0
      %4721 = vmatpush1.bf16.msra.mxu0 0
      %4722 = vmatprep.mubr.bf16.mxu0 0
      %4723 = vmatmul.mubr.bf16.gmra.mrb[0].mxu0 %v4624
      %v4724 = vpop.f32.mrb[0].mxu0
      %v4725 = vadd.f32 %v4641, %v4724
      %v4726 = vpop.f32.mrb[0].mxu0
      %v4727 = vpop.f32.mrb[0].mxu0
      %v4728 = vpop.f32.mrb[0].mxu0
      %4729 = vdwg.mxu0
      %v4730 = vmax.f32 %v4725, 0.0
      %v4731 = vpack.c.bf16 %v4730, %v4730
      %v4732 = vld [vmem:[%s9] sm:$0xf]
      %v4733 = vld [vmem:[%s9 + $0x4] sm:$0xf]
      %v4734 = vld [vmem:[%s9 + $0x8] sm:$0xf]
      %v4735 = vld [vmem:[%s9 + $0xc] sm:$0xf]
      %v4736 = vld [vmem:[%s9 + $0x10] sm:$0xf]
      %v4737 = vld [vmem:[%s9 + $0x14] sm:$0xf]
      %v4738 = vld [vmem:[%s9 + $0x18] sm:$0xf]
      %v4739 = vld [vmem:[%s9 + $0x1c] sm:$0xf]
      %v4740 = vld [vmem:[%s9 + $0x20] sm:$0xf]
      %v4741 = vld [vmem:[%s9 + $0x24] sm:$0xf]
      %v4742 = vld [vmem:[%s9 + $0x28] sm:$0xf]
      %v4743 = vld [vmem:[%s9 + $0x2c] sm:$0xf]
      %v4744 = vld [vmem:[%s9 + $0x30] sm:$0xf]
      %v4745 = vld [vmem:[%s9 + $0x34] sm:$0xf]
      %v4746 = vld [vmem:[%s9 + $0x38] sm:$0xf]
      %v4747 = vld [vmem:[%s9 + $0x3c] sm:$0xf]
      %v4748 = vld [vmem:[%s10] sm:$0x1]
      %v4765 = vunpack.c.l.b16 %v4732
      %v4766 = vunpack.c.l.b16 %v4733
      %v4767 = vunpack.c.l.b16 %v4734
      %v4768 = vunpack.c.l.b16 %v4735
      %v4769 = vunpack.c.l.b16 %v4736
      %v4770 = vunpack.c.l.b16 %v4737
      %v4771 = vunpack.c.l.b16 %v4738
      %v4772 = vunpack.c.l.b16 %v4739
      %v4773 = vunpack.c.l.b16 %v4740
      %v4774 = vunpack.c.l.b16 %v4741
      %v4775 = vunpack.c.l.b16 %v4742
      %v4776 = vunpack.c.l.b16 %v4743
      %v4777 = vunpack.c.l.b16 %v4744
      %v4778 = vunpack.c.l.b16 %v4745
      %v4779 = vunpack.c.l.b16 %v4746
      %v4780 = vunpack.c.l.b16 %v4747
      %v4781 = vpack.c.b16 %v4766, %v4765
      %v4782 = vpack.c.b16 %v4768, %v4767
      %v4783 = vpack.c.b16 %v4770, %v4769
      %v4784 = vpack.c.b16 %v4772, %v4771
      %v4785 = vpack.c.b16 %v4774, %v4773
      %v4786 = vpack.c.b16 %v4776, %v4775
      %v4787 = vpack.c.b16 %v4778, %v4777
      %v4788 = vpack.c.b16 %v4780, %v4779
      %4797 = vmatprep.subr.bf16.mxu0 0
      %4798 = vmatpush1.bf16.msra.mxu0 %v4781
      %4799 = vmatprep.subr.bf16.mxu0 0
      %4800 = vmatpush1.bf16.msra.mxu0 %v4782
      %4801 = vmatprep.subr.bf16.mxu0 0
      %4802 = vmatpush1.bf16.msra.mxu0 %v4783
      %4803 = vmatprep.subr.bf16.mxu0 0
      %4804 = vmatpush1.bf16.msra.mxu0 %v4784
      %4805 = vmatprep.subr.bf16.mxu0 0
      %4806 = vmatpush1.bf16.msra.mxu0 %v4785
      %4807 = vmatprep.subr.bf16.mxu0 0
      %4808 = vmatpush1.bf16.msra.mxu0 %v4786
      %4809 = vmatprep.subr.bf16.mxu0 0
      %4810 = vmatpush1.bf16.msra.mxu0 %v4787
      %4811 = vmatprep.subr.bf16.mxu0 0
      %4812 = vmatpush1.bf16.msra.mxu0 %v4788
      %4813 = vmatprep.subr.bf16.mxu0 0
      %4814 = vmatpush1.bf16.msra.mxu0 0
      %4815 = vmatprep.subr.bf16.mxu0 0
      %4816 = vmatpush1.bf16.msra.mxu0 0
      %4817 = vmatprep.subr.bf16.mxu0 0
      %4818 = vmatpush1.bf16.msra.mxu0 0
      %4819 = vmatprep.subr.bf16.mxu0 0
      %4820 = vmatpush1.bf16.msra.mxu0 0
      %4821 = vmatprep.subr.bf16.mxu0 0
      %4822 = vmatpush1.bf16.msra.mxu0 0
      %4823 = vmatprep.subr.bf16.mxu0 0
      %4824 = vmatpush1.bf16.msra.mxu0 0
      %4825 = vmatprep.subr.bf16.mxu0 0
      %4826 = vmatpush1.bf16.msra.mxu0 0
      %4827 = vmatprep.subr.bf16.mxu0 0
      %4828 = vmatpush1.bf16.msra.mxu0 0
      %4829 = vmatprep.mubr.bf16.mxu0 0
      %4830 = vmatmul.mubr.bf16.gmra.mrb[0].mxu0 %v4731
      %v4831 = vpop.f32.mrb[0].mxu0
      %v4832 = vadd.f32 %v4748, %v4831
      %v4833 = vpop.f32.mrb[0].mxu0
      %v4834 = vpop.f32.mrb[0].mxu0
      %v4835 = vpop.f32.mrb[0].mxu0
      %4836 = vdwg.mxu0
      %v4837 = vlaneseq
      %v4838 = vshrl.u32 %v4837, 7
      %v4839 = vsub.s32 0, %v4838
      %v4840 = vrot.slane %v4832, %v4839
      %4841 = vst [vmem:[%s384] sm:$0xff] %v4840
      %p4842 = scmp.lt.s32.totalorder %s22, 1
      %s4843 = scalar_select %p4842, %s22, 1
      %s4844 = smul.addr %s4843, 8
      %s4845 = scalar_lea.vmem %s11, %s4844
      // Predicated region
      $region65: #{basicnet_forward.1} parent=63 // pred_check
        %p4846 = pneg %p276
      $region66: #{basicnet_forward.1} parent=63 // pred_check_branch
        %4848 = sbr.rel (%p4846) target = $region68
      $region67: #{basicnet_forward.1} parent=63 // pred_region
        _
      $region68: #{basicnet_forward.1} parent=63 // pred_fallthru
        _
    $region64: #{basicnet_forward.1} parent=5 // pred_fallthru
      _
    %p4849 = scmp.le.s32.totalorder 2, %s17
    // Predicated region
    $region69: #{basicnet_forward.1} parent=5 // pred_check
      %p4850 = pneg %p4849
    $region70: #{basicnet_forward.1} parent=5 // pred_check_branch
      %4852 = sbr.rel (%p4850) target = $region72
    $region71: #{basicnet_forward.1} parent=5 // pred_region
      %s4853 = ssub.s32 %s17, 2
      // Predicated region
      $region73: #{basicnet_forward.1} parent=71 // pred_check
        %p4854 = pneg %p282
      $region74: #{basicnet_forward.1} parent=71 // pred_check_branch
        %4856 = sbr.rel (%p4854) target = $region76
      $region75: #{basicnet_forward.1} parent=71 // pred_region
        %p4857 = scmp.lt.s32.totalorder %s23, 1
        %s4858 = scalar_select %p4857, %s23, 1
        %s4859 = smul.addr %s4858, 8
        %s4860 = scalar_lea.vmem %s11, %s4859
      $region76: #{basicnet_forward.1} parent=71 // pred_fallthru
        _
    $region72: #{basicnet_forward.1} parent=5 // pred_fallthru
      _
  $region6: #{basicnet_forward.1} parent=0 // loop_footer
    %s21 = sadd.s32 1, %s17
  $region7: #{basicnet_forward.1} parent=0 // loop_footer_branch
    %16 = sbr.rel target = $region3
  $region8: #{basicnet_forward.1} parent=0 // loop_exit
    _

</llo_original>
